<compile_context>
chip_gen: v7x
topology: tpu7x:2x2x1
jax: 0.10.0
libtpu: 0.0.40
codegen_flags: <defaults>
</compile_context>

<pallas_src>
import jax
import jax.numpy as jnp
from jax.experimental import pallas as pl
from jax.experimental.pallas import tpu as pltpu

LEAKY_SLOPE = 0.01
PAD_B = 8                                   # sublane multiple for the batch dim

TRUNK_DIMS = [(4, 64), (64, 128), (128, 256), (256, 512),
              (512, 1024), (1024, 2048), (2048, 128)]   # m_inc1..6, linear1
HEAD_DIMS = [3, 9, 6, 2]                                 # linear_v/s/d/f
N_HEAD = sum(HEAD_DIMS)                                  # 20
N_HEAD_PAD = 128                                         # lane-dense head output
GB_SPLITS = [32, 64, 128, 256, 512, 1024]                # gamma/beta split sizes

# Single packed bias buffer: per-layer segments at 128-lane-aligned offsets.
BIAS_WIDTHS = [64, 128, 256, 512, 1024, 2048, 128, N_HEAD_PAD]
BIAS_OFFS = []
_o = 0
for _w in BIAS_WIDTHS:
    BIAS_OFFS.append(_o)
    _o += ((_w + 127) // 128) * 128
BIAS_TOTAL = _o                                          # 4352


# ----------------------------------------------------------------------------
# Single fused kernel: entire ClassMLPNet forward
# ----------------------------------------------------------------------------
def _class_mlp_kernel(x_ref, w1_ref, w2_ref, w3_ref, w4_ref, wh_ref, bias_ref,
                      w5_hbm, w6_hbm, w7_hbm,
                      m1_o, m2_o, m3_o, m4_o, m5_o, m6_o, heads_o,
                      w5_v, w6_v, w7_v, sem):
    """7x (Linear -> Dropout(id) -> LeakyReLU) + fused, lane-padded head matmul.

    Big weights (w5/w6/w7) are manually DMA'd HBM->VMEM so the transfer overlaps
    the early-layer compute + writebacks; waits happen just-in-time per layer.
    """
    # Kick off the large-weight DMAs first so they run under layers 1-4.
    cp5 = pltpu.make_async_copy(w5_hbm, w5_v, sem.at[0])
    cp6 = pltpu.make_async_copy(w6_hbm, w6_v, sem.at[1])
    cp7 = pltpu.make_async_copy(w7_hbm, w7_v, sem.at[2])
    cp5.start()
    cp6.start()
    cp7.start()

    def lrelu(y):
        return jnp.where(y >= 0, y, LEAKY_SLOPE * y)

    def bias(i):
        off = BIAS_OFFS[i]
        return bias_ref[:, off:off + BIAS_WIDTHS[i]]

    def lin_lrelu(h, w, i):
        y = jnp.dot(h.astype(jnp.bfloat16), w,
                    preferred_element_type=jnp.float32) + bias(i)
        return lrelu(y)

    x = x_ref[...]
    # Layer 1 fully in f32 (precision-sensitive, 8x4x64 is free).
    m1 = lrelu(jnp.dot(x, w1_ref[...], preferred_element_type=jnp.float32) + bias(0))
    m1_o[...] = m1
    m2 = lin_lrelu(m1, w2_ref[...], 1)
    m2_o[...] = m2
    m3 = lin_lrelu(m2, w3_ref[...], 2)
    m3_o[...] = m3
    m4 = lin_lrelu(m3, w4_ref[...], 3)
    m4_o[...] = m4
    cp5.wait()
    m5 = lin_lrelu(m4, w5_v[...], 4)
    m5_o[...] = m5
    cp6.wait()
    m6 = lin_lrelu(m5, w6_v[...], 5)
    m6_o[...] = m6
    cp7.wait()
    m = lin_lrelu(m6, w7_v[...], 6)          # linear1 -> dropout(id) -> LeakyReLU
    heads_o[...] = (jnp.dot(m.astype(jnp.bfloat16), wh_ref[...],
                            preferred_element_type=jnp.float32) + bias(7))


# ----------------------------------------------------------------------------
# Forward wrapper (one jit, one pallas_call)
# ----------------------------------------------------------------------------
@jax.jit
def class_mlp_forward(meta, packed):
    B = meta.shape[0]
    Bp = ((B + PAD_B - 1) // PAD_B) * PAD_B
    x = jnp.pad(meta.astype(jnp.float32), ((0, Bp - B), (0, 0)))

    out_dims = [dout for _, dout in TRUNK_DIMS[:6]] + [N_HEAD_PAD]
    out_shape = tuple(jax.ShapeDtypeStruct((Bp, d), jnp.float32) for d in out_dims)

    vmem = pl.BlockSpec(memory_space=pltpu.MemorySpace.VMEM)
    hbm = pl.BlockSpec(memory_space=pl.ANY)

    flops = 2 * Bp * (sum(din * dout for din, dout in TRUNK_DIMS)
                      + 128 * N_HEAD_PAD)
    bytes_acc = (int(x.size) * 4
                 + sum(int(w.size) * w.dtype.itemsize for w in packed["vmem_w"])
                 + int(packed["bias"].size) * 4
                 + sum(int(w.size) * 2 for w in packed["hbm_w"])
                 + sum(Bp * d * 4 for d in out_dims))

    outs = pl.pallas_call(
        _class_mlp_kernel,
        out_shape=out_shape,
        in_specs=[vmem] * 7 + [hbm] * 3,
        out_specs=tuple(vmem for _ in out_shape),
        scratch_shapes=[
            pltpu.VMEM((512, 1024), jnp.bfloat16),    # w5
            pltpu.VMEM((1024, 2048), jnp.bfloat16),   # w6
            pltpu.VMEM((2048, 128), jnp.bfloat16),    # w7 (linear1)
            pltpu.SemaphoreType.DMA((3,)),
        ],
        cost_estimate=pl.CostEstimate(flops=flops, transcendentals=0,
                                      bytes_accessed=bytes_acc),
    )(x, *packed["vmem_w"], packed["bias"], *packed["hbm_w"])

    m1, m2, m3, m4, m5, m6, heads = outs
    ms = [m1, m2, m3, m4, m5, m6]

    gammam = [m[:B, :c] for m, c in zip(ms, GB_SPLITS)]
    betam = [m[:B, c:] for m, c in zip(ms, GB_SPLITS)]

    logits_v = heads[:B, 0:3]
    logits_s = heads[:B, 3:12]
    logits_d = heads[:B, 12:18]
    logits_f = heads[:B, 18:20]
    return logits_v, logits_s, logits_d, logits_f, gammam, betam


# ----------------------------------------------------------------------------
# Deterministic parameter init (PyTorch nn.Linear-style) + one-time packing
# ----------------------------------------------------------------------------
def _init_linear(key, din, dout):
    kw, kb = jax.random.split(key)
    bound = 1.0 / (din ** 0.5)
    w = jax.random.uniform(kw, (din, dout), jnp.float32, -bound, bound)
    b = jax.random.uniform(kb, (dout,), jnp.float32, -bound, bound)
    return w, b


def init_params(key):
    keys = jax.random.split(key, len(TRUNK_DIMS) + len(HEAD_DIMS))
    trunk = [_init_linear(keys[i], din, dout)
             for i, (din, dout) in enumerate(TRUNK_DIMS)]
    heads = [_init_linear(keys[len(TRUNK_DIMS) + i], 128, d)
             for i, d in enumerate(HEAD_DIMS)]
    return trunk, heads


def pack_params(trunk, heads):
    """One-time packing: bf16 cast, head fusion + lane padding, bias coalescing."""
    w1 = trunk[0][0].astype(jnp.float32)                       # layer 1 stays f32
    w2, w3, w4 = (trunk[i][0].astype(jnp.bfloat16) for i in (1, 2, 3))
    w5, w6, w7 = (trunk[i][0].astype(jnp.bfloat16) for i in (4, 5, 6))

    wh = jnp.concatenate([w for w, _ in heads], axis=1)        # (128, 20)
    wh = jnp.pad(wh, ((0, 0), (0, N_HEAD_PAD - N_HEAD))).astype(jnp.bfloat16)

    bh = jnp.concatenate([b for _, b in heads], axis=0)        # (20,)
    bh = jnp.pad(bh, (0, N_HEAD_PAD - N_HEAD))

    bias_list = [b for _, b in trunk] + [bh]
    bias_pack = jnp.zeros((1, BIAS_TOTAL), jnp.float32)
    for off, b in zip(BIAS_OFFS, bias_list):
        bias_pack = bias_pack.at[0, off:off + b.shape[0]].set(b.astype(jnp.float32))

    return {"vmem_w": (w1, w2, w3, w4, wh),
            "bias": bias_pack,
            "hbm_w": (w5, w6, w7)}


# ----------------------------------------------------------------------------
# Pure-JAX reference (identical precision recipe) for a sanity check
# ----------------------------------------------------------------------------
def _ref_forward(meta, trunk, heads):
    def dot_bf16(a, w):
        return jnp.dot(a.astype(jnp.bfloat16), w.astype(jnp.bfloat16),
                       preferred_element_type=jnp.float32)

    h = meta.astype(jnp.float32)
    ms = []
    w, b = trunk[0]                                            # layer 1 in f32
    y = jnp.dot(h, w, preferred_element_type=jnp.float32) + b
    h = jnp.where(y >= 0, y, LEAKY_SLOPE * y)
    ms.append(h)
    for w, b in trunk[1:6]:
        y = dot_bf16(h, w) + b
        h = jnp.where(y >= 0, y, LEAKY_SLOPE * y)
        ms.append(h)
    w, b = trunk[6]
    y = dot_bf16(h, w) + b
    m = jnp.where(y >= 0, y, LEAKY_SLOPE * y)
    head_outs = [dot_bf16(m, w) + b for w, b in heads]
    return ms, head_outs


# ----------------------------------------------------------------------------
if __name__ == "__main__":
    key = jax.random.PRNGKey(0)
    km, kp = jax.random.split(key)

    meta = jax.random.normal(km, (2, 4), jnp.float32)          # (B, 4) metadata

    trunk, heads = init_params(kp)
    packed = pack_params(trunk, heads)

    outs = class_mlp_forward(meta, packed)
    outs = jax.block_until_ready(outs)
    lv, ls, ld, lf, gammam, betam = outs

    # shape checks (match ClassMLPNet.forward)
    assert lv.shape == (2, 3) and ls.shape == (2, 9)
    assert ld.shape == (2, 6) and lf.shape == (2, 2)
    assert [g.shape for g in gammam] == [(2, c) for c in GB_SPLITS]
    assert [b.shape for b in betam] == [(2, c) for c in GB_SPLITS]
    assert all(bool(jnp.all(jnp.isfinite(o)))
               for o in (lv, ls, ld, lf, *gammam, *betam))

    # numerical sanity check against plain-JAX reference (same precision recipe)
    ref_ms, ref_heads = _ref_forward(meta, trunk, heads)
    for m_parts, ref_m in zip(zip(gammam, betam), ref_ms):
        got = jnp.concatenate(m_parts, axis=1)
        assert bool(jnp.allclose(got, ref_m, rtol=5e-2, atol=5e-2))
    for got, ref in zip((lv, ls, ld, lf), ref_heads):
        assert bool(jnp.allclose(got, ref, rtol=5e-2, atol=5e-2))

    print("KERNEL_OK")
</pallas_src>

<mosaic_0001>
module attributes {stable_mosaic.version = 11 : i64} {
  func.func @_class_mlp_kernel(%arg0: memref<8x4xf32, #tpu.memory_space<vmem>>, %arg1: memref<4x64xf32, #tpu.memory_space<vmem>>, %arg2: memref<64x128xbf16, #tpu.memory_space<vmem>>, %arg3: memref<128x256xbf16, #tpu.memory_space<vmem>>, %arg4: memref<256x512xbf16, #tpu.memory_space<vmem>>, %arg5: memref<128x128xbf16, #tpu.memory_space<vmem>>, %arg6: memref<1x4352xf32, #tpu.memory_space<vmem>>, %arg7: memref<512x1024xbf16, #tpu.memory_space<any>>, %arg8: memref<1024x2048xbf16, #tpu.memory_space<any>>, %arg9: memref<2048x128xbf16, #tpu.memory_space<any>>, %arg10: memref<8x64xf32, #tpu.memory_space<vmem>>, %arg11: memref<8x128xf32, #tpu.memory_space<vmem>>, %arg12: memref<8x256xf32, #tpu.memory_space<vmem>>, %arg13: memref<8x512xf32, #tpu.memory_space<vmem>>, %arg14: memref<8x1024xf32, #tpu.memory_space<vmem>>, %arg15: memref<8x2048xf32, #tpu.memory_space<vmem>>, %arg16: memref<8x128xf32, #tpu.memory_space<vmem>>, %arg17: memref<512x1024xbf16, #tpu.memory_space<vmem>>, %arg18: memref<1024x2048xbf16, #tpu.memory_space<vmem>>, %arg19: memref<2048x128xbf16, #tpu.memory_space<vmem>>, %arg20: memref<3x!tpu.dma_semaphore, #tpu.memory_space<semaphore_mem>>) attributes {dimension_semantics = [], scalar_prefetch = 0 : i64, scratch_operands = 4 : i64, tpu.core_type = #tpu.core_type<tc>} {
    %c0_i32 = arith.constant 0 : i32
    %0 = tpu.memref_slice %arg20[%c0_i32] : memref<3x!tpu.dma_semaphore, #tpu.memory_space<semaphore_mem>> -> memref<1x!tpu.dma_semaphore, #tpu.memory_space<semaphore_mem>>
    %1 = tpu.memref_squeeze %0 : memref<1x!tpu.dma_semaphore, #tpu.memory_space<semaphore_mem>> -> memref<!tpu.dma_semaphore, #tpu.memory_space<semaphore_mem>>
    tpu.enqueue_dma source(%arg7 : memref<512x1024xbf16, #tpu.memory_space<any>>) target(%arg17 : memref<512x1024xbf16, #tpu.memory_space<vmem>>) target_semaphore(%1 : memref<!tpu.dma_semaphore, #tpu.memory_space<semaphore_mem>>)
    %c1_i32 = arith.constant 1 : i32
    %2 = tpu.memref_slice %arg20[%c1_i32] : memref<3x!tpu.dma_semaphore, #tpu.memory_space<semaphore_mem>> -> memref<1x!tpu.dma_semaphore, #tpu.memory_space<semaphore_mem>>
    %3 = tpu.memref_squeeze %2 : memref<1x!tpu.dma_semaphore, #tpu.memory_space<semaphore_mem>> -> memref<!tpu.dma_semaphore, #tpu.memory_space<semaphore_mem>>
    tpu.enqueue_dma source(%arg8 : memref<1024x2048xbf16, #tpu.memory_space<any>>) target(%arg18 : memref<1024x2048xbf16, #tpu.memory_space<vmem>>) target_semaphore(%3 : memref<!tpu.dma_semaphore, #tpu.memory_space<semaphore_mem>>)
    %c2_i32 = arith.constant 2 : i32
    %4 = tpu.memref_slice %arg20[%c2_i32] : memref<3x!tpu.dma_semaphore, #tpu.memory_space<semaphore_mem>> -> memref<1x!tpu.dma_semaphore, #tpu.memory_space<semaphore_mem>>
    %5 = tpu.memref_squeeze %4 : memref<1x!tpu.dma_semaphore, #tpu.memory_space<semaphore_mem>> -> memref<!tpu.dma_semaphore, #tpu.memory_space<semaphore_mem>>
    tpu.enqueue_dma source(%arg9 : memref<2048x128xbf16, #tpu.memory_space<any>>) target(%arg19 : memref<2048x128xbf16, #tpu.memory_space<vmem>>) target_semaphore(%5 : memref<!tpu.dma_semaphore, #tpu.memory_space<semaphore_mem>>)
    %c0 = arith.constant 0 : index
    %c0_0 = arith.constant 0 : index
    %6 = vector.load %arg0[%c0, %c0_0] : memref<8x4xf32, #tpu.memory_space<vmem>>, vector<8x4xf32>
    %c0_1 = arith.constant 0 : index
    %c0_2 = arith.constant 0 : index
    %7 = vector.load %arg1[%c0_1, %c0_2] : memref<4x64xf32, #tpu.memory_space<vmem>>, vector<4x64xf32>
    %cst = arith.constant dense<0.000000e+00> : vector<8x64xf32>
    %8 = tpu.matmul %6, %7, %cst {dimension_numbers = #tpu.dot_dimension_numbers<[1], [0], [0], [1], [0, 0, 1, 1], [], []>} : vector<8x4xf32>, vector<4x64xf32>, vector<8x64xf32> -> vector<8x64xf32>
    %c0_3 = arith.constant 0 : index
    %c0_4 = arith.constant 0 : index
    %9 = vector.load %arg6[%c0_3, %c0_4] : memref<1x4352xf32, #tpu.memory_space<vmem>>, vector<1x64xf32>
    %10 = vector.broadcast %9 : vector<1x64xf32> to vector<8x64xf32>
    %11 = arith.addf %8, %10 : vector<8x64xf32>
    %cst_5 = arith.constant 0.000000e+00 : f32
    %12 = vector.broadcast %cst_5 : f32 to vector<8x64xf32>
    %13 = arith.cmpf oge, %11, %12 : vector<8x64xf32>
    %cst_6 = arith.constant 0.00999999977 : f32
    %14 = vector.broadcast %cst_6 : f32 to vector<8x64xf32>
    %15 = arith.mulf %14, %11 : vector<8x64xf32>
    %16 = arith.select %13, %11, %15 : vector<8x64xi1>, vector<8x64xf32>
    %c0_7 = arith.constant 0 : index
    %c0_8 = arith.constant 0 : index
    %17 = vector.load %arg10[%c0_7, %c0_8] : memref<8x64xf32, #tpu.memory_space<vmem>>, vector<8x64xf32>
    tpu.vector_store %arg10[%c0_7, %c0_8], %16 {strides = array<i32>} : memref<8x64xf32, #tpu.memory_space<vmem>>, vector<8x64xf32>,
    %c0_9 = arith.constant 0 : index
    %c0_10 = arith.constant 0 : index
    %18 = vector.load %arg2[%c0_9, %c0_10] : memref<64x128xbf16, #tpu.memory_space<vmem>>, vector<64x128xbf16>
    %19 = arith.truncf %16 : vector<8x64xf32> to vector<8x64xbf16>
    %cst_11 = arith.constant dense<0.000000e+00> : vector<8x128xf32>
    %20 = tpu.matmul %19, %18, %cst_11 {dimension_numbers = #tpu.dot_dimension_numbers<[1], [0], [0], [1], [0, 0, 1, 1], [], []>} : vector<8x64xbf16>, vector<64x128xbf16>, vector<8x128xf32> -> vector<8x128xf32>
    %c0_12 = arith.constant 0 : index
    %c128 = arith.constant 128 : index
    %21 = vector.load %arg6[%c0_12, %c128] : memref<1x4352xf32, #tpu.memory_space<vmem>>, vector<1x128xf32>
    %22 = vector.broadcast %21 : vector<1x128xf32> to vector<8x128xf32>
    %23 = arith.addf %20, %22 : vector<8x128xf32>
    %cst_13 = arith.constant 0.000000e+00 : f32
    %24 = vector.broadcast %cst_13 : f32 to vector<8x128xf32>
    %25 = arith.cmpf oge, %23, %24 : vector<8x128xf32>
    %cst_14 = arith.constant 0.00999999977 : f32
    %26 = vector.broadcast %cst_14 : f32 to vector<8x128xf32>
    %27 = arith.mulf %26, %23 : vector<8x128xf32>
    %28 = arith.select %25, %23, %27 : vector<8x128xi1>, vector<8x128xf32>
    %c0_15 = arith.constant 0 : index
    %c0_16 = arith.constant 0 : index
    %29 = vector.load %arg11[%c0_15, %c0_16] : memref<8x128xf32, #tpu.memory_space<vmem>>, vector<8x128xf32>
    tpu.vector_store %arg11[%c0_15, %c0_16], %28 {strides = array<i32>} : memref<8x128xf32, #tpu.memory_space<vmem>>, vector<8x128xf32>,
    %c0_17 = arith.constant 0 : index
    %c0_18 = arith.constant 0 : index
    %30 = vector.load %arg3[%c0_17, %c0_18] : memref<128x256xbf16, #tpu.memory_space<vmem>>, vector<128x256xbf16>
    %31 = arith.truncf %28 : vector<8x128xf32> to vector<8x128xbf16>
    %cst_19 = arith.constant dense<0.000000e+00> : vector<8x256xf32>
    %32 = tpu.matmul %31, %30, %cst_19 {dimension_numbers = #tpu.dot_dimension_numbers<[1], [0], [0], [1], [0, 0, 1, 1], [], []>} : vector<8x128xbf16>, vector<128x256xbf16>, vector<8x256xf32> -> vector<8x256xf32>
    %c0_20 = arith.constant 0 : index
    %c256 = arith.constant 256 : index
    %33 = vector.load %arg6[%c0_20, %c256] : memref<1x4352xf32, #tpu.memory_space<vmem>>, vector<1x256xf32>
    %34 = vector.broadcast %33 : vector<1x256xf32> to vector<8x256xf32>
    %35 = arith.addf %32, %34 : vector<8x256xf32>
    %cst_21 = arith.constant 0.000000e+00 : f32
    %36 = vector.broadcast %cst_21 : f32 to vector<8x256xf32>
    %37 = arith.cmpf oge, %35, %36 : vector<8x256xf32>
    %cst_22 = arith.constant 0.00999999977 : f32
    %38 = vector.broadcast %cst_22 : f32 to vector<8x256xf32>
    %39 = arith.mulf %38, %35 : vector<8x256xf32>
    %40 = arith.select %37, %35, %39 : vector<8x256xi1>, vector<8x256xf32>
    %c0_23 = arith.constant 0 : index
    %c0_24 = arith.constant 0 : index
    %41 = vector.load %arg12[%c0_23, %c0_24] : memref<8x256xf32, #tpu.memory_space<vmem>>, vector<8x256xf32>
    tpu.vector_store %arg12[%c0_23, %c0_24], %40 {strides = array<i32>} : memref<8x256xf32, #tpu.memory_space<vmem>>, vector<8x256xf32>,
    %c0_25 = arith.constant 0 : index
    %c0_26 = arith.constant 0 : index
    %42 = vector.load %arg4[%c0_25, %c0_26] : memref<256x512xbf16, #tpu.memory_space<vmem>>, vector<256x512xbf16>
    %43 = arith.truncf %40 : vector<8x256xf32> to vector<8x256xbf16>
    %cst_27 = arith.constant dense<0.000000e+00> : vector<8x512xf32>
    %44 = tpu.matmul %43, %42, %cst_27 {dimension_numbers = #tpu.dot_dimension_numbers<[1], [0], [0], [1], [0, 0, 1, 1], [], []>} : vector<8x256xbf16>, vector<256x512xbf16>, vector<8x512xf32> -> vector<8x512xf32>
    %c0_28 = arith.constant 0 : index
    %c512 = arith.constant 512 : index
    %45 = vector.load %arg6[%c0_28, %c512] : memref<1x4352xf32, #tpu.memory_space<vmem>>, vector<1x512xf32>
    %46 = vector.broadcast %45 : vector<1x512xf32> to vector<8x512xf32>
    %47 = arith.addf %44, %46 : vector<8x512xf32>
    %cst_29 = arith.constant 0.000000e+00 : f32
    %48 = vector.broadcast %cst_29 : f32 to vector<8x512xf32>
    %49 = arith.cmpf oge, %47, %48 : vector<8x512xf32>
    %cst_30 = arith.constant 0.00999999977 : f32
    %50 = vector.broadcast %cst_30 : f32 to vector<8x512xf32>
    %51 = arith.mulf %50, %47 : vector<8x512xf32>
    %52 = arith.select %49, %47, %51 : vector<8x512xi1>, vector<8x512xf32>
    %c0_31 = arith.constant 0 : index
    %c0_32 = arith.constant 0 : index
    %53 = vector.load %arg13[%c0_31, %c0_32] : memref<8x512xf32, #tpu.memory_space<vmem>>, vector<8x512xf32>
    tpu.vector_store %arg13[%c0_31, %c0_32], %52 {strides = array<i32>} : memref<8x512xf32, #tpu.memory_space<vmem>>, vector<8x512xf32>,
    %c0_i32_33 = arith.constant 0 : i32
    %54 = tpu.memref_slice %arg20[%c0_i32_33] : memref<3x!tpu.dma_semaphore, #tpu.memory_space<semaphore_mem>> -> memref<1x!tpu.dma_semaphore, #tpu.memory_space<semaphore_mem>>
    %55 = tpu.memref_squeeze %54 : memref<1x!tpu.dma_semaphore, #tpu.memory_space<semaphore_mem>> -> memref<!tpu.dma_semaphore, #tpu.memory_space<semaphore_mem>>
    tpu.wait_dma2 semaphore(%55 : memref<!tpu.dma_semaphore, #tpu.memory_space<semaphore_mem>>) src(%arg7 : memref<512x1024xbf16, #tpu.memory_space<any>>) dst(%arg17 : memref<512x1024xbf16, #tpu.memory_space<vmem>>)
    %c0_34 = arith.constant 0 : index
    %c0_35 = arith.constant 0 : index
    %56 = vector.load %arg17[%c0_34, %c0_35] : memref<512x1024xbf16, #tpu.memory_space<vmem>>, vector<512x1024xbf16>
    %57 = arith.truncf %52 : vector<8x512xf32> to vector<8x512xbf16>
    %cst_36 = arith.constant dense<0.000000e+00> : vector<8x1024xf32>
    %58 = tpu.matmul %57, %56, %cst_36 {dimension_numbers = #tpu.dot_dimension_numbers<[1], [0], [0], [1], [0, 0, 1, 1], [], []>} : vector<8x512xbf16>, vector<512x1024xbf16>, vector<8x1024xf32> -> vector<8x1024xf32>
    %c0_37 = arith.constant 0 : index
    %c1024 = arith.constant 1024 : index
    %59 = vector.load %arg6[%c0_37, %c1024] : memref<1x4352xf32, #tpu.memory_space<vmem>>, vector<1x1024xf32>
    %60 = vector.broadcast %59 : vector<1x1024xf32> to vector<8x1024xf32>
    %61 = arith.addf %58, %60 : vector<8x1024xf32>
    %cst_38 = arith.constant 0.000000e+00 : f32
    %62 = vector.broadcast %cst_38 : f32 to vector<8x1024xf32>
    %63 = arith.cmpf oge, %61, %62 : vector<8x1024xf32>
    %cst_39 = arith.constant 0.00999999977 : f32
    %64 = vector.broadcast %cst_39 : f32 to vector<8x1024xf32>
    %65 = arith.mulf %64, %61 : vector<8x1024xf32>
    %66 = arith.select %63, %61, %65 : vector<8x1024xi1>, vector<8x1024xf32>
    %c0_40 = arith.constant 0 : index
    %c0_41 = arith.constant 0 : index
    %67 = vector.load %arg14[%c0_40, %c0_41] : memref<8x1024xf32, #tpu.memory_space<vmem>>, vector<8x1024xf32>
    tpu.vector_store %arg14[%c0_40, %c0_41], %66 {strides = array<i32>} : memref<8x1024xf32, #tpu.memory_space<vmem>>, vector<8x1024xf32>,
    %c1_i32_42 = arith.constant 1 : i32
    %68 = tpu.memref_slice %arg20[%c1_i32_42] : memref<3x!tpu.dma_semaphore, #tpu.memory_space<semaphore_mem>> -> memref<1x!tpu.dma_semaphore, #tpu.memory_space<semaphore_mem>>
    %69 = tpu.memref_squeeze %68 : memref<1x!tpu.dma_semaphore, #tpu.memory_space<semaphore_mem>> -> memref<!tpu.dma_semaphore, #tpu.memory_space<semaphore_mem>>
    tpu.wait_dma2 semaphore(%69 : memref<!tpu.dma_semaphore, #tpu.memory_space<semaphore_mem>>) src(%arg8 : memref<1024x2048xbf16, #tpu.memory_space<any>>) dst(%arg18 : memref<1024x2048xbf16, #tpu.memory_space<vmem>>)
    %c0_43 = arith.constant 0 : index
    %c0_44 = arith.constant 0 : index
    %70 = vector.load %arg18[%c0_43, %c0_44] : memref<1024x2048xbf16, #tpu.memory_space<vmem>>, vector<1024x2048xbf16>
    %71 = arith.truncf %66 : vector<8x1024xf32> to vector<8x1024xbf16>
    %cst_45 = arith.constant dense<0.000000e+00> : vector<8x2048xf32>
    %72 = tpu.matmul %71, %70, %cst_45 {dimension_numbers = #tpu.dot_dimension_numbers<[1], [0], [0], [1], [0, 0, 1, 1], [], []>} : vector<8x1024xbf16>, vector<1024x2048xbf16>, vector<8x2048xf32> -> vector<8x2048xf32>
    %c0_46 = arith.constant 0 : index
    %c2048 = arith.constant 2048 : index
    %73 = vector.load %arg6[%c0_46, %c2048] : memref<1x4352xf32, #tpu.memory_space<vmem>>, vector<1x2048xf32>
    %74 = vector.broadcast %73 : vector<1x2048xf32> to vector<8x2048xf32>
    %75 = arith.addf %72, %74 : vector<8x2048xf32>
    %cst_47 = arith.constant 0.000000e+00 : f32
    %76 = vector.broadcast %cst_47 : f32 to vector<8x2048xf32>
    %77 = arith.cmpf oge, %75, %76 : vector<8x2048xf32>
    %cst_48 = arith.constant 0.00999999977 : f32
    %78 = vector.broadcast %cst_48 : f32 to vector<8x2048xf32>
    %79 = arith.mulf %78, %75 : vector<8x2048xf32>
    %80 = arith.select %77, %75, %79 : vector<8x2048xi1>, vector<8x2048xf32>
    %c0_49 = arith.constant 0 : index
    %c0_50 = arith.constant 0 : index
    %81 = vector.load %arg15[%c0_49, %c0_50] : memref<8x2048xf32, #tpu.memory_space<vmem>>, vector<8x2048xf32>
    tpu.vector_store %arg15[%c0_49, %c0_50], %80 {strides = array<i32>} : memref<8x2048xf32, #tpu.memory_space<vmem>>, vector<8x2048xf32>,
    %c2_i32_51 = arith.constant 2 : i32
    %82 = tpu.memref_slice %arg20[%c2_i32_51] : memref<3x!tpu.dma_semaphore, #tpu.memory_space<semaphore_mem>> -> memref<1x!tpu.dma_semaphore, #tpu.memory_space<semaphore_mem>>
    %83 = tpu.memref_squeeze %82 : memref<1x!tpu.dma_semaphore, #tpu.memory_space<semaphore_mem>> -> memref<!tpu.dma_semaphore, #tpu.memory_space<semaphore_mem>>
    tpu.wait_dma2 semaphore(%83 : memref<!tpu.dma_semaphore, #tpu.memory_space<semaphore_mem>>) src(%arg9 : memref<2048x128xbf16, #tpu.memory_space<any>>) dst(%arg19 : memref<2048x128xbf16, #tpu.memory_space<vmem>>)
    %c0_52 = arith.constant 0 : index
    %c0_53 = arith.constant 0 : index
    %84 = vector.load %arg19[%c0_52, %c0_53] : memref<2048x128xbf16, #tpu.memory_space<vmem>>, vector<2048x128xbf16>
    %85 = arith.truncf %80 : vector<8x2048xf32> to vector<8x2048xbf16>
    %cst_54 = arith.constant dense<0.000000e+00> : vector<8x128xf32>
    %86 = tpu.matmul %85, %84, %cst_54 {dimension_numbers = #tpu.dot_dimension_numbers<[1], [0], [0], [1], [0, 0, 1, 1], [], []>} : vector<8x2048xbf16>, vector<2048x128xbf16>, vector<8x128xf32> -> vector<8x128xf32>
    %c0_55 = arith.constant 0 : index
    %c4096 = arith.constant 4096 : index
    %87 = vector.load %arg6[%c0_55, %c4096] : memref<1x4352xf32, #tpu.memory_space<vmem>>, vector<1x128xf32>
    %88 = vector.broadcast %87 : vector<1x128xf32> to vector<8x128xf32>
    %89 = arith.addf %86, %88 : vector<8x128xf32>
    %cst_56 = arith.constant 0.000000e+00 : f32
    %90 = vector.broadcast %cst_56 : f32 to vector<8x128xf32>
    %91 = arith.cmpf oge, %89, %90 : vector<8x128xf32>
    %cst_57 = arith.constant 0.00999999977 : f32
    %92 = vector.broadcast %cst_57 : f32 to vector<8x128xf32>
    %93 = arith.mulf %92, %89 : vector<8x128xf32>
    %94 = arith.select %91, %89, %93 : vector<8x128xi1>, vector<8x128xf32>
    %95 = arith.truncf %94 : vector<8x128xf32> to vector<8x128xbf16>
    %c0_58 = arith.constant 0 : index
    %c0_59 = arith.constant 0 : index
    %96 = vector.load %arg5[%c0_58, %c0_59] : memref<128x128xbf16, #tpu.memory_space<vmem>>, vector<128x128xbf16>
    %cst_60 = arith.constant dense<0.000000e+00> : vector<8x128xf32>
    %97 = tpu.matmul %95, %96, %cst_60 {dimension_numbers = #tpu.dot_dimension_numbers<[1], [0], [0], [1], [0, 0, 1, 1], [], []>} : vector<8x128xbf16>, vector<128x128xbf16>, vector<8x128xf32> -> vector<8x128xf32>
    %c0_61 = arith.constant 0 : index
    %c4224 = arith.constant 4224 : index
    %98 = vector.load %arg6[%c0_61, %c4224] : memref<1x4352xf32, #tpu.memory_space<vmem>>, vector<1x128xf32>
    %99 = vector.broadcast %98 : vector<1x128xf32> to vector<8x128xf32>
    %100 = arith.addf %97, %99 : vector<8x128xf32>
    %c0_62 = arith.constant 0 : index
    %c0_63 = arith.constant 0 : index
    %101 = vector.load %arg16[%c0_62, %c0_63] : memref<8x128xf32, #tpu.memory_space<vmem>>, vector<8x128xf32>
    tpu.vector_store %arg16[%c0_62, %c0_63], %100 {strides = array<i32>} : memref<8x128xf32, #tpu.memory_space<vmem>>, vector<8x128xf32>,
    return
  }
}

</mosaic_0001>

<llo_original>
// kernel: class_mlp_forward.1
$region0: #{class_mlp_forward.1}
  #allocation0 [shape = 'u32[]', space=smem, size = 0x4, offset = 0x4, fixed_abs, tag = 'smem constant byte address 0x4 - core index']
  #allocation1 [shape = 'u32[144,128]{1,0:T(1,128)}', space=vmem, size = 0x12000, scoped, tag = 'internal scratch']
  #allocation2 [shape = 'bf16[512,1024]{1,0:T(16,128)(2,1)}', space=vmem, size = 0x100000, scoped, tag = 'scratch operand']
  #allocation3 [shape = 'bf16[1024,2048]{1,0:T(16,128)(2,1)}', space=vmem, size = 0x400000, scoped, tag = 'scratch operand']
  #allocation4 [shape = 'bf16[2048,128]{1,0:T(16,128)(2,1)}', space=vmem, size = 0x80000, scoped, tag = 'scratch operand']
  #allocation5 [shape = 's32[3]{0}', space=sflag, size = 0xc, scoped, tag = 'scratch operand']
  #allocation16 [shape = 's32[]', space=sflag, size = 0x4, offset = 0, fixed_abs, tag = 'sflag constant byte address 0x0 - dummy sync flag']
  #allocation18 [shape = 's32[]', space=sflag, size = 0x4, offset = 0, fixed_abs, tag = 'sflag constant byte address 0x0 - dummy sync flag']
  #allocation20 [shape = 's32[]', space=sflag, size = 0x4, offset = 0, fixed_abs, tag = 'sflag constant byte address 0x0 - dummy sync flag']
  #allocation21 [shape = 's32[]', space=sflag, size = 0x4, offset = 0, fixed_abs, tag = 'sflag constant byte address 0x0 - dummy sync flag']
  #allocation22 [shape = 'u32[]', space=smem, size = 0x4, offset = 0x44, fixed_abs, tag = 'smem constant byte address 0x44 - assertion arg 0']
  #allocation23 [shape = 'u32[]', space=smem, size = 0x4, offset = 0x48, fixed_abs, tag = 'smem constant byte address 0x48 - assertion arg 1']
  %s0 = inlined_call_operand.vmem [shape: f32[8,4], index: 0, kind: input, shape index: {}]
  %s1 = inlined_call_operand.hbm [shape: f32[4,64], index: 1, kind: input, shape index: {}]
  %s2 = inlined_call_operand.hbm [shape: bf16[64,128], index: 2, kind: input, shape index: {}]
  %s3 = inlined_call_operand.hbm [shape: bf16[128,256], index: 3, kind: input, shape index: {}]
  %s4 = inlined_call_operand.hbm [shape: bf16[256,512], index: 4, kind: input, shape index: {}]
  %s5 = inlined_call_operand.hbm [shape: bf16[128,128], index: 5, kind: input, shape index: {}]
  %s6 = inlined_call_operand.hbm [shape: f32[1,4352], index: 6, kind: input, shape index: {}]
  %s7 = inlined_call_operand.hbm [shape: bf16[512,1024], index: 7, kind: input, shape index: {}]
  %s8 = inlined_call_operand.hbm [shape: bf16[1024,2048], index: 8, kind: input, shape index: {}]
  %s9 = inlined_call_operand.hbm [shape: bf16[2048,128], index: 9, kind: input, shape index: {}]
  %s10 = inlined_call_operand.vmem [shape: f32[8,64], index: 10, kind: output, shape index: {0}]
  %s11 = inlined_call_operand.vmem [shape: f32[8,128], index: 11, kind: output, shape index: {1}]
  %s12 = inlined_call_operand.vmem [shape: f32[8,256], index: 12, kind: output, shape index: {2}]
  %s13 = inlined_call_operand.vmem [shape: f32[8,512], index: 13, kind: output, shape index: {3}]
  %s14 = inlined_call_operand.vmem [shape: f32[8,1024], index: 14, kind: output, shape index: {4}]
  %s15 = inlined_call_operand.vmem [shape: f32[8,2048], index: 15, kind: output, shape index: {5}]
  %s16 = inlined_call_operand.vmem [shape: f32[8,128], index: 16, kind: output, shape index: {6}]
  %17 = xla_tuple %s10, %s11, %s12, %s13, %s14, %s15, %s16
  %s18 = sld [smem:[#allocation0]]
  $region114: #{class_mlp_forward.1} parent=0
    _
  %s20 = ssub.s32 1, %s18
  %s21 = scalar_select 0, %s20, %s18
  $region1: #{class_mlp_forward.1} parent=0
    #allocation6 [shape = 'u8[2048]{0}', space=vmem, size = 0x800, scoped, tag = 'input window, operand 1, single buffered']
    #allocation7 [shape = 's32[1]{0}', space=sflag, size = 0x4, scoped, tag = 'scoped memory for class_mlp_forward.1']
    #allocation8 [shape = 'u8[16384]{0}', space=vmem, size = 0x4000, scoped, tag = 'input window, operand 2, single buffered']
    #allocation9 [shape = 's32[1]{0}', space=sflag, size = 0x4, scoped, tag = 'scoped memory for class_mlp_forward.1']
    #allocation10 [shape = 'u8[65536]{0}', space=vmem, size = 0x10000, scoped, tag = 'input window, operand 3, single buffered']
    #allocation11 [shape = 'u8[262144]{0}', space=vmem, size = 0x40000, scoped, tag = 'input window, operand 4, single buffered']
    #allocation12 [shape = 's32[1]{0}', space=sflag, size = 0x4, scoped, tag = 'scoped memory for class_mlp_forward.1']
    #allocation13 [shape = 'u8[32768]{0}', space=vmem, size = 0x8000, scoped, tag = 'input window, operand 5, single buffered']
    #allocation14 [shape = 'u8[17408]{0}', space=vmem, size = 0x4400, scoped, tag = 'input window, operand 6, single buffered']
    #allocation15 [shape = 's32[1]{0}', space=sflag, size = 0x4, scoped, tag = 'scoped memory for class_mlp_forward.1']
    #allocation17 [shape = 'u32[9]{0}', space=smem, size = 0x24, scoped, tag = 'DMA stride descriptor']
    #allocation19 [shape = 'u32[9]{0}', space=smem, size = 0x24, scoped, tag = 'DMA stride descriptor']
    %22 = vsyncpa [#allocation7], 0
    %23 = vsyncpa [#allocation9], 0
    %24 = vsyncpa [#allocation12], 0
    %25 = vsyncpa [#allocation15], 0
    // Predicated region
    $region2: #{class_mlp_forward.1} parent=1 // pred_check
      _
    $region3: #{class_mlp_forward.1} parent=1 // pred_check_branch
      %27 = sbr.rel (0) target = $region5
    $region4: #{class_mlp_forward.1} parent=1 // pred_region
      _
    $region5: #{class_mlp_forward.1} parent=1 // pred_fallthru
      _
    // Predicated region
    $region6: #{class_mlp_forward.1} parent=1 // pred_check
      _
    $region7: #{class_mlp_forward.1} parent=1 // pred_check_branch
      %29 = sbr.rel (0) target = $region9
    $region8: #{class_mlp_forward.1} parent=1 // pred_region
      %s31 = ssub.s32 64, 64
      %32 = vsyncadd [#allocation7], %s31
      %s34 = sshll.u32 [#allocation6], 4
      %s35 = int_to_ptr.vmem [resolvable:$true] %s34
      %37 = dma.hbm_to_vmem [thread:$0]  %s1, 64, %s35, [#allocation7]
    $region9: #{class_mlp_forward.1} parent=1 // pred_fallthru
      _
    // Predicated region
    $region10: #{class_mlp_forward.1} parent=1 // pred_check
      _
    $region11: #{class_mlp_forward.1} parent=1 // pred_check_branch
      %39 = sbr.rel (0) target = $region13
    $region12: #{class_mlp_forward.1} parent=1 // pred_region
      %s41 = ssub.s32 512, 512
      %42 = vsyncadd [#allocation9], %s41
      %s43 = sshll.u32 [#allocation8], 4
      %s44 = int_to_ptr.vmem [resolvable:$true] %s43
      %49 = dma.hbm_to_vmem [thread:$0]  %s2, 512, %s44, [#allocation9], 64, 64, 4
    $region13: #{class_mlp_forward.1} parent=1 // pred_fallthru
      _
    // Predicated region
    $region14: #{class_mlp_forward.1} parent=1 // pred_check
      _
    $region15: #{class_mlp_forward.1} parent=1 // pred_check_branch
      %51 = sbr.rel (0) target = $region17
    $region16: #{class_mlp_forward.1} parent=1 // pred_region
      %s53 = ssub.s32 2048, 2048
      %54 = vsyncadd [#allocation9], %s53
      %s55 = sshll.u32 [#allocation10], 4
      %s56 = int_to_ptr.vmem [resolvable:$true] %s55
      %61 = dma.hbm_to_vmem [thread:$0]  %s3, 2048, %s56, [#allocation9], 128, 128, 8
    $region17: #{class_mlp_forward.1} parent=1 // pred_fallthru
      _
    // Predicated region
    $region18: #{class_mlp_forward.1} parent=1 // pred_check
      _
    $region19: #{class_mlp_forward.1} parent=1 // pred_check_branch
      %63 = sbr.rel (0) target = $region21
    $region20: #{class_mlp_forward.1} parent=1 // pred_region
      %s65 = ssub.s32 8192, 8192
      %66 = vsyncadd [#allocation12], %s65
      %s67 = sshll.u32 [#allocation11], 4
      %s68 = int_to_ptr.vmem [resolvable:$true] %s67
      %73 = dma.hbm_to_vmem [thread:$0]  %s4, 8192, %s68, [#allocation12], 256, 256, 16
    $region21: #{class_mlp_forward.1} parent=1 // pred_fallthru
      _
    // Predicated region
    $region22: #{class_mlp_forward.1} parent=1 // pred_check
      _
    $region23: #{class_mlp_forward.1} parent=1 // pred_check_branch
      %75 = sbr.rel (0) target = $region25
    $region24: #{class_mlp_forward.1} parent=1 // pred_region
      %s77 = ssub.s32 1024, 1024
      %78 = vsyncadd [#allocation12], %s77
      %s79 = sshll.u32 [#allocation13], 4
      %s80 = int_to_ptr.vmem [resolvable:$true] %s79
      %85 = dma.hbm_to_vmem [thread:$0]  %s5, 1024, %s80, [#allocation12], 64, 64, 4
    $region25: #{class_mlp_forward.1} parent=1 // pred_fallthru
      _
    // Predicated region
    $region26: #{class_mlp_forward.1} parent=1 // pred_check
      _
    $region27: #{class_mlp_forward.1} parent=1 // pred_check_branch
      %87 = sbr.rel (0) target = $region29
    $region28: #{class_mlp_forward.1} parent=1 // pred_region
      %s89 = ssub.s32 544, 544
      %90 = vsyncadd [#allocation15], %s89
      %s92 = sshll.u32 [#allocation14], 4
      %s93 = int_to_ptr.vmem [resolvable:$true] %s92
      %95 = dma.hbm_to_vmem [thread:$0]  %s6, 544, %s93, [#allocation15]
    $region29: #{class_mlp_forward.1} parent=1 // pred_fallthru
      _
    // Predicated region
    $region30: #{class_mlp_forward.1} parent=1 // pred_check
      _
    $region31: #{class_mlp_forward.1} parent=1 // pred_check_branch
      %97 = sbr.rel (0) target = $region33
    $region32: #{class_mlp_forward.1} parent=1 // pred_region
      %98 = dma.done [#allocation7], 64
    $region33: #{class_mlp_forward.1} parent=1 // pred_fallthru
      _
    // Predicated region
    $region34: #{class_mlp_forward.1} parent=1 // pred_check
      _
    $region35: #{class_mlp_forward.1} parent=1 // pred_check_branch
      %100 = sbr.rel (0) target = $region37
    $region36: #{class_mlp_forward.1} parent=1 // pred_region
      %101 = dma.done [#allocation9], 512
    $region37: #{class_mlp_forward.1} parent=1 // pred_fallthru
      _
    // Predicated region
    $region38: #{class_mlp_forward.1} parent=1 // pred_check
      _
    $region39: #{class_mlp_forward.1} parent=1 // pred_check_branch
      %103 = sbr.rel (0) target = $region41
    $region40: #{class_mlp_forward.1} parent=1 // pred_region
      %104 = dma.done [#allocation9], 2048
    $region41: #{class_mlp_forward.1} parent=1 // pred_fallthru
      _
    // Predicated region
    $region42: #{class_mlp_forward.1} parent=1 // pred_check
      _
    $region43: #{class_mlp_forward.1} parent=1 // pred_check_branch
      %106 = sbr.rel (0) target = $region45
    $region44: #{class_mlp_forward.1} parent=1 // pred_region
      %107 = dma.done [#allocation12], 8192
    $region45: #{class_mlp_forward.1} parent=1 // pred_fallthru
      _
    // Predicated region
    $region46: #{class_mlp_forward.1} parent=1 // pred_check
      _
    $region47: #{class_mlp_forward.1} parent=1 // pred_check_branch
      %109 = sbr.rel (0) target = $region49
    $region48: #{class_mlp_forward.1} parent=1 // pred_region
      %110 = dma.done [#allocation12], 1024
    $region49: #{class_mlp_forward.1} parent=1 // pred_fallthru
      _
    // Predicated region
    $region50: #{class_mlp_forward.1} parent=1 // pred_check
      _
    $region51: #{class_mlp_forward.1} parent=1 // pred_check_branch
      %112 = sbr.rel (0) target = $region53
    $region52: #{class_mlp_forward.1} parent=1 // pred_region
      %113 = dma.done [#allocation15], 544
    $region53: #{class_mlp_forward.1} parent=1 // pred_fallthru
      _
    %s116 = sshll.u32 1, 14
    %s117 = sxor.u32 4294967295, %s116
    %s119 = sld [smem:[#allocation0]]
    %s120 = sadd.s32 2, %s119
    %s122 = sshll.u32 7, 26
    %s123 = sxor.u32 4294967295, %s122
    %s124 = sand.u32 0, %s123
    %s125 = sshll.u32 %s120, 26
    %s126 = sor.u32 %s124, %s125
    %s127 = sshll.u32 [#allocation2], 4
    %s128 = int_to_ptr.vmem [resolvable:$true] %s127
    %131 = sst [smem:[#allocation17]] 1024
    %s132 = scalar_lea.smem [#allocation17], 1
    %133 = sst [smem:[%s132]] 1024
    %s134 = scalar_lea.smem [#allocation17], 2
    %135 = sst [smem:[%s134]] 8
    %s136 = scalar_lea.smem [#allocation17], 3
    %137 = sst [smem:[%s136]] 64
    %s138 = scalar_lea.smem [#allocation17], 4
    %139 = sst [smem:[%s138]] 128
    %s140 = scalar_lea.smem [#allocation17], 5
    %141 = sst [smem:[%s140]] 2
    %s142 = scalar_lea.smem [#allocation17], 6
    %143 = sst [smem:[%s142]] 512
    %s144 = scalar_lea.smem [#allocation17], 7
    %145 = sst [smem:[%s144]] 64
    %s146 = scalar_lea.smem [#allocation17], 8
    %147 = sst [smem:[%s146]] 4
    %149 = dma.general %s7, 32768, %s128, [#allocation5], [#allocation16], [#allocation17], %s126, 0
    %s150 = scalar_lea.sflag [#allocation5], 1
    %s152 = sshll.u32 1, 14
    %s153 = sxor.u32 4294967295, %s152
    %s155 = sadd.s32 2, %s119
    %s157 = sshll.u32 7, 26
    %s158 = sxor.u32 4294967295, %s157
    %s159 = sand.u32 0, %s158
    %s160 = sshll.u32 %s155, 26
    %s161 = sor.u32 %s159, %s160
    %s162 = sshll.u32 [#allocation3], 4
    %s163 = int_to_ptr.vmem [resolvable:$true] %s162
    %166 = sst [smem:[#allocation19]] 2048
    %s167 = scalar_lea.smem [#allocation19], 1
    %168 = sst [smem:[%s167]] 2048
    %s169 = scalar_lea.smem [#allocation19], 2
    %170 = sst [smem:[%s169]] 16
    %s171 = scalar_lea.smem [#allocation19], 3
    %172 = sst [smem:[%s171]] 64
    %s173 = scalar_lea.smem [#allocation19], 4
    %174 = sst [smem:[%s173]] 128
    %s175 = scalar_lea.smem [#allocation19], 5
    %176 = sst [smem:[%s175]] 2
    %s177 = scalar_lea.smem [#allocation19], 6
    %178 = sst [smem:[%s177]] 1024
    %s179 = scalar_lea.smem [#allocation19], 7
    %180 = sst [smem:[%s179]] 64
    %s181 = scalar_lea.smem [#allocation19], 8
    %182 = sst [smem:[%s181]] 4
    %184 = dma.general %s8, 131072, %s163, %s150, [#allocation18], [#allocation19], %s161, 0
    %s185 = scalar_lea.sflag [#allocation5], 2
    // Predicated region
    $region54: #{class_mlp_forward.1} parent=1 // pred_check
      _
    $region55: #{class_mlp_forward.1} parent=1 // pred_check_branch
      %187 = sbr.rel target = $region57
    $region56: #{class_mlp_forward.1} parent=1 // pred_region
      %188 = sst [smem:[#allocation22]] [#allocation21]
      %189 = sst [smem:[#allocation23]] [#allocation20]
    $region57: #{class_mlp_forward.1} parent=1 // pred_fallthru
      _
    %191 = shalt.err (0)
    %s193 = sshll.u32 [#allocation4], 4
    %s194 = int_to_ptr.vmem [resolvable:$true] %s193
    %196 = dma.hbm_to_vmem [thread:$0]  %s9, 16384, %s194, %s185
    %v197 = vld [vmem:[%s0] sm:$0xff]
    %v198 = vld [vmem:[#allocation6] sm:$0xf]
    %v199 = vld [vmem:[#allocation14] sm:$0x1]
    %v201 = vlaneseq
    %v202 = vshrl.u32 %v201, 7
    %v203 = vsub.s32 0, %v202
    %v204 = vrot.slane %v199, %v203
    %vm206 = vcmask 31744
    %v208 = vsel %vm206, %v197, 0
    %vm210 = vcmask 1043456
    %v212 = vsel %vm210, %v198, 0
    %214 = vmatprep.subr.mxu0 0.0
    %215 = vmatpush1.msra.mxu0 %v212
    %216 = vmatprep.subr.mxu0 0.0
    %217 = vmatpush1.msra.mxu0 0.0
    %218 = vmatprep.subr.mxu0 0.0
    %219 = vmatpush1.msra.mxu0 0.0
    %220 = vmatprep.subr.mxu0 0.0
    %221 = vmatpush1.msra.mxu0 0.0
    %222 = vmatprep.subr.mxu0 0.0
    %223 = vmatpush1.msra.mxu0 0.0
    %224 = vmatprep.subr.mxu0 0.0
    %225 = vmatpush1.msra.mxu0 0.0
    %226 = vmatprep.subr.mxu0 0.0
    %227 = vmatpush1.msra.mxu0 0.0
    %228 = vmatprep.subr.mxu0 0.0
    %229 = vmatpush1.msra.mxu0 0.0
    %230 = vmatprep.subr.mxu0 0.0
    %231 = vmatpush1.msra.mxu0 0.0
    %232 = vmatprep.subr.mxu0 0.0
    %233 = vmatpush1.msra.mxu0 0.0
    %234 = vmatprep.subr.mxu0 0.0
    %235 = vmatpush1.msra.mxu0 0.0
    %236 = vmatprep.subr.mxu0 0.0
    %237 = vmatpush1.msra.mxu0 0.0
    %238 = vmatprep.subr.mxu0 0.0
    %239 = vmatpush1.msra.mxu0 0.0
    %240 = vmatprep.subr.mxu0 0.0
    %241 = vmatpush1.msra.mxu0 0.0
    %242 = vmatprep.subr.mxu0 0.0
    %243 = vmatpush1.msra.mxu0 0.0
    %244 = vmatprep.subr.mxu0 0.0
    %245 = vmatpush1.msra.mxu0 0.0
    %246 = vmatprep.subr.mxu0 0.0
    %247 = vmatpush1.msra.mxu0 0.0
    %248 = vmatprep.subr.mxu0 0.0
    %249 = vmatpush1.msra.mxu0 0.0
    %250 = vmatprep.subr.mxu0 0.0
    %251 = vmatpush1.msra.mxu0 0.0
    %252 = vmatprep.subr.mxu0 0.0
    %253 = vmatpush1.msra.mxu0 0.0
    %254 = vmatprep.subr.mxu0 0.0
    %255 = vmatpush1.msra.mxu0 0.0
    %256 = vmatprep.subr.mxu0 0.0
    %257 = vmatpush1.msra.mxu0 0.0
    %258 = vmatprep.subr.mxu0 0.0
    %259 = vmatpush1.msra.mxu0 0.0
    %260 = vmatprep.subr.mxu0 0.0
    %261 = vmatpush1.msra.mxu0 0.0
    %262 = vmatprep.subr.mxu0 0.0
    %263 = vmatpush1.msra.mxu0 0.0
    %264 = vmatprep.subr.mxu0 0.0
    %265 = vmatpush1.msra.mxu0 0.0
    %266 = vmatprep.subr.mxu0 0.0
    %267 = vmatpush1.msra.mxu0 0.0
    %268 = vmatprep.subr.mxu0 0.0
    %269 = vmatpush1.msra.mxu0 0.0
    %270 = vmatprep.subr.mxu0 0.0
    %271 = vmatpush1.msra.mxu0 0.0
    %272 = vmatprep.subr.mxu0 0.0
    %273 = vmatpush1.msra.mxu0 0.0
    %274 = vmatprep.subr.mxu0 0.0
    %275 = vmatpush1.msra.mxu0 0.0
    %276 = vmatprep.subr.mxu0 0.0
    %277 = vmatpush1.msra.mxu0 0.0
    %278 = vmatprep.mubr.f32.mxu0 0.0
    %279 = vmatmul.mubr.f32.gmra.mrb[0].mxu0 %v208
    %v280 = vpop.f32.mrb[0].mxu0
    %v281 = vadd.f32 %v204, %v280
    %v282 = vpop.f32.mrb[0].mxu0
    %283 = vdwg.mxu0
    %vm284 = vcmp.ge.f32.partialorder %v281, 0.0
    %v285 = vmul.f32 %v281, 0.01
    %v286 = vsel %vm284, %v281, %v285
    %vm287 = vcmask 523264
    %288 = vst.msk [vmem:[%s10] sm:$0xff] %vm287, %v286
    %v289 = vld [vmem:[#allocation8] sm:$0xf]
    %v290 = vld [vmem:[#allocation8 + $0x4] sm:$0xf]
    %v291 = vld [vmem:[#allocation8 + $0x8] sm:$0xf]
    %v292 = vld [vmem:[#allocation8 + $0xc] sm:$0xf]
    %v293 = vld [vmem:[#allocation8 + $0x10] sm:$0xf]
    %v294 = vld [vmem:[#allocation8 + $0x14] sm:$0xf]
    %v295 = vld [vmem:[#allocation8 + $0x18] sm:$0xf]
    %v296 = vld [vmem:[#allocation8 + $0x1c] sm:$0xf]
    %v297 = vpack.c.bf16 %v286, %v286
    %v298 = vld [vmem:[#allocation14 + $0x1] sm:$0x1]
    %v300 = vlaneseq
    %v301 = vshrl.u32 %v300, 7
    %v302 = vsub.s32 0, %v301
    %v303 = vrot.slane %v298, %v302
    %v313 = vunpack.c.l.b16 %v289
    %v314 = vunpack.c.l.b16 %v290
    %v315 = vunpack.c.l.b16 %v291
    %v316 = vunpack.c.l.b16 %v292
    %v317 = vunpack.c.l.b16 %v293
    %v318 = vunpack.c.l.b16 %v294
    %v319 = vunpack.c.l.b16 %v295
    %v320 = vunpack.c.l.b16 %v296
    %v321 = vpack.c.b16 %v314, %v313
    %v322 = vpack.c.b16 %v316, %v315
    %v323 = vpack.c.b16 %v318, %v317
    %v324 = vpack.c.b16 %v320, %v319
    %v330 = vsel %vm287, %v297, 0
    %332 = vmatprep.subr.bf16.mxu0 0
    %333 = vmatpush1.bf16.msra.mxu0 %v321
    %334 = vmatprep.subr.bf16.mxu0 0
    %335 = vmatpush1.bf16.msra.mxu0 %v322
    %336 = vmatprep.subr.bf16.mxu0 0
    %337 = vmatpush1.bf16.msra.mxu0 %v323
    %338 = vmatprep.subr.bf16.mxu0 0
    %339 = vmatpush1.bf16.msra.mxu0 %v324
    %340 = vmatprep.subr.bf16.mxu0 0
    %341 = vmatpush1.bf16.msra.mxu0 0
    %342 = vmatprep.subr.bf16.mxu0 0
    %343 = vmatpush1.bf16.msra.mxu0 0
    %344 = vmatprep.subr.bf16.mxu0 0
    %345 = vmatpush1.bf16.msra.mxu0 0
    %346 = vmatprep.subr.bf16.mxu0 0
    %347 = vmatpush1.bf16.msra.mxu0 0
    %348 = vmatprep.subr.bf16.mxu0 0
    %349 = vmatpush1.bf16.msra.mxu0 0
    %350 = vmatprep.subr.bf16.mxu0 0
    %351 = vmatpush1.bf16.msra.mxu0 0
    %352 = vmatprep.subr.bf16.mxu0 0
    %353 = vmatpush1.bf16.msra.mxu0 0
    %354 = vmatprep.subr.bf16.mxu0 0
    %355 = vmatpush1.bf16.msra.mxu0 0
    %356 = vmatprep.subr.bf16.mxu0 0
    %357 = vmatpush1.bf16.msra.mxu0 0
    %358 = vmatprep.subr.bf16.mxu0 0
    %359 = vmatpush1.bf16.msra.mxu0 0
    %360 = vmatprep.subr.bf16.mxu0 0
    %361 = vmatpush1.bf16.msra.mxu0 0
    %362 = vmatprep.subr.bf16.mxu0 0
    %363 = vmatpush1.bf16.msra.mxu0 0
    %364 = vmatprep.mubr.bf16.mxu0 0
    %365 = vmatmul.mubr.bf16.gmra.mrb[0].mxu0 %v330
    %v366 = vpop.f32.mrb[0].mxu0
    %v367 = vadd.f32 %v303, %v366
    %v368 = vpop.f32.mrb[0].mxu0
    %v369 = vpop.f32.mrb[0].mxu0
    %v370 = vpop.f32.mrb[0].mxu0
    %371 = vdwg.mxu0
    %vm372 = vcmp.ge.f32.partialorder %v367, 0.0
    %v373 = vmul.f32 %v367, 0.01
    %v374 = vsel %vm372, %v367, %v373
    %375 = vst [vmem:[%s11] sm:$0xff] %v374
    %v376 = vld [vmem:[#allocation10] sm:$0xff]
    %v377 = vld [vmem:[#allocation10 + $0x8] sm:$0xff]
    %v378 = vld [vmem:[#allocation10 + $0x10] sm:$0xff]
    %v379 = vld [vmem:[#allocation10 + $0x18] sm:$0xff]
    %v380 = vld [vmem:[#allocation10 + $0x20] sm:$0xff]
    %v381 = vld [vmem:[#allocation10 + $0x28] sm:$0xff]
    %v382 = vld [vmem:[#allocation10 + $0x30] sm:$0xff]
    %v383 = vld [vmem:[#allocation10 + $0x38] sm:$0xff]
    %v384 = vld [vmem:[#allocation10 + $0x40] sm:$0xff]
    %v385 = vld [vmem:[#allocation10 + $0x48] sm:$0xff]
    %v386 = vld [vmem:[#allocation10 + $0x50] sm:$0xff]
    %v387 = vld [vmem:[#allocation10 + $0x58] sm:$0xff]
    %v388 = vld [vmem:[#allocation10 + $0x60] sm:$0xff]
    %v389 = vld [vmem:[#allocation10 + $0x68] sm:$0xff]
    %v390 = vld [vmem:[#allocation10 + $0x70] sm:$0xff]
    %v391 = vld [vmem:[#allocation10 + $0x78] sm:$0xff]
    %v392 = vpack.c.bf16 %v374, %v374
    %v393 = vld [vmem:[#allocation14 + $0x2] sm:$0x3]
    %v395 = vlaneseq
    %v396 = vshrl.u32 %v395, 7
    %v397 = vsub.s32 0, %v396
    %v398 = vrot.slane %v393, %v397
    %v399 = vlaneseq
    %v400 = vshrl.u32 %v399, 7
    %v401 = vsub.s32 1, %v400
    %v402 = vrot.slane %v393, %v401
    %v421 = vunpack.c.l.b16 %v376
    %v422 = vunpack.c.h.b16 %v376
    %v423 = vunpack.c.l.b16 %v377
    %v424 = vunpack.c.h.b16 %v377
    %v425 = vunpack.c.l.b16 %v378
    %v426 = vunpack.c.h.b16 %v378
    %v427 = vunpack.c.l.b16 %v379
    %v428 = vunpack.c.h.b16 %v379
    %v429 = vunpack.c.l.b16 %v380
    %v430 = vunpack.c.h.b16 %v380
    %v431 = vunpack.c.l.b16 %v381
    %v432 = vunpack.c.h.b16 %v381
    %v433 = vunpack.c.l.b16 %v382
    %v434 = vunpack.c.h.b16 %v382
    %v435 = vunpack.c.l.b16 %v383
    %v436 = vunpack.c.h.b16 %v383
    %v437 = vunpack.c.l.b16 %v384
    %v438 = vunpack.c.h.b16 %v384
    %v439 = vunpack.c.l.b16 %v385
    %v440 = vunpack.c.h.b16 %v385
    %v441 = vunpack.c.l.b16 %v386
    %v442 = vunpack.c.h.b16 %v386
    %v443 = vunpack.c.l.b16 %v387
    %v444 = vunpack.c.h.b16 %v387
    %v445 = vunpack.c.l.b16 %v388
    %v446 = vunpack.c.h.b16 %v388
    %v447 = vunpack.c.l.b16 %v389
    %v448 = vunpack.c.h.b16 %v389
    %v449 = vunpack.c.l.b16 %v390
    %v450 = vunpack.c.h.b16 %v390
    %v451 = vunpack.c.l.b16 %v391
    %v452 = vunpack.c.h.b16 %v391
    %v453 = vpack.c.b16 %v423, %v421
    %v454 = vpack.c.b16 %v424, %v422
    %v455 = vpack.c.b16 %v427, %v425
    %v456 = vpack.c.b16 %v428, %v426
    %v457 = vpack.c.b16 %v431, %v429
    %v458 = vpack.c.b16 %v432, %v430
    %v459 = vpack.c.b16 %v435, %v433
    %v460 = vpack.c.b16 %v436, %v434
    %v461 = vpack.c.b16 %v439, %v437
    %v462 = vpack.c.b16 %v440, %v438
    %v463 = vpack.c.b16 %v443, %v441
    %v464 = vpack.c.b16 %v444, %v442
    %v465 = vpack.c.b16 %v447, %v445
    %v466 = vpack.c.b16 %v448, %v446
    %v467 = vpack.c.b16 %v451, %v449
    %v468 = vpack.c.b16 %v452, %v450
    %485 = vmatprep.subr.bf16.mxu0 %v454
    %486 = vmatpush1.bf16.msra.mxu0 %v453
    %487 = vmatprep.subr.bf16.mxu0 %v456
    %488 = vmatpush1.bf16.msra.mxu0 %v455
    %489 = vmatprep.subr.bf16.mxu0 %v458
    %490 = vmatpush1.bf16.msra.mxu0 %v457
    %491 = vmatprep.subr.bf16.mxu0 %v460
    %492 = vmatpush1.bf16.msra.mxu0 %v459
    %493 = vmatprep.subr.bf16.mxu0 %v462
    %494 = vmatpush1.bf16.msra.mxu0 %v461
    %495 = vmatprep.subr.bf16.mxu0 %v464
    %496 = vmatpush1.bf16.msra.mxu0 %v463
    %497 = vmatprep.subr.bf16.mxu0 %v466
    %498 = vmatpush1.bf16.msra.mxu0 %v465
    %499 = vmatprep.subr.bf16.mxu0 %v468
    %500 = vmatpush1.bf16.msra.mxu0 %v467
    %501 = vmatprep.subr.bf16.mxu0 0
    %502 = vmatpush1.bf16.msra.mxu0 0
    %503 = vmatprep.subr.bf16.mxu0 0
    %504 = vmatpush1.bf16.msra.mxu0 0
    %505 = vmatprep.subr.bf16.mxu0 0
    %506 = vmatpush1.bf16.msra.mxu0 0
    %507 = vmatprep.subr.bf16.mxu0 0
    %508 = vmatpush1.bf16.msra.mxu0 0
    %509 = vmatprep.subr.bf16.mxu0 0
    %510 = vmatpush1.bf16.msra.mxu0 0
    %511 = vmatprep.subr.bf16.mxu0 0
    %512 = vmatpush1.bf16.msra.mxu0 0
    %513 = vmatprep.subr.bf16.mxu0 0
    %514 = vmatpush1.bf16.msra.mxu0 0
    %515 = vmatprep.subr.bf16.mxu0 0
    %516 = vmatpush1.bf16.msra.mxu0 0
    %517 = vmatprep.mubr.bf16.mxu0 0
    %518 = vmatmul.mubr.bf16.gmra.mrb[0].mxu0 %v392
    %v519 = vpop.f32.mrb[0].mxu0
    %v520 = vadd.f32 %v398, %v519
    %v521 = vpop.f32.mrb[0].mxu0
    %v522 = vadd.f32 %v402, %v521
    %v523 = vpop.f32.mrb[0].mxu0
    %v524 = vpop.f32.mrb[0].mxu0
    %525 = vdwg.mxu0
    %vm526 = vcmp.ge.f32.partialorder %v520, 0.0
    %vm527 = vcmp.ge.f32.partialorder %v522, 0.0
    %v528 = vmul.f32 %v520, 0.01
    %v529 = vmul.f32 %v522, 0.01
    %v530 = vsel %vm526, %v520, %v528
    %v531 = vsel %vm527, %v522, %v529
    %532 = vst [vmem:[%s12] sm:$0xff] %v530
    %533 = vst [vmem:[%s12 + $0x8] sm:$0xff] %v531
    %v534 = vld [vmem:[#allocation11] sm:$0xff]
    %v535 = vld [vmem:[#allocation11 + $0x8] sm:$0xff]
    %v536 = vld [vmem:[#allocation11 + $0x10] sm:$0xff]
    %v537 = vld [vmem:[#allocation11 + $0x18] sm:$0xff]
    %v538 = vld [vmem:[#allocation11 + $0x20] sm:$0xff]
    %v539 = vld [vmem:[#allocation11 + $0x28] sm:$0xff]
    %v540 = vld [vmem:[#allocation11 + $0x30] sm:$0xff]
    %v541 = vld [vmem:[#allocation11 + $0x38] sm:$0xff]
    %v542 = vld [vmem:[#allocation11 + $0x40] sm:$0xff]
    %v543 = vld [vmem:[#allocation11 + $0x48] sm:$0xff]
    %v544 = vld [vmem:[#allocation11 + $0x50] sm:$0xff]
    %v545 = vld [vmem:[#allocation11 + $0x58] sm:$0xff]
    %v546 = vld [vmem:[#allocation11 + $0x60] sm:$0xff]
    %v547 = vld [vmem:[#allocation11 + $0x68] sm:$0xff]
    %v548 = vld [vmem:[#allocation11 + $0x70] sm:$0xff]
    %v549 = vld [vmem:[#allocation11 + $0x78] sm:$0xff]
    %v550 = vld [vmem:[#allocation11 + $0x80] sm:$0xff]
    %v551 = vld [vmem:[#allocation11 + $0x88] sm:$0xff]
    %v552 = vld [vmem:[#allocation11 + $0x90] sm:$0xff]
    %v553 = vld [vmem:[#allocation11 + $0x98] sm:$0xff]
    %v554 = vld [vmem:[#allocation11 + $0xa0] sm:$0xff]
    %v555 = vld [vmem:[#allocation11 + $0xa8] sm:$0xff]
    %v556 = vld [vmem:[#allocation11 + $0xb0] sm:$0xff]
    %v557 = vld [vmem:[#allocation11 + $0xb8] sm:$0xff]
    %v558 = vld [vmem:[#allocation11 + $0xc0] sm:$0xff]
    %v559 = vld [vmem:[#allocation11 + $0xc8] sm:$0xff]
    %v560 = vld [vmem:[#allocation11 + $0xd0] sm:$0xff]
    %v561 = vld [vmem:[#allocation11 + $0xd8] sm:$0xff]
    %v562 = vld [vmem:[#allocation11 + $0xe0] sm:$0xff]
    %v563 = vld [vmem:[#allocation11 + $0xe8] sm:$0xff]
    %v564 = vld [vmem:[#allocation11 + $0xf0] sm:$0xff]
    %v565 = vld [vmem:[#allocation11 + $0xf8] sm:$0xff]
    %v566 = vld [vmem:[#allocation11 + $0x100] sm:$0xff]
    %v567 = vld [vmem:[#allocation11 + $0x108] sm:$0xff]
    %v568 = vld [vmem:[#allocation11 + $0x110] sm:$0xff]
    %v569 = vld [vmem:[#allocation11 + $0x118] sm:$0xff]
    %v570 = vld [vmem:[#allocation11 + $0x120] sm:$0xff]
    %v571 = vld [vmem:[#allocation11 + $0x128] sm:$0xff]
    %v572 = vld [vmem:[#allocation11 + $0x130] sm:$0xff]
    %v573 = vld [vmem:[#allocation11 + $0x138] sm:$0xff]
    %v574 = vld [vmem:[#allocation11 + $0x140] sm:$0xff]
    %v575 = vld [vmem:[#allocation11 + $0x148] sm:$0xff]
    %v576 = vld [vmem:[#allocation11 + $0x150] sm:$0xff]
    %v577 = vld [vmem:[#allocation11 + $0x158] sm:$0xff]
    %v578 = vld [vmem:[#allocation11 + $0x160] sm:$0xff]
    %v579 = vld [vmem:[#allocation11 + $0x168] sm:$0xff]
    %v580 = vld [vmem:[#allocation11 + $0x170] sm:$0xff]
    %v581 = vld [vmem:[#allocation11 + $0x178] sm:$0xff]
    %v582 = vld [vmem:[#allocation11 + $0x180] sm:$0xff]
    %v583 = vld [vmem:[#allocation11 + $0x188] sm:$0xff]
    %v584 = vld [vmem:[#allocation11 + $0x190] sm:$0xff]
    %v585 = vld [vmem:[#allocation11 + $0x198] sm:$0xff]
    %v586 = vld [vmem:[#allocation11 + $0x1a0] sm:$0xff]
    %v587 = vld [vmem:[#allocation11 + $0x1a8] sm:$0xff]
    %v588 = vld [vmem:[#allocation11 + $0x1b0] sm:$0xff]
    %v589 = vld [vmem:[#allocation11 + $0x1b8] sm:$0xff]
    %v590 = vld [vmem:[#allocation11 + $0x1c0] sm:$0xff]
    %v591 = vld [vmem:[#allocation11 + $0x1c8] sm:$0xff]
    %v592 = vld [vmem:[#allocation11 + $0x1d0] sm:$0xff]
    %v593 = vld [vmem:[#allocation11 + $0x1d8] sm:$0xff]
    %v594 = vld [vmem:[#allocation11 + $0x1e0] sm:$0xff]
    %v595 = vld [vmem:[#allocation11 + $0x1e8] sm:$0xff]
    %v596 = vld [vmem:[#allocation11 + $0x1f0] sm:$0xff]
    %v597 = vld [vmem:[#allocation11 + $0x1f8] sm:$0xff]
    %v598 = vpack.c.bf16 %v530, %v530
    %v599 = vpack.c.bf16 %v531, %v531
    %v600 = vld [vmem:[#allocation14 + $0x4] sm:$0xf]
    %v602 = vlaneseq
    %v603 = vshrl.u32 %v602, 7
    %v604 = vsub.s32 0, %v603
    %v605 = vrot.slane %v600, %v604
    %v606 = vlaneseq
    %v607 = vshrl.u32 %v606, 7
    %v608 = vsub.s32 1, %v607
    %v609 = vrot.slane %v600, %v608
    %v610 = vlaneseq
    %v611 = vshrl.u32 %v610, 7
    %v612 = vsub.s32 2, %v611
    %v613 = vrot.slane %v600, %v612
    %v614 = vlaneseq
    %v615 = vshrl.u32 %v614, 7
    %v616 = vsub.s32 3, %v615
    %v617 = vrot.slane %v600, %v616
    %v686 = vunpack.c.l.b16 %v534
    %v687 = vunpack.c.h.b16 %v534
    %v688 = vunpack.c.l.b16 %v535
    %v689 = vunpack.c.h.b16 %v535
    %v690 = vunpack.c.l.b16 %v536
    %v691 = vunpack.c.h.b16 %v536
    %v692 = vunpack.c.l.b16 %v537
    %v693 = vunpack.c.h.b16 %v537
    %v694 = vunpack.c.l.b16 %v538
    %v695 = vunpack.c.h.b16 %v538
    %v696 = vunpack.c.l.b16 %v539
    %v697 = vunpack.c.h.b16 %v539
    %v698 = vunpack.c.l.b16 %v540
    %v699 = vunpack.c.h.b16 %v540
    %v700 = vunpack.c.l.b16 %v541
    %v701 = vunpack.c.h.b16 %v541
    %v702 = vunpack.c.l.b16 %v542
    %v703 = vunpack.c.h.b16 %v542
    %v704 = vunpack.c.l.b16 %v543
    %v705 = vunpack.c.h.b16 %v543
    %v706 = vunpack.c.l.b16 %v544
    %v707 = vunpack.c.h.b16 %v544
    %v708 = vunpack.c.l.b16 %v545
    %v709 = vunpack.c.h.b16 %v545
    %v710 = vunpack.c.l.b16 %v546
    %v711 = vunpack.c.h.b16 %v546
    %v712 = vunpack.c.l.b16 %v547
    %v713 = vunpack.c.h.b16 %v547
    %v714 = vunpack.c.l.b16 %v548
    %v715 = vunpack.c.h.b16 %v548
    %v716 = vunpack.c.l.b16 %v549
    %v717 = vunpack.c.h.b16 %v549
    %v718 = vunpack.c.l.b16 %v550
    %v719 = vunpack.c.h.b16 %v550
    %v720 = vunpack.c.l.b16 %v551
    %v721 = vunpack.c.h.b16 %v551
    %v722 = vunpack.c.l.b16 %v552
    %v723 = vunpack.c.h.b16 %v552
    %v724 = vunpack.c.l.b16 %v553
    %v725 = vunpack.c.h.b16 %v553
    %v726 = vunpack.c.l.b16 %v554
    %v727 = vunpack.c.h.b16 %v554
    %v728 = vunpack.c.l.b16 %v555
    %v729 = vunpack.c.h.b16 %v555
    %v730 = vunpack.c.l.b16 %v556
    %v731 = vunpack.c.h.b16 %v556
    %v732 = vunpack.c.l.b16 %v557
    %v733 = vunpack.c.h.b16 %v557
    %v734 = vunpack.c.l.b16 %v558
    %v735 = vunpack.c.h.b16 %v558
    %v736 = vunpack.c.l.b16 %v559
    %v737 = vunpack.c.h.b16 %v559
    %v738 = vunpack.c.l.b16 %v560
    %v739 = vunpack.c.h.b16 %v560
    %v740 = vunpack.c.l.b16 %v561
    %v741 = vunpack.c.h.b16 %v561
    %v742 = vunpack.c.l.b16 %v562
    %v743 = vunpack.c.h.b16 %v562
    %v744 = vunpack.c.l.b16 %v563
    %v745 = vunpack.c.h.b16 %v563
    %v746 = vunpack.c.l.b16 %v564
    %v747 = vunpack.c.h.b16 %v564
    %v748 = vunpack.c.l.b16 %v565
    %v749 = vunpack.c.h.b16 %v565
    %v750 = vunpack.c.l.b16 %v566
    %v751 = vunpack.c.h.b16 %v566
    %v752 = vunpack.c.l.b16 %v567
    %v753 = vunpack.c.h.b16 %v567
    %v754 = vunpack.c.l.b16 %v568
    %v755 = vunpack.c.h.b16 %v568
    %v756 = vunpack.c.l.b16 %v569
    %v757 = vunpack.c.h.b16 %v569
    %v758 = vunpack.c.l.b16 %v570
    %v759 = vunpack.c.h.b16 %v570
    %v760 = vunpack.c.l.b16 %v571
    %v761 = vunpack.c.h.b16 %v571
    %v762 = vunpack.c.l.b16 %v572
    %v763 = vunpack.c.h.b16 %v572
    %v764 = vunpack.c.l.b16 %v573
    %v765 = vunpack.c.h.b16 %v573
    %v766 = vunpack.c.l.b16 %v574
    %v767 = vunpack.c.h.b16 %v574
    %v768 = vunpack.c.l.b16 %v575
    %v769 = vunpack.c.h.b16 %v575
    %v770 = vunpack.c.l.b16 %v576
    %v771 = vunpack.c.h.b16 %v576
    %v772 = vunpack.c.l.b16 %v577
    %v773 = vunpack.c.h.b16 %v577
    %v774 = vunpack.c.l.b16 %v578
    %v775 = vunpack.c.h.b16 %v578
    %v776 = vunpack.c.l.b16 %v579
    %v777 = vunpack.c.h.b16 %v579
    %v778 = vunpack.c.l.b16 %v580
    %v779 = vunpack.c.h.b16 %v580
    %v780 = vunpack.c.l.b16 %v581
    %v781 = vunpack.c.h.b16 %v581
    %v782 = vunpack.c.l.b16 %v582
    %v783 = vunpack.c.h.b16 %v582
    %v784 = vunpack.c.l.b16 %v583
    %v785 = vunpack.c.h.b16 %v583
    %v786 = vunpack.c.l.b16 %v584
    %v787 = vunpack.c.h.b16 %v584
    %v788 = vunpack.c.l.b16 %v585
    %v789 = vunpack.c.h.b16 %v585
    %v790 = vunpack.c.l.b16 %v586
    %v791 = vunpack.c.h.b16 %v586
    %v792 = vunpack.c.l.b16 %v587
    %v793 = vunpack.c.h.b16 %v587
    %v794 = vunpack.c.l.b16 %v588
    %v795 = vunpack.c.h.b16 %v588
    %v796 = vunpack.c.l.b16 %v589
    %v797 = vunpack.c.h.b16 %v589
    %v798 = vunpack.c.l.b16 %v590
    %v799 = vunpack.c.h.b16 %v590
    %v800 = vunpack.c.l.b16 %v591
    %v801 = vunpack.c.h.b16 %v591
    %v802 = vunpack.c.l.b16 %v592
    %v803 = vunpack.c.h.b16 %v592
    %v804 = vunpack.c.l.b16 %v593
    %v805 = vunpack.c.h.b16 %v593
    %v806 = vunpack.c.l.b16 %v594
    %v807 = vunpack.c.h.b16 %v594
    %v808 = vunpack.c.l.b16 %v595
    %v809 = vunpack.c.h.b16 %v595
    %v810 = vunpack.c.l.b16 %v596
    %v811 = vunpack.c.h.b16 %v596
    %v812 = vunpack.c.l.b16 %v597
    %v813 = vunpack.c.h.b16 %v597
    %v814 = vpack.c.b16 %v690, %v686
    %v815 = vpack.c.b16 %v691, %v687
    %v816 = vpack.c.b16 %v692, %v688
    %v817 = vpack.c.b16 %v693, %v689
    %v818 = vpack.c.b16 %v698, %v694
    %v819 = vpack.c.b16 %v699, %v695
    %v820 = vpack.c.b16 %v700, %v696
    %v821 = vpack.c.b16 %v701, %v697
    %v822 = vpack.c.b16 %v706, %v702
    %v823 = vpack.c.b16 %v707, %v703
    %v824 = vpack.c.b16 %v708, %v704
    %v825 = vpack.c.b16 %v709, %v705
    %v826 = vpack.c.b16 %v714, %v710
    %v827 = vpack.c.b16 %v715, %v711
    %v828 = vpack.c.b16 %v716, %v712
    %v829 = vpack.c.b16 %v717, %v713
    %v830 = vpack.c.b16 %v722, %v718
    %v831 = vpack.c.b16 %v723, %v719
    %v832 = vpack.c.b16 %v724, %v720
    %v833 = vpack.c.b16 %v725, %v721
    %v834 = vpack.c.b16 %v730, %v726
    %v835 = vpack.c.b16 %v731, %v727
    %v836 = vpack.c.b16 %v732, %v728
    %v837 = vpack.c.b16 %v733, %v729
    %v838 = vpack.c.b16 %v738, %v734
    %v839 = vpack.c.b16 %v739, %v735
    %v840 = vpack.c.b16 %v740, %v736
    %v841 = vpack.c.b16 %v741, %v737
    %v842 = vpack.c.b16 %v746, %v742
    %v843 = vpack.c.b16 %v747, %v743
    %v844 = vpack.c.b16 %v748, %v744
    %v845 = vpack.c.b16 %v749, %v745
    %v846 = vpack.c.b16 %v754, %v750
    %v847 = vpack.c.b16 %v755, %v751
    %v848 = vpack.c.b16 %v756, %v752
    %v849 = vpack.c.b16 %v757, %v753
    %v850 = vpack.c.b16 %v762, %v758
    %v851 = vpack.c.b16 %v763, %v759
    %v852 = vpack.c.b16 %v764, %v760
    %v853 = vpack.c.b16 %v765, %v761
    %v854 = vpack.c.b16 %v770, %v766
    %v855 = vpack.c.b16 %v771, %v767
    %v856 = vpack.c.b16 %v772, %v768
    %v857 = vpack.c.b16 %v773, %v769
    %v858 = vpack.c.b16 %v778, %v774
    %v859 = vpack.c.b16 %v779, %v775
    %v860 = vpack.c.b16 %v780, %v776
    %v861 = vpack.c.b16 %v781, %v777
    %v862 = vpack.c.b16 %v786, %v782
    %v863 = vpack.c.b16 %v787, %v783
    %v864 = vpack.c.b16 %v788, %v784
    %v865 = vpack.c.b16 %v789, %v785
    %v866 = vpack.c.b16 %v794, %v790
    %v867 = vpack.c.b16 %v795, %v791
    %v868 = vpack.c.b16 %v796, %v792
    %v869 = vpack.c.b16 %v797, %v793
    %v870 = vpack.c.b16 %v802, %v798
    %v871 = vpack.c.b16 %v803, %v799
    %v872 = vpack.c.b16 %v804, %v800
    %v873 = vpack.c.b16 %v805, %v801
    %v874 = vpack.c.b16 %v810, %v806
    %v875 = vpack.c.b16 %v811, %v807
    %v876 = vpack.c.b16 %v812, %v808
    %v877 = vpack.c.b16 %v813, %v809
    %942 = vmatprep.subr.bf16.mxu0 %v815
    %943 = vmatpush1.bf16.msra.mxu0 %v814
    %944 = vmatprep.subr.bf16.mxu0 %v819
    %945 = vmatpush1.bf16.msra.mxu0 %v818
    %946 = vmatprep.subr.bf16.mxu0 %v823
    %947 = vmatpush1.bf16.msra.mxu0 %v822
    %948 = vmatprep.subr.bf16.mxu0 %v827
    %949 = vmatpush1.bf16.msra.mxu0 %v826
    %950 = vmatprep.subr.bf16.mxu0 %v831
    %951 = vmatpush1.bf16.msra.mxu0 %v830
    %952 = vmatprep.subr.bf16.mxu0 %v835
    %953 = vmatpush1.bf16.msra.mxu0 %v834
    %954 = vmatprep.subr.bf16.mxu0 %v839
    %955 = vmatpush1.bf16.msra.mxu0 %v838
    %956 = vmatprep.subr.bf16.mxu0 %v843
    %957 = vmatpush1.bf16.msra.mxu0 %v842
    %958 = vmatprep.subr.bf16.mxu0 %v847
    %959 = vmatpush1.bf16.msra.mxu0 %v846
    %960 = vmatprep.subr.bf16.mxu0 %v851
    %961 = vmatpush1.bf16.msra.mxu0 %v850
    %962 = vmatprep.subr.bf16.mxu0 %v855
    %963 = vmatpush1.bf16.msra.mxu0 %v854
    %964 = vmatprep.subr.bf16.mxu0 %v859
    %965 = vmatpush1.bf16.msra.mxu0 %v858
    %966 = vmatprep.subr.bf16.mxu0 %v863
    %967 = vmatpush1.bf16.msra.mxu0 %v862
    %968 = vmatprep.subr.bf16.mxu0 %v867
    %969 = vmatpush1.bf16.msra.mxu0 %v866
    %970 = vmatprep.subr.bf16.mxu0 %v871
    %971 = vmatpush1.bf16.msra.mxu0 %v870
    %972 = vmatprep.subr.bf16.mxu0 %v875
    %973 = vmatpush1.bf16.msra.mxu0 %v874
    %974 = vmatprep.mubr.bf16.mxu0 %v599
    %975 = vmatmul.mubr.bf16.gmra.mrb[0].mxu0 %v598
    %v976 = vpop.f32.mrb[0].mxu0
    %v977 = vadd.f32 %v605, %v976
    %v978 = vpop.f32.mrb[0].mxu0
    %v979 = vadd.f32 %v609, %v978
    %v980 = vpop.f32.mrb[0].mxu0
    %v981 = vpop.f32.mrb[0].mxu0
    %982 = vdwg.mxu0
    %983 = vmatprep.subr.bf16.mxu0 %v817
    %984 = vmatpush1.bf16.msra.mxu0 %v816
    %985 = vmatprep.subr.bf16.mxu0 %v821
    %986 = vmatpush1.bf16.msra.mxu0 %v820
    %987 = vmatprep.subr.bf16.mxu0 %v825
    %988 = vmatpush1.bf16.msra.mxu0 %v824
    %989 = vmatprep.subr.bf16.mxu0 %v829
    %990 = vmatpush1.bf16.msra.mxu0 %v828
    %991 = vmatprep.subr.bf16.mxu0 %v833
    %992 = vmatpush1.bf16.msra.mxu0 %v832
    %993 = vmatprep.subr.bf16.mxu0 %v837
    %994 = vmatpush1.bf16.msra.mxu0 %v836
    %995 = vmatprep.subr.bf16.mxu0 %v841
    %996 = vmatpush1.bf16.msra.mxu0 %v840
    %997 = vmatprep.subr.bf16.mxu0 %v845
    %998 = vmatpush1.bf16.msra.mxu0 %v844
    %999 = vmatprep.subr.bf16.mxu0 %v849
    %1000 = vmatpush1.bf16.msra.mxu0 %v848
    %1001 = vmatprep.subr.bf16.mxu0 %v853
    %1002 = vmatpush1.bf16.msra.mxu0 %v852
    %1003 = vmatprep.subr.bf16.mxu0 %v857
    %1004 = vmatpush1.bf16.msra.mxu0 %v856
    %1005 = vmatprep.subr.bf16.mxu0 %v861
    %1006 = vmatpush1.bf16.msra.mxu0 %v860
    %1007 = vmatprep.subr.bf16.mxu0 %v865
    %1008 = vmatpush1.bf16.msra.mxu0 %v864
    %1009 = vmatprep.subr.bf16.mxu0 %v869
    %1010 = vmatpush1.bf16.msra.mxu0 %v868
    %1011 = vmatprep.subr.bf16.mxu0 %v873
    %1012 = vmatpush1.bf16.msra.mxu0 %v872
    %1013 = vmatprep.subr.bf16.mxu0 %v877
    %1014 = vmatpush1.bf16.msra.mxu0 %v876
    %1015 = vmatprep.mubr.bf16.mxu0 %v599
    %1016 = vmatmul.mubr.bf16.gmra.mrb[0].mxu0 %v598
    %v1017 = vpop.f32.mrb[0].mxu0
    %v1018 = vadd.f32 %v613, %v1017
    %v1019 = vpop.f32.mrb[0].mxu0
    %v1020 = vadd.f32 %v617, %v1019
    %v1021 = vpop.f32.mrb[0].mxu0
    %v1022 = vpop.f32.mrb[0].mxu0
    %1023 = vdwg.mxu0
    %vm1024 = vcmp.ge.f32.partialorder %v977, 0.0
    %vm1025 = vcmp.ge.f32.partialorder %v979, 0.0
    %vm1026 = vcmp.ge.f32.partialorder %v1018, 0.0
    %vm1027 = vcmp.ge.f32.partialorder %v1020, 0.0
    %v1028 = vmul.f32 %v977, 0.01
    %v1029 = vmul.f32 %v979, 0.01
    %v1030 = vmul.f32 %v1018, 0.01
    %v1031 = vmul.f32 %v1020, 0.01
    %v1032 = vsel %vm1024, %v977, %v1028
    %v1033 = vsel %vm1025, %v979, %v1029
    %v1034 = vsel %vm1026, %v1018, %v1030
    %v1035 = vsel %vm1027, %v1020, %v1031
    %1036 = vst [vmem:[%s13] sm:$0xff] %v1032
    %1037 = vst [vmem:[%s13 + $0x8] sm:$0xff] %v1033
    %1038 = vst [vmem:[%s13 + $0x10] sm:$0xff] %v1034
    %1039 = vst [vmem:[%s13 + $0x18] sm:$0xff] %v1035
    %s1040 = smul.u32 4, 64
    %s1041 = smul.u32 %s1040, 8
    %s1042 = sshll.u32 %s1041, 4
    %1043 = dma.done [#allocation5], %s1042
    %v1044 = vld [vmem:[#allocation2] sm:$0xff]
    %v1045 = vld [vmem:[#allocation2 + $0x8] sm:$0xff]
    %v1046 = vld [vmem:[#allocation2 + $0x10] sm:$0xff]
    %v1047 = vld [vmem:[#allocation2 + $0x18] sm:$0xff]
    %v1048 = vld [vmem:[#allocation2 + $0x20] sm:$0xff]
    %v1049 = vld [vmem:[#allocation2 + $0x28] sm:$0xff]
    %v1050 = vld [vmem:[#allocation2 + $0x30] sm:$0xff]
    %v1051 = vld [vmem:[#allocation2 + $0x38] sm:$0xff]
    %v1052 = vld [vmem:[#allocation2 + $0x40] sm:$0xff]
    %v1053 = vld [vmem:[#allocation2 + $0x48] sm:$0xff]
    %v1054 = vld [vmem:[#allocation2 + $0x50] sm:$0xff]
    %v1055 = vld [vmem:[#allocation2 + $0x58] sm:$0xff]
    %v1056 = vld [vmem:[#allocation2 + $0x60] sm:$0xff]
    %v1057 = vld [vmem:[#allocation2 + $0x68] sm:$0xff]
    %v1058 = vld [vmem:[#allocation2 + $0x70] sm:$0xff]
    %v1059 = vld [vmem:[#allocation2 + $0x78] sm:$0xff]
    %v1060 = vld [vmem:[#allocation2 + $0x80] sm:$0xff]
    %v1061 = vld [vmem:[#allocation2 + $0x88] sm:$0xff]
    %v1062 = vld [vmem:[#allocation2 + $0x90] sm:$0xff]
    %v1063 = vld [vmem:[#allocation2 + $0x98] sm:$0xff]
    %v1064 = vld [vmem:[#allocation2 + $0xa0] sm:$0xff]
    %v1065 = vld [vmem:[#allocation2 + $0xa8] sm:$0xff]
    %v1066 = vld [vmem:[#allocation2 + $0xb0] sm:$0xff]
    %v1067 = vld [vmem:[#allocation2 + $0xb8] sm:$0xff]
    %v1068 = vld [vmem:[#allocation2 + $0xc0] sm:$0xff]
    %v1069 = vld [vmem:[#allocation2 + $0xc8] sm:$0xff]
    %v1070 = vld [vmem:[#allocation2 + $0xd0] sm:$0xff]
    %v1071 = vld [vmem:[#allocation2 + $0xd8] sm:$0xff]
    %v1072 = vld [vmem:[#allocation2 + $0xe0] sm:$0xff]
    %v1073 = vld [vmem:[#allocation2 + $0xe8] sm:$0xff]
    %v1074 = vld [vmem:[#allocation2 + $0xf0] sm:$0xff]
    %v1075 = vld [vmem:[#allocation2 + $0xf8] sm:$0xff]
    %v1076 = vld [vmem:[#allocation2 + $0x100] sm:$0xff]
    %v1077 = vld [vmem:[#allocation2 + $0x108] sm:$0xff]
    %v1078 = vld [vmem:[#allocation2 + $0x110] sm:$0xff]
    %v1079 = vld [vmem:[#allocation2 + $0x118] sm:$0xff]
    %v1080 = vld [vmem:[#allocation2 + $0x120] sm:$0xff]
    %v1081 = vld [vmem:[#allocation2 + $0x128] sm:$0xff]
    %v1082 = vld [vmem:[#allocation2 + $0x130] sm:$0xff]
    %v1083 = vld [vmem:[#allocation2 + $0x138] sm:$0xff]
    %v1084 = vld [vmem:[#allocation2 + $0x140] sm:$0xff]
    %v1085 = vld [vmem:[#allocation2 + $0x148] sm:$0xff]
    %v1086 = vld [vmem:[#allocation2 + $0x150] sm:$0xff]
    %v1087 = vld [vmem:[#allocation2 + $0x158] sm:$0xff]
    %v1088 = vld [vmem:[#allocation2 + $0x160] sm:$0xff]
    %v1089 = vld [vmem:[#allocation2 + $0x168] sm:$0xff]
    %v1090 = vld [vmem:[#allocation2 + $0x170] sm:$0xff]
    %v1091 = vld [vmem:[#allocation2 + $0x178] sm:$0xff]
    %v1092 = vld [vmem:[#allocation2 + $0x180] sm:$0xff]
    %v1093 = vld [vmem:[#allocation2 + $0x188] sm:$0xff]
    %v1094 = vld [vmem:[#allocation2 + $0x190] sm:$0xff]
    %v1095 = vld [vmem:[#allocation2 + $0x198] sm:$0xff]
    %v1096 = vld [vmem:[#allocation2 + $0x1a0] sm:$0xff]
    %v1097 = vld [vmem:[#allocation2 + $0x1a8] sm:$0xff]
    %v1098 = vld [vmem:[#allocation2 + $0x1b0] sm:$0xff]
    %v1099 = vld [vmem:[#allocation2 + $0x1b8] sm:$0xff]
    %v1100 = vld [vmem:[#allocation2 + $0x1c0] sm:$0xff]
    %v1101 = vld [vmem:[#allocation2 + $0x1c8] sm:$0xff]
    %v1102 = vld [vmem:[#allocation2 + $0x1d0] sm:$0xff]
    %v1103 = vld [vmem:[#allocation2 + $0x1d8] sm:$0xff]
    %v1104 = vld [vmem:[#allocation2 + $0x1e0] sm:$0xff]
    %v1105 = vld [vmem:[#allocation2 + $0x1e8] sm:$0xff]
    %v1106 = vld [vmem:[#allocation2 + $0x1f0] sm:$0xff]
    %v1107 = vld [vmem:[#allocation2 + $0x1f8] sm:$0xff]
    %v1108 = vld [vmem:[#allocation2 + $0x200] sm:$0xff]
    %v1109 = vld [vmem:[#allocation2 + $0x208] sm:$0xff]
    %v1110 = vld [vmem:[#allocation2 + $0x210] sm:$0xff]
    %v1111 = vld [vmem:[#allocation2 + $0x218] sm:$0xff]
    %v1112 = vld [vmem:[#allocation2 + $0x220] sm:$0xff]
    %v1113 = vld [vmem:[#allocation2 + $0x228] sm:$0xff]
    %v1114 = vld [vmem:[#allocation2 + $0x230] sm:$0xff]
    %v1115 = vld [vmem:[#allocation2 + $0x238] sm:$0xff]
    %v1116 = vld [vmem:[#allocation2 + $0x240] sm:$0xff]
    %v1117 = vld [vmem:[#allocation2 + $0x248] sm:$0xff]
    %v1118 = vld [vmem:[#allocation2 + $0x250] sm:$0xff]
    %v1119 = vld [vmem:[#allocation2 + $0x258] sm:$0xff]
    %v1120 = vld [vmem:[#allocation2 + $0x260] sm:$0xff]
    %v1121 = vld [vmem:[#allocation2 + $0x268] sm:$0xff]
    %v1122 = vld [vmem:[#allocation2 + $0x270] sm:$0xff]
    %v1123 = vld [vmem:[#allocation2 + $0x278] sm:$0xff]
    %v1124 = vld [vmem:[#allocation2 + $0x280] sm:$0xff]
    %v1125 = vld [vmem:[#allocation2 + $0x288] sm:$0xff]
    %v1126 = vld [vmem:[#allocation2 + $0x290] sm:$0xff]
    %v1127 = vld [vmem:[#allocation2 + $0x298] sm:$0xff]
    %v1128 = vld [vmem:[#allocation2 + $0x2a0] sm:$0xff]
    %v1129 = vld [vmem:[#allocation2 + $0x2a8] sm:$0xff]
    %v1130 = vld [vmem:[#allocation2 + $0x2b0] sm:$0xff]
    %v1131 = vld [vmem:[#allocation2 + $0x2b8] sm:$0xff]
    %v1132 = vld [vmem:[#allocation2 + $0x2c0] sm:$0xff]
    %v1133 = vld [vmem:[#allocation2 + $0x2c8] sm:$0xff]
    %v1134 = vld [vmem:[#allocation2 + $0x2d0] sm:$0xff]
    %v1135 = vld [vmem:[#allocation2 + $0x2d8] sm:$0xff]
    %v1136 = vld [vmem:[#allocation2 + $0x2e0] sm:$0xff]
    %v1137 = vld [vmem:[#allocation2 + $0x2e8] sm:$0xff]
    %v1138 = vld [vmem:[#allocation2 + $0x2f0] sm:$0xff]
    %v1139 = vld [vmem:[#allocation2 + $0x2f8] sm:$0xff]
    %v1140 = vld [vmem:[#allocation2 + $0x300] sm:$0xff]
    %v1141 = vld [vmem:[#allocation2 + $0x308] sm:$0xff]
    %v1142 = vld [vmem:[#allocation2 + $0x310] sm:$0xff]
    %v1143 = vld [vmem:[#allocation2 + $0x318] sm:$0xff]
    %v1144 = vld [vmem:[#allocation2 + $0x320] sm:$0xff]
    %v1145 = vld [vmem:[#allocation2 + $0x328] sm:$0xff]
    %v1146 = vld [vmem:[#allocation2 + $0x330] sm:$0xff]
    %v1147 = vld [vmem:[#allocation2 + $0x338] sm:$0xff]
    %v1148 = vld [vmem:[#allocation2 + $0x340] sm:$0xff]
    %v1149 = vld [vmem:[#allocation2 + $0x348] sm:$0xff]
    %v1150 = vld [vmem:[#allocation2 + $0x350] sm:$0xff]
    %v1151 = vld [vmem:[#allocation2 + $0x358] sm:$0xff]
    %v1152 = vld [vmem:[#allocation2 + $0x360] sm:$0xff]
    %v1153 = vld [vmem:[#allocation2 + $0x368] sm:$0xff]
    %v1154 = vld [vmem:[#allocation2 + $0x370] sm:$0xff]
    %v1155 = vld [vmem:[#allocation2 + $0x378] sm:$0xff]
    %v1156 = vld [vmem:[#allocation2 + $0x380] sm:$0xff]
    %v1157 = vld [vmem:[#allocation2 + $0x388] sm:$0xff]
    %v1158 = vld [vmem:[#allocation2 + $0x390] sm:$0xff]
    %v1159 = vld [vmem:[#allocation2 + $0x398] sm:$0xff]
    %v1160 = vld [vmem:[#allocation2 + $0x3a0] sm:$0xff]
    %v1161 = vld [vmem:[#allocation2 + $0x3a8] sm:$0xff]
    %v1162 = vld [vmem:[#allocation2 + $0x3b0] sm:$0xff]
    %v1163 = vld [vmem:[#allocation2 + $0x3b8] sm:$0xff]
    %v1164 = vld [vmem:[#allocation2 + $0x3c0] sm:$0xff]
    %v1165 = vld [vmem:[#allocation2 + $0x3c8] sm:$0xff]
    %v1166 = vld [vmem:[#allocation2 + $0x3d0] sm:$0xff]
    %v1167 = vld [vmem:[#allocation2 + $0x3d8] sm:$0xff]
    %v1168 = vld [vmem:[#allocation2 + $0x3e0] sm:$0xff]
    %v1169 = vld [vmem:[#allocation2 + $0x3e8] sm:$0xff]
    %v1170 = vld [vmem:[#allocation2 + $0x3f0] sm:$0xff]
    %v1171 = vld [vmem:[#allocation2 + $0x3f8] sm:$0xff]
    %v1172 = vld [vmem:[#allocation2 + $0x400] sm:$0xff]
    %v1173 = vld [vmem:[#allocation2 + $0x408] sm:$0xff]
    %v1174 = vld [vmem:[#allocation2 + $0x410] sm:$0xff]
    %v1175 = vld [vmem:[#allocation2 + $0x418] sm:$0xff]
    %v1176 = vld [vmem:[#allocation2 + $0x420] sm:$0xff]
    %v1177 = vld [vmem:[#allocation2 + $0x428] sm:$0xff]
    %v1178 = vld [vmem:[#allocation2 + $0x430] sm:$0xff]
    %v1179 = vld [vmem:[#allocation2 + $0x438] sm:$0xff]
    %v1180 = vld [vmem:[#allocation2 + $0x440] sm:$0xff]
    %v1181 = vld [vmem:[#allocation2 + $0x448] sm:$0xff]
    %v1182 = vld [vmem:[#allocation2 + $0x450] sm:$0xff]
    %v1183 = vld [vmem:[#allocation2 + $0x458] sm:$0xff]
    %v1184 = vld [vmem:[#allocation2 + $0x460] sm:$0xff]
    %v1185 = vld [vmem:[#allocation2 + $0x468] sm:$0xff]
    %v1186 = vld [vmem:[#allocation2 + $0x470] sm:$0xff]
    %v1187 = vld [vmem:[#allocation2 + $0x478] sm:$0xff]
    %v1188 = vld [vmem:[#allocation2 + $0x480] sm:$0xff]
    %v1189 = vld [vmem:[#allocation2 + $0x488] sm:$0xff]
    %v1190 = vld [vmem:[#allocation2 + $0x490] sm:$0xff]
    %v1191 = vld [vmem:[#allocation2 + $0x498] sm:$0xff]
    %v1192 = vld [vmem:[#allocation2 + $0x4a0] sm:$0xff]
    %v1193 = vld [vmem:[#allocation2 + $0x4a8] sm:$0xff]
    %v1194 = vld [vmem:[#allocation2 + $0x4b0] sm:$0xff]
    %v1195 = vld [vmem:[#allocation2 + $0x4b8] sm:$0xff]
    %v1196 = vld [vmem:[#allocation2 + $0x4c0] sm:$0xff]
    %v1197 = vld [vmem:[#allocation2 + $0x4c8] sm:$0xff]
    %v1198 = vld [vmem:[#allocation2 + $0x4d0] sm:$0xff]
    %v1199 = vld [vmem:[#allocation2 + $0x4d8] sm:$0xff]
    %v1200 = vld [vmem:[#allocation2 + $0x4e0] sm:$0xff]
    %v1201 = vld [vmem:[#allocation2 + $0x4e8] sm:$0xff]
    %v1202 = vld [vmem:[#allocation2 + $0x4f0] sm:$0xff]
    %v1203 = vld [vmem:[#allocation2 + $0x4f8] sm:$0xff]
    %v1204 = vld [vmem:[#allocation2 + $0x500] sm:$0xff]
    %v1205 = vld [vmem:[#allocation2 + $0x508] sm:$0xff]
    %v1206 = vld [vmem:[#allocation2 + $0x510] sm:$0xff]
    %v1207 = vld [vmem:[#allocation2 + $0x518] sm:$0xff]
    %v1208 = vld [vmem:[#allocation2 + $0x520] sm:$0xff]
    %v1209 = vld [vmem:[#allocation2 + $0x528] sm:$0xff]
    %v1210 = vld [vmem:[#allocation2 + $0x530] sm:$0xff]
    %v1211 = vld [vmem:[#allocation2 + $0x538] sm:$0xff]
    %v1212 = vld [vmem:[#allocation2 + $0x540] sm:$0xff]
    %v1213 = vld [vmem:[#allocation2 + $0x548] sm:$0xff]
    %v1214 = vld [vmem:[#allocation2 + $0x550] sm:$0xff]
    %v1215 = vld [vmem:[#allocation2 + $0x558] sm:$0xff]
    %v1216 = vld [vmem:[#allocation2 + $0x560] sm:$0xff]
    %v1217 = vld [vmem:[#allocation2 + $0x568] sm:$0xff]
    %v1218 = vld [vmem:[#allocation2 + $0x570] sm:$0xff]
    %v1219 = vld [vmem:[#allocation2 + $0x578] sm:$0xff]
    %v1220 = vld [vmem:[#allocation2 + $0x580] sm:$0xff]
    %v1221 = vld [vmem:[#allocation2 + $0x588] sm:$0xff]
    %v1222 = vld [vmem:[#allocation2 + $0x590] sm:$0xff]
    %v1223 = vld [vmem:[#allocation2 + $0x598] sm:$0xff]
    %v1224 = vld [vmem:[#allocation2 + $0x5a0] sm:$0xff]
    %v1225 = vld [vmem:[#allocation2 + $0x5a8] sm:$0xff]
    %v1226 = vld [vmem:[#allocation2 + $0x5b0] sm:$0xff]
    %v1227 = vld [vmem:[#allocation2 + $0x5b8] sm:$0xff]
    %v1228 = vld [vmem:[#allocation2 + $0x5c0] sm:$0xff]
    %v1229 = vld [vmem:[#allocation2 + $0x5c8] sm:$0xff]
    %v1230 = vld [vmem:[#allocation2 + $0x5d0] sm:$0xff]
    %v1231 = vld [vmem:[#allocation2 + $0x5d8] sm:$0xff]
    %v1232 = vld [vmem:[#allocation2 + $0x5e0] sm:$0xff]
    %v1233 = vld [vmem:[#allocation2 + $0x5e8] sm:$0xff]
    %v1234 = vld [vmem:[#allocation2 + $0x5f0] sm:$0xff]
    %v1235 = vld [vmem:[#allocation2 + $0x5f8] sm:$0xff]
    %v1236 = vld [vmem:[#allocation2 + $0x600] sm:$0xff]
    %v1237 = vld [vmem:[#allocation2 + $0x608] sm:$0xff]
    %v1238 = vld [vmem:[#allocation2 + $0x610] sm:$0xff]
    %v1239 = vld [vmem:[#allocation2 + $0x618] sm:$0xff]
    %v1240 = vld [vmem:[#allocation2 + $0x620] sm:$0xff]
    %v1241 = vld [vmem:[#allocation2 + $0x628] sm:$0xff]
    %v1242 = vld [vmem:[#allocation2 + $0x630] sm:$0xff]
    %v1243 = vld [vmem:[#allocation2 + $0x638] sm:$0xff]
    %v1244 = vld [vmem:[#allocation2 + $0x640] sm:$0xff]
    %v1245 = vld [vmem:[#allocation2 + $0x648] sm:$0xff]
    %v1246 = vld [vmem:[#allocation2 + $0x650] sm:$0xff]
    %v1247 = vld [vmem:[#allocation2 + $0x658] sm:$0xff]
    %v1248 = vld [vmem:[#allocation2 + $0x660] sm:$0xff]
    %v1249 = vld [vmem:[#allocation2 + $0x668] sm:$0xff]
    %v1250 = vld [vmem:[#allocation2 + $0x670] sm:$0xff]
    %v1251 = vld [vmem:[#allocation2 + $0x678] sm:$0xff]
    %v1252 = vld [vmem:[#allocation2 + $0x680] sm:$0xff]
    %v1253 = vld [vmem:[#allocation2 + $0x688] sm:$0xff]
    %v1254 = vld [vmem:[#allocation2 + $0x690] sm:$0xff]
    %v1255 = vld [vmem:[#allocation2 + $0x698] sm:$0xff]
    %v1256 = vld [vmem:[#allocation2 + $0x6a0] sm:$0xff]
    %v1257 = vld [vmem:[#allocation2 + $0x6a8] sm:$0xff]
    %v1258 = vld [vmem:[#allocation2 + $0x6b0] sm:$0xff]
    %v1259 = vld [vmem:[#allocation2 + $0x6b8] sm:$0xff]
    %v1260 = vld [vmem:[#allocation2 + $0x6c0] sm:$0xff]
    %v1261 = vld [vmem:[#allocation2 + $0x6c8] sm:$0xff]
    %v1262 = vld [vmem:[#allocation2 + $0x6d0] sm:$0xff]
    %v1263 = vld [vmem:[#allocation2 + $0x6d8] sm:$0xff]
    %v1264 = vld [vmem:[#allocation2 + $0x6e0] sm:$0xff]
    %v1265 = vld [vmem:[#allocation2 + $0x6e8] sm:$0xff]
    %v1266 = vld [vmem:[#allocation2 + $0x6f0] sm:$0xff]
    %v1267 = vld [vmem:[#allocation2 + $0x6f8] sm:$0xff]
    %v1268 = vld [vmem:[#allocation2 + $0x700] sm:$0xff]
    %v1269 = vld [vmem:[#allocation2 + $0x708] sm:$0xff]
    %v1270 = vld [vmem:[#allocation2 + $0x710] sm:$0xff]
    %v1271 = vld [vmem:[#allocation2 + $0x718] sm:$0xff]
    %v1272 = vld [vmem:[#allocation2 + $0x720] sm:$0xff]
    %v1273 = vld [vmem:[#allocation2 + $0x728] sm:$0xff]
    %v1274 = vld [vmem:[#allocation2 + $0x730] sm:$0xff]
    %v1275 = vld [vmem:[#allocation2 + $0x738] sm:$0xff]
    %v1276 = vld [vmem:[#allocation2 + $0x740] sm:$0xff]
    %v1277 = vld [vmem:[#allocation2 + $0x748] sm:$0xff]
    %v1278 = vld [vmem:[#allocation2 + $0x750] sm:$0xff]
    %v1279 = vld [vmem:[#allocation2 + $0x758] sm:$0xff]
    %v1280 = vld [vmem:[#allocation2 + $0x760] sm:$0xff]
    %v1281 = vld [vmem:[#allocation2 + $0x768] sm:$0xff]
    %v1282 = vld [vmem:[#allocation2 + $0x770] sm:$0xff]
    %v1283 = vld [vmem:[#allocation2 + $0x778] sm:$0xff]
    %v1284 = vld [vmem:[#allocation2 + $0x780] sm:$0xff]
    %v1285 = vld [vmem:[#allocation2 + $0x788] sm:$0xff]
    %v1286 = vld [vmem:[#allocation2 + $0x790] sm:$0xff]
    %v1287 = vld [vmem:[#allocation2 + $0x798] sm:$0xff]
    %v1288 = vld [vmem:[#allocation2 + $0x7a0] sm:$0xff]
    %v1289 = vld [vmem:[#allocation2 + $0x7a8] sm:$0xff]
    %v1290 = vld [vmem:[#allocation2 + $0x7b0] sm:$0xff]
    %v1291 = vld [vmem:[#allocation2 + $0x7b8] sm:$0xff]
    %v1292 = vld [vmem:[#allocation2 + $0x7c0] sm:$0xff]
    %v1293 = vld [vmem:[#allocation2 + $0x7c8] sm:$0xff]
    %v1294 = vld [vmem:[#allocation2 + $0x7d0] sm:$0xff]
    %v1295 = vld [vmem:[#allocation2 + $0x7d8] sm:$0xff]
    %v1296 = vld [vmem:[#allocation2 + $0x7e0] sm:$0xff]
    %v1297 = vld [vmem:[#allocation2 + $0x7e8] sm:$0xff]
    %v1298 = vld [vmem:[#allocation2 + $0x7f0] sm:$0xff]
    %v1299 = vld [vmem:[#allocation2 + $0x7f8] sm:$0xff]
    %v1300 = vpack.c.bf16 %v1032, %v1032
    %v1301 = vpack.c.bf16 %v1033, %v1033
    %v1302 = vpack.c.bf16 %v1034, %v1034
    %v1303 = vpack.c.bf16 %v1035, %v1035
    %v1304 = vld [vmem:[#allocation14 + $0x8] sm:$0xff]
    %v1306 = vlaneseq
    %v1307 = vshrl.u32 %v1306, 7
    %v1308 = vsub.s32 0, %v1307
    %v1309 = vrot.slane %v1304, %v1308
    %v1310 = vlaneseq
    %v1311 = vshrl.u32 %v1310, 7
    %v1312 = vsub.s32 1, %v1311
    %v1313 = vrot.slane %v1304, %v1312
    %v1314 = vlaneseq
    %v1315 = vshrl.u32 %v1314, 7
    %v1316 = vsub.s32 2, %v1315
    %v1317 = vrot.slane %v1304, %v1316
    %v1318 = vlaneseq
    %v1319 = vshrl.u32 %v1318, 7
    %v1320 = vsub.s32 3, %v1319
    %v1321 = vrot.slane %v1304, %v1320
    %v1322 = vlaneseq
    %v1323 = vshrl.u32 %v1322, 7
    %v1324 = vsub.s32 4, %v1323
    %v1325 = vrot.slane %v1304, %v1324
    %v1326 = vlaneseq
    %v1327 = vshrl.u32 %v1326, 7
    %v1328 = vsub.s32 5, %v1327
    %v1329 = vrot.slane %v1304, %v1328
    %v1330 = vlaneseq
    %v1331 = vshrl.u32 %v1330, 7
    %v1332 = vsub.s32 6, %v1331
    %v1333 = vrot.slane %v1304, %v1332
    %v1334 = vlaneseq
    %v1335 = vshrl.u32 %v1334, 7
    %v1336 = vsub.s32 7, %v1335
    %v1337 = vrot.slane %v1304, %v1336
    %1346 = vmatprep.subr.bf16.mxu0 %v1045
    %1347 = vmatpush1.bf16.msra.mxu0 %v1044
    %1348 = vmatprep.subr.bf16.mxu0 %v1053
    %1349 = vmatpush1.bf16.msra.mxu0 %v1052
    %1350 = vmatprep.subr.bf16.mxu0 %v1061
    %1351 = vmatpush1.bf16.msra.mxu0 %v1060
    %1352 = vmatprep.subr.bf16.mxu0 %v1069
    %1353 = vmatpush1.bf16.msra.mxu0 %v1068
    %1354 = vmatprep.subr.bf16.mxu0 %v1077
    %1355 = vmatpush1.bf16.msra.mxu0 %v1076
    %1356 = vmatprep.subr.bf16.mxu0 %v1085
    %1357 = vmatpush1.bf16.msra.mxu0 %v1084
    %1358 = vmatprep.subr.bf16.mxu0 %v1093
    %1359 = vmatpush1.bf16.msra.mxu0 %v1092
    %1360 = vmatprep.subr.bf16.mxu0 %v1101
    %1361 = vmatpush1.bf16.msra.mxu0 %v1100
    %1362 = vmatprep.subr.bf16.mxu0 %v1109
    %1363 = vmatpush1.bf16.msra.mxu0 %v1108
    %1364 = vmatprep.subr.bf16.mxu0 %v1117
    %1365 = vmatpush1.bf16.msra.mxu0 %v1116
    %1366 = vmatprep.subr.bf16.mxu0 %v1125
    %1367 = vmatpush1.bf16.msra.mxu0 %v1124
    %1368 = vmatprep.subr.bf16.mxu0 %v1133
    %1369 = vmatpush1.bf16.msra.mxu0 %v1132
    %1370 = vmatprep.subr.bf16.mxu0 %v1141
    %1371 = vmatpush1.bf16.msra.mxu0 %v1140
    %1372 = vmatprep.subr.bf16.mxu0 %v1149
    %1373 = vmatpush1.bf16.msra.mxu0 %v1148
    %1374 = vmatprep.subr.bf16.mxu0 %v1157
    %1375 = vmatpush1.bf16.msra.mxu0 %v1156
    %1376 = vmatprep.subr.bf16.mxu0 %v1165
    %1377 = vmatpush1.bf16.msra.mxu0 %v1164
    %1378 = vmatprep.mubr.bf16.mxu0 %v1301
    %1379 = vmatmul.mubr.bf16.gmra.mrb[0].mxu0 %v1300
    %v1380 = vpop.f32.mrb[0].mxu0
    %v1381 = vadd.f32 %v1309, %v1380
    %v1382 = vpop.f32.mrb[0].mxu0
    %v1383 = vadd.f32 %v1313, %v1382
    %v1384 = vpop.f32.mrb[0].mxu0
    %v1385 = vpop.f32.mrb[0].mxu0
    %1386 = vdwg.mxu0
    %1387 = vmatprep.subr.bf16.mxu0 %v1173
    %1388 = vmatpush1.bf16.msra.mxu0 %v1172
    %1389 = vmatprep.subr.bf16.mxu0 %v1181
    %1390 = vmatpush1.bf16.msra.mxu0 %v1180
    %1391 = vmatprep.subr.bf16.mxu0 %v1189
    %1392 = vmatpush1.bf16.msra.mxu0 %v1188
    %1393 = vmatprep.subr.bf16.mxu0 %v1197
    %1394 = vmatpush1.bf16.msra.mxu0 %v1196
    %1395 = vmatprep.subr.bf16.mxu0 %v1205
    %1396 = vmatpush1.bf16.msra.mxu0 %v1204
    %1397 = vmatprep.subr.bf16.mxu0 %v1213
    %1398 = vmatpush1.bf16.msra.mxu0 %v1212
    %1399 = vmatprep.subr.bf16.mxu0 %v1221
    %1400 = vmatpush1.bf16.msra.mxu0 %v1220
    %1401 = vmatprep.subr.bf16.mxu0 %v1229
    %1402 = vmatpush1.bf16.msra.mxu0 %v1228
    %1403 = vmatprep.subr.bf16.mxu0 %v1237
    %1404 = vmatpush1.bf16.msra.mxu0 %v1236
    %1405 = vmatprep.subr.bf16.mxu0 %v1245
    %1406 = vmatpush1.bf16.msra.mxu0 %v1244
    %1407 = vmatprep.subr.bf16.mxu0 %v1253
    %1408 = vmatpush1.bf16.msra.mxu0 %v1252
    %1409 = vmatprep.subr.bf16.mxu0 %v1261
    %1410 = vmatpush1.bf16.msra.mxu0 %v1260
    %1411 = vmatprep.subr.bf16.mxu0 %v1269
    %1412 = vmatpush1.bf16.msra.mxu0 %v1268
    %1413 = vmatprep.subr.bf16.mxu0 %v1277
    %1414 = vmatpush1.bf16.msra.mxu0 %v1276
    %1415 = vmatprep.subr.bf16.mxu0 %v1285
    %1416 = vmatpush1.bf16.msra.mxu0 %v1284
    %1417 = vmatprep.subr.bf16.mxu0 %v1293
    %1418 = vmatpush1.bf16.msra.mxu0 %v1292
    %1419 = vmatprep.mubr.bf16.mxu0 %v1303
    %1420 = vmatmul.mubr.bf16.gmra.mrb[0].mxu0 %v1302
    %v1421 = vpop.f32.mrb[0].mxu0
    %v1422 = vadd.f32 %v1381, %v1421
    %v1423 = vpop.f32.mrb[0].mxu0
    %v1424 = vadd.f32 %v1383, %v1423
    %v1425 = vpop.f32.mrb[0].mxu0
    %v1426 = vpop.f32.mrb[0].mxu0
    %1427 = vdwg.mxu0
    %1428 = vmatprep.subr.bf16.mxu0 %v1047
    %1429 = vmatpush1.bf16.msra.mxu0 %v1046
    %1430 = vmatprep.subr.bf16.mxu0 %v1055
    %1431 = vmatpush1.bf16.msra.mxu0 %v1054
    %1432 = vmatprep.subr.bf16.mxu0 %v1063
    %1433 = vmatpush1.bf16.msra.mxu0 %v1062
    %1434 = vmatprep.subr.bf16.mxu0 %v1071
    %1435 = vmatpush1.bf16.msra.mxu0 %v1070
    %1436 = vmatprep.subr.bf16.mxu0 %v1079
    %1437 = vmatpush1.bf16.msra.mxu0 %v1078
    %1438 = vmatprep.subr.bf16.mxu0 %v1087
    %1439 = vmatpush1.bf16.msra.mxu0 %v1086
    %1440 = vmatprep.subr.bf16.mxu0 %v1095
    %1441 = vmatpush1.bf16.msra.mxu0 %v1094
    %1442 = vmatprep.subr.bf16.mxu0 %v1103
    %1443 = vmatpush1.bf16.msra.mxu0 %v1102
    %1444 = vmatprep.subr.bf16.mxu0 %v1111
    %1445 = vmatpush1.bf16.msra.mxu0 %v1110
    %1446 = vmatprep.subr.bf16.mxu0 %v1119
    %1447 = vmatpush1.bf16.msra.mxu0 %v1118
    %1448 = vmatprep.subr.bf16.mxu0 %v1127
    %1449 = vmatpush1.bf16.msra.mxu0 %v1126
    %1450 = vmatprep.subr.bf16.mxu0 %v1135
    %1451 = vmatpush1.bf16.msra.mxu0 %v1134
    %1452 = vmatprep.subr.bf16.mxu0 %v1143
    %1453 = vmatpush1.bf16.msra.mxu0 %v1142
    %1454 = vmatprep.subr.bf16.mxu0 %v1151
    %1455 = vmatpush1.bf16.msra.mxu0 %v1150
    %1456 = vmatprep.subr.bf16.mxu0 %v1159
    %1457 = vmatpush1.bf16.msra.mxu0 %v1158
    %1458 = vmatprep.subr.bf16.mxu0 %v1167
    %1459 = vmatpush1.bf16.msra.mxu0 %v1166
    %1460 = vmatprep.mubr.bf16.mxu0 %v1301
    %1461 = vmatmul.mubr.bf16.gmra.mrb[0].mxu0 %v1300
    %v1462 = vpop.f32.mrb[0].mxu0
    %v1463 = vadd.f32 %v1317, %v1462
    %v1464 = vpop.f32.mrb[0].mxu0
    %v1465 = vadd.f32 %v1321, %v1464
    %v1466 = vpop.f32.mrb[0].mxu0
    %v1467 = vpop.f32.mrb[0].mxu0
    %1468 = vdwg.mxu0
    %1469 = vmatprep.subr.bf16.mxu0 %v1175
    %1470 = vmatpush1.bf16.msra.mxu0 %v1174
    %1471 = vmatprep.subr.bf16.mxu0 %v1183
    %1472 = vmatpush1.bf16.msra.mxu0 %v1182
    %1473 = vmatprep.subr.bf16.mxu0 %v1191
    %1474 = vmatpush1.bf16.msra.mxu0 %v1190
    %1475 = vmatprep.subr.bf16.mxu0 %v1199
    %1476 = vmatpush1.bf16.msra.mxu0 %v1198
    %1477 = vmatprep.subr.bf16.mxu0 %v1207
    %1478 = vmatpush1.bf16.msra.mxu0 %v1206
    %1479 = vmatprep.subr.bf16.mxu0 %v1215
    %1480 = vmatpush1.bf16.msra.mxu0 %v1214
    %1481 = vmatprep.subr.bf16.mxu0 %v1223
    %1482 = vmatpush1.bf16.msra.mxu0 %v1222
    %1483 = vmatprep.subr.bf16.mxu0 %v1231
    %1484 = vmatpush1.bf16.msra.mxu0 %v1230
    %1485 = vmatprep.subr.bf16.mxu0 %v1239
    %1486 = vmatpush1.bf16.msra.mxu0 %v1238
    %1487 = vmatprep.subr.bf16.mxu0 %v1247
    %1488 = vmatpush1.bf16.msra.mxu0 %v1246
    %1489 = vmatprep.subr.bf16.mxu0 %v1255
    %1490 = vmatpush1.bf16.msra.mxu0 %v1254
    %1491 = vmatprep.subr.bf16.mxu0 %v1263
    %1492 = vmatpush1.bf16.msra.mxu0 %v1262
    %1493 = vmatprep.subr.bf16.mxu0 %v1271
    %1494 = vmatpush1.bf16.msra.mxu0 %v1270
    %1495 = vmatprep.subr.bf16.mxu0 %v1279
    %1496 = vmatpush1.bf16.msra.mxu0 %v1278
    %1497 = vmatprep.subr.bf16.mxu0 %v1287
    %1498 = vmatpush1.bf16.msra.mxu0 %v1286
    %1499 = vmatprep.subr.bf16.mxu0 %v1295
    %1500 = vmatpush1.bf16.msra.mxu0 %v1294
    %1501 = vmatprep.mubr.bf16.mxu0 %v1303
    %1502 = vmatmul.mubr.bf16.gmra.mrb[0].mxu0 %v1302
    %v1503 = vpop.f32.mrb[0].mxu0
    %v1504 = vadd.f32 %v1463, %v1503
    %v1505 = vpop.f32.mrb[0].mxu0
    %v1506 = vadd.f32 %v1465, %v1505
    %v1507 = vpop.f32.mrb[0].mxu0
    %v1508 = vpop.f32.mrb[0].mxu0
    %1509 = vdwg.mxu0
    %1510 = vmatprep.subr.bf16.mxu0 %v1049
    %1511 = vmatpush1.bf16.msra.mxu0 %v1048
    %1512 = vmatprep.subr.bf16.mxu0 %v1057
    %1513 = vmatpush1.bf16.msra.mxu0 %v1056
    %1514 = vmatprep.subr.bf16.mxu0 %v1065
    %1515 = vmatpush1.bf16.msra.mxu0 %v1064
    %1516 = vmatprep.subr.bf16.mxu0 %v1073
    %1517 = vmatpush1.bf16.msra.mxu0 %v1072
    %1518 = vmatprep.subr.bf16.mxu0 %v1081
    %1519 = vmatpush1.bf16.msra.mxu0 %v1080
    %1520 = vmatprep.subr.bf16.mxu0 %v1089
    %1521 = vmatpush1.bf16.msra.mxu0 %v1088
    %1522 = vmatprep.subr.bf16.mxu0 %v1097
    %1523 = vmatpush1.bf16.msra.mxu0 %v1096
    %1524 = vmatprep.subr.bf16.mxu0 %v1105
    %1525 = vmatpush1.bf16.msra.mxu0 %v1104
    %1526 = vmatprep.subr.bf16.mxu0 %v1113
    %1527 = vmatpush1.bf16.msra.mxu0 %v1112
    %1528 = vmatprep.subr.bf16.mxu0 %v1121
    %1529 = vmatpush1.bf16.msra.mxu0 %v1120
    %1530 = vmatprep.subr.bf16.mxu0 %v1129
    %1531 = vmatpush1.bf16.msra.mxu0 %v1128
    %1532 = vmatprep.subr.bf16.mxu0 %v1137
    %1533 = vmatpush1.bf16.msra.mxu0 %v1136
    %1534 = vmatprep.subr.bf16.mxu0 %v1145
    %1535 = vmatpush1.bf16.msra.mxu0 %v1144
    %1536 = vmatprep.subr.bf16.mxu0 %v1153
    %1537 = vmatpush1.bf16.msra.mxu0 %v1152
    %1538 = vmatprep.subr.bf16.mxu0 %v1161
    %1539 = vmatpush1.bf16.msra.mxu0 %v1160
    %1540 = vmatprep.subr.bf16.mxu0 %v1169
    %1541 = vmatpush1.bf16.msra.mxu0 %v1168
    %1542 = vmatprep.mubr.bf16.mxu0 %v1301
    %1543 = vmatmul.mubr.bf16.gmra.mrb[0].mxu0 %v1300
    %v1544 = vpop.f32.mrb[0].mxu0
    %v1545 = vadd.f32 %v1325, %v1544
    %v1546 = vpop.f32.mrb[0].mxu0
    %v1547 = vadd.f32 %v1329, %v1546
    %v1548 = vpop.f32.mrb[0].mxu0
    %v1549 = vpop.f32.mrb[0].mxu0
    %1550 = vdwg.mxu0
    %1551 = vmatprep.subr.bf16.mxu0 %v1177
    %1552 = vmatpush1.bf16.msra.mxu0 %v1176
    %1553 = vmatprep.subr.bf16.mxu0 %v1185
    %1554 = vmatpush1.bf16.msra.mxu0 %v1184
    %1555 = vmatprep.subr.bf16.mxu0 %v1193
    %1556 = vmatpush1.bf16.msra.mxu0 %v1192
    %1557 = vmatprep.subr.bf16.mxu0 %v1201
    %1558 = vmatpush1.bf16.msra.mxu0 %v1200
    %1559 = vmatprep.subr.bf16.mxu0 %v1209
    %1560 = vmatpush1.bf16.msra.mxu0 %v1208
    %1561 = vmatprep.subr.bf16.mxu0 %v1217
    %1562 = vmatpush1.bf16.msra.mxu0 %v1216
    %1563 = vmatprep.subr.bf16.mxu0 %v1225
    %1564 = vmatpush1.bf16.msra.mxu0 %v1224
    %1565 = vmatprep.subr.bf16.mxu0 %v1233
    %1566 = vmatpush1.bf16.msra.mxu0 %v1232
    %1567 = vmatprep.subr.bf16.mxu0 %v1241
    %1568 = vmatpush1.bf16.msra.mxu0 %v1240
    %1569 = vmatprep.subr.bf16.mxu0 %v1249
    %1570 = vmatpush1.bf16.msra.mxu0 %v1248
    %1571 = vmatprep.subr.bf16.mxu0 %v1257
    %1572 = vmatpush1.bf16.msra.mxu0 %v1256
    %1573 = vmatprep.subr.bf16.mxu0 %v1265
    %1574 = vmatpush1.bf16.msra.mxu0 %v1264
    %1575 = vmatprep.subr.bf16.mxu0 %v1273
    %1576 = vmatpush1.bf16.msra.mxu0 %v1272
    %1577 = vmatprep.subr.bf16.mxu0 %v1281
    %1578 = vmatpush1.bf16.msra.mxu0 %v1280
    %1579 = vmatprep.subr.bf16.mxu0 %v1289
    %1580 = vmatpush1.bf16.msra.mxu0 %v1288
    %1581 = vmatprep.subr.bf16.mxu0 %v1297
    %1582 = vmatpush1.bf16.msra.mxu0 %v1296
    %1583 = vmatprep.mubr.bf16.mxu0 %v1303
    %1584 = vmatmul.mubr.bf16.gmra.mrb[0].mxu0 %v1302
    %v1585 = vpop.f32.mrb[0].mxu0
    %v1586 = vadd.f32 %v1545, %v1585
    %v1587 = vpop.f32.mrb[0].mxu0
    %v1588 = vadd.f32 %v1547, %v1587
    %v1589 = vpop.f32.mrb[0].mxu0
    %v1590 = vpop.f32.mrb[0].mxu0
    %1591 = vdwg.mxu0
    %1592 = vmatprep.subr.bf16.mxu0 %v1051
    %1593 = vmatpush1.bf16.msra.mxu0 %v1050
    %1594 = vmatprep.subr.bf16.mxu0 %v1059
    %1595 = vmatpush1.bf16.msra.mxu0 %v1058
    %1596 = vmatprep.subr.bf16.mxu0 %v1067
    %1597 = vmatpush1.bf16.msra.mxu0 %v1066
    %1598 = vmatprep.subr.bf16.mxu0 %v1075
    %1599 = vmatpush1.bf16.msra.mxu0 %v1074
    %1600 = vmatprep.subr.bf16.mxu0 %v1083
    %1601 = vmatpush1.bf16.msra.mxu0 %v1082
    %1602 = vmatprep.subr.bf16.mxu0 %v1091
    %1603 = vmatpush1.bf16.msra.mxu0 %v1090
    %1604 = vmatprep.subr.bf16.mxu0 %v1099
    %1605 = vmatpush1.bf16.msra.mxu0 %v1098
    %1606 = vmatprep.subr.bf16.mxu0 %v1107
    %1607 = vmatpush1.bf16.msra.mxu0 %v1106
    %1608 = vmatprep.subr.bf16.mxu0 %v1115
    %1609 = vmatpush1.bf16.msra.mxu0 %v1114
    %1610 = vmatprep.subr.bf16.mxu0 %v1123
    %1611 = vmatpush1.bf16.msra.mxu0 %v1122
    %1612 = vmatprep.subr.bf16.mxu0 %v1131
    %1613 = vmatpush1.bf16.msra.mxu0 %v1130
    %1614 = vmatprep.subr.bf16.mxu0 %v1139
    %1615 = vmatpush1.bf16.msra.mxu0 %v1138
    %1616 = vmatprep.subr.bf16.mxu0 %v1147
    %1617 = vmatpush1.bf16.msra.mxu0 %v1146
    %1618 = vmatprep.subr.bf16.mxu0 %v1155
    %1619 = vmatpush1.bf16.msra.mxu0 %v1154
    %1620 = vmatprep.subr.bf16.mxu0 %v1163
    %1621 = vmatpush1.bf16.msra.mxu0 %v1162
    %1622 = vmatprep.subr.bf16.mxu0 %v1171
    %1623 = vmatpush1.bf16.msra.mxu0 %v1170
    %1624 = vmatprep.mubr.bf16.mxu0 %v1301
    %1625 = vmatmul.mubr.bf16.gmra.mrb[0].mxu0 %v1300
    %v1626 = vpop.f32.mrb[0].mxu0
    %v1627 = vadd.f32 %v1333, %v1626
    %v1628 = vpop.f32.mrb[0].mxu0
    %v1629 = vadd.f32 %v1337, %v1628
    %v1630 = vpop.f32.mrb[0].mxu0
    %v1631 = vpop.f32.mrb[0].mxu0
    %1632 = vdwg.mxu0
    %1633 = vmatprep.subr.bf16.mxu0 %v1179
    %1634 = vmatpush1.bf16.msra.mxu0 %v1178
    %1635 = vmatprep.subr.bf16.mxu0 %v1187
    %1636 = vmatpush1.bf16.msra.mxu0 %v1186
    %1637 = vmatprep.subr.bf16.mxu0 %v1195
    %1638 = vmatpush1.bf16.msra.mxu0 %v1194
    %1639 = vmatprep.subr.bf16.mxu0 %v1203
    %1640 = vmatpush1.bf16.msra.mxu0 %v1202
    %1641 = vmatprep.subr.bf16.mxu0 %v1211
    %1642 = vmatpush1.bf16.msra.mxu0 %v1210
    %1643 = vmatprep.subr.bf16.mxu0 %v1219
    %1644 = vmatpush1.bf16.msra.mxu0 %v1218
    %1645 = vmatprep.subr.bf16.mxu0 %v1227
    %1646 = vmatpush1.bf16.msra.mxu0 %v1226
    %1647 = vmatprep.subr.bf16.mxu0 %v1235
    %1648 = vmatpush1.bf16.msra.mxu0 %v1234
    %1649 = vmatprep.subr.bf16.mxu0 %v1243
    %1650 = vmatpush1.bf16.msra.mxu0 %v1242
    %1651 = vmatprep.subr.bf16.mxu0 %v1251
    %1652 = vmatpush1.bf16.msra.mxu0 %v1250
    %1653 = vmatprep.subr.bf16.mxu0 %v1259
    %1654 = vmatpush1.bf16.msra.mxu0 %v1258
    %1655 = vmatprep.subr.bf16.mxu0 %v1267
    %1656 = vmatpush1.bf16.msra.mxu0 %v1266
    %1657 = vmatprep.subr.bf16.mxu0 %v1275
    %1658 = vmatpush1.bf16.msra.mxu0 %v1274
    %1659 = vmatprep.subr.bf16.mxu0 %v1283
    %1660 = vmatpush1.bf16.msra.mxu0 %v1282
    %1661 = vmatprep.subr.bf16.mxu0 %v1291
    %1662 = vmatpush1.bf16.msra.mxu0 %v1290
    %1663 = vmatprep.subr.bf16.mxu0 %v1299
    %1664 = vmatpush1.bf16.msra.mxu0 %v1298
    %1665 = vmatprep.mubr.bf16.mxu0 %v1303
    %1666 = vmatmul.mubr.bf16.gmra.mrb[0].mxu0 %v1302
    %v1667 = vpop.f32.mrb[0].mxu0
    %v1668 = vadd.f32 %v1627, %v1667
    %v1669 = vpop.f32.mrb[0].mxu0
    %v1670 = vadd.f32 %v1629, %v1669
    %v1671 = vpop.f32.mrb[0].mxu0
    %v1672 = vpop.f32.mrb[0].mxu0
    %1673 = vdwg.mxu0
    %vm1674 = vcmp.ge.f32.partialorder %v1422, 0.0
    %vm1675 = vcmp.ge.f32.partialorder %v1424, 0.0
    %vm1676 = vcmp.ge.f32.partialorder %v1504, 0.0
    %vm1677 = vcmp.ge.f32.partialorder %v1506, 0.0
    %vm1678 = vcmp.ge.f32.partialorder %v1586, 0.0
    %vm1679 = vcmp.ge.f32.partialorder %v1588, 0.0
    %vm1680 = vcmp.ge.f32.partialorder %v1668, 0.0
    %vm1681 = vcmp.ge.f32.partialorder %v1670, 0.0
    %v1682 = vmul.f32 %v1422, 0.01
    %v1683 = vmul.f32 %v1424, 0.01
    %v1684 = vmul.f32 %v1504, 0.01
    %v1685 = vmul.f32 %v1506, 0.01
    %v1686 = vmul.f32 %v1586, 0.01
    %v1687 = vmul.f32 %v1588, 0.01
    %v1688 = vmul.f32 %v1668, 0.01
    %v1689 = vmul.f32 %v1670, 0.01
    %v1690 = vsel %vm1674, %v1422, %v1682
    %v1691 = vsel %vm1675, %v1424, %v1683
    %v1692 = vsel %vm1676, %v1504, %v1684
    %v1693 = vsel %vm1677, %v1506, %v1685
    %v1694 = vsel %vm1678, %v1586, %v1686
    %v1695 = vsel %vm1679, %v1588, %v1687
    %v1696 = vsel %vm1680, %v1668, %v1688
    %v1697 = vsel %vm1681, %v1670, %v1689
    %1698 = vst [vmem:[%s14] sm:$0xff] %v1690
    %1699 = vst [vmem:[%s14 + $0x8] sm:$0xff] %v1691
    %1700 = vst [vmem:[%s14 + $0x10] sm:$0xff] %v1692
    %1701 = vst [vmem:[%s14 + $0x18] sm:$0xff] %v1693
    %1702 = vst [vmem:[%s14 + $0x20] sm:$0xff] %v1694
    %1703 = vst [vmem:[%s14 + $0x28] sm:$0xff] %v1695
    %1704 = vst [vmem:[%s14 + $0x30] sm:$0xff] %v1696
    %1705 = vst [vmem:[%s14 + $0x38] sm:$0xff] %v1697
    %s1706 = smul.u32 4, 128
    %s1707 = smul.u32 %s1706, 16
    %s1708 = sshll.u32 %s1707, 4
    %1709 = dma.done %s150, %s1708
    %v1710 = vld [vmem:[#allocation3] sm:$0xff]
    %v1711 = vld [vmem:[#allocation3 + $0x8] sm:$0xff]
    %v1712 = vld [vmem:[#allocation3 + $0x10] sm:$0xff]
    %v1713 = vld [vmem:[#allocation3 + $0x18] sm:$0xff]
    %v1714 = vld [vmem:[#allocation3 + $0x20] sm:$0xff]
    %v1715 = vld [vmem:[#allocation3 + $0x28] sm:$0xff]
    %v1716 = vld [vmem:[#allocation3 + $0x30] sm:$0xff]
    %v1717 = vld [vmem:[#allocation3 + $0x38] sm:$0xff]
    %v1718 = vld [vmem:[#allocation3 + $0x40] sm:$0xff]
    %v1719 = vld [vmem:[#allocation3 + $0x48] sm:$0xff]
    %v1720 = vld [vmem:[#allocation3 + $0x50] sm:$0xff]
    %v1721 = vld [vmem:[#allocation3 + $0x58] sm:$0xff]
    %v1722 = vld [vmem:[#allocation3 + $0x60] sm:$0xff]
    %v1723 = vld [vmem:[#allocation3 + $0x68] sm:$0xff]
    %v1724 = vld [vmem:[#allocation3 + $0x70] sm:$0xff]
    %v1725 = vld [vmem:[#allocation3 + $0x78] sm:$0xff]
    %v1726 = vld [vmem:[#allocation3 + $0x80] sm:$0xff]
    %v1727 = vld [vmem:[#allocation3 + $0x88] sm:$0xff]
    %v1728 = vld [vmem:[#allocation3 + $0x90] sm:$0xff]
    %v1729 = vld [vmem:[#allocation3 + $0x98] sm:$0xff]
    %v1730 = vld [vmem:[#allocation3 + $0xa0] sm:$0xff]
    %v1731 = vld [vmem:[#allocation3 + $0xa8] sm:$0xff]
    %v1732 = vld [vmem:[#allocation3 + $0xb0] sm:$0xff]
    %v1733 = vld [vmem:[#allocation3 + $0xb8] sm:$0xff]
    %v1734 = vld [vmem:[#allocation3 + $0xc0] sm:$0xff]
    %v1735 = vld [vmem:[#allocation3 + $0xc8] sm:$0xff]
    %v1736 = vld [vmem:[#allocation3 + $0xd0] sm:$0xff]
    %v1737 = vld [vmem:[#allocation3 + $0xd8] sm:$0xff]
    %v1738 = vld [vmem:[#allocation3 + $0xe0] sm:$0xff]
    %v1739 = vld [vmem:[#allocation3 + $0xe8] sm:$0xff]
    %v1740 = vld [vmem:[#allocation3 + $0xf0] sm:$0xff]
    %v1741 = vld [vmem:[#allocation3 + $0xf8] sm:$0xff]
    %v1742 = vld [vmem:[#allocation3 + $0x100] sm:$0xff]
    %v1743 = vld [vmem:[#allocation3 + $0x108] sm:$0xff]
    %v1744 = vld [vmem:[#allocation3 + $0x110] sm:$0xff]
    %v1745 = vld [vmem:[#allocation3 + $0x118] sm:$0xff]
    %v1746 = vld [vmem:[#allocation3 + $0x120] sm:$0xff]
    %v1747 = vld [vmem:[#allocation3 + $0x128] sm:$0xff]
    %v1748 = vld [vmem:[#allocation3 + $0x130] sm:$0xff]
    %v1749 = vld [vmem:[#allocation3 + $0x138] sm:$0xff]
    %v1750 = vld [vmem:[#allocation3 + $0x140] sm:$0xff]
    %v1751 = vld [vmem:[#allocation3 + $0x148] sm:$0xff]
    %v1752 = vld [vmem:[#allocation3 + $0x150] sm:$0xff]
    %v1753 = vld [vmem:[#allocation3 + $0x158] sm:$0xff]
    %v1754 = vld [vmem:[#allocation3 + $0x160] sm:$0xff]
    %v1755 = vld [vmem:[#allocation3 + $0x168] sm:$0xff]
    %v1756 = vld [vmem:[#allocation3 + $0x170] sm:$0xff]
    %v1757 = vld [vmem:[#allocation3 + $0x178] sm:$0xff]
    %v1758 = vld [vmem:[#allocation3 + $0x180] sm:$0xff]
    %v1759 = vld [vmem:[#allocation3 + $0x188] sm:$0xff]
    %v1760 = vld [vmem:[#allocation3 + $0x190] sm:$0xff]
    %v1761 = vld [vmem:[#allocation3 + $0x198] sm:$0xff]
    %v1762 = vld [vmem:[#allocation3 + $0x1a0] sm:$0xff]
    %v1763 = vld [vmem:[#allocation3 + $0x1a8] sm:$0xff]
    %v1764 = vld [vmem:[#allocation3 + $0x1b0] sm:$0xff]
    %v1765 = vld [vmem:[#allocation3 + $0x1b8] sm:$0xff]
    %v1766 = vld [vmem:[#allocation3 + $0x1c0] sm:$0xff]
    %v1767 = vld [vmem:[#allocation3 + $0x1c8] sm:$0xff]
    %v1768 = vld [vmem:[#allocation3 + $0x1d0] sm:$0xff]
    %v1769 = vld [vmem:[#allocation3 + $0x1d8] sm:$0xff]
    %v1770 = vld [vmem:[#allocation3 + $0x1e0] sm:$0xff]
    %v1771 = vld [vmem:[#allocation3 + $0x1e8] sm:$0xff]
    %v1772 = vld [vmem:[#allocation3 + $0x1f0] sm:$0xff]
    %v1773 = vld [vmem:[#allocation3 + $0x1f8] sm:$0xff]
    %v1774 = vld [vmem:[#allocation3 + $0x200] sm:$0xff]
    %v1775 = vld [vmem:[#allocation3 + $0x208] sm:$0xff]
    %v1776 = vld [vmem:[#allocation3 + $0x210] sm:$0xff]
    %v1777 = vld [vmem:[#allocation3 + $0x218] sm:$0xff]
    %v1778 = vld [vmem:[#allocation3 + $0x220] sm:$0xff]
    %v1779 = vld [vmem:[#allocation3 + $0x228] sm:$0xff]
    %v1780 = vld [vmem:[#allocation3 + $0x230] sm:$0xff]
    %v1781 = vld [vmem:[#allocation3 + $0x238] sm:$0xff]
    %v1782 = vld [vmem:[#allocation3 + $0x240] sm:$0xff]
    %v1783 = vld [vmem:[#allocation3 + $0x248] sm:$0xff]
    %v1784 = vld [vmem:[#allocation3 + $0x250] sm:$0xff]
    %v1785 = vld [vmem:[#allocation3 + $0x258] sm:$0xff]
    %v1786 = vld [vmem:[#allocation3 + $0x260] sm:$0xff]
    %v1787 = vld [vmem:[#allocation3 + $0x268] sm:$0xff]
    %v1788 = vld [vmem:[#allocation3 + $0x270] sm:$0xff]
    %v1789 = vld [vmem:[#allocation3 + $0x278] sm:$0xff]
    %v1790 = vld [vmem:[#allocation3 + $0x280] sm:$0xff]
    %v1791 = vld [vmem:[#allocation3 + $0x288] sm:$0xff]
    %v1792 = vld [vmem:[#allocation3 + $0x290] sm:$0xff]
    %v1793 = vld [vmem:[#allocation3 + $0x298] sm:$0xff]
    %v1794 = vld [vmem:[#allocation3 + $0x2a0] sm:$0xff]
    %v1795 = vld [vmem:[#allocation3 + $0x2a8] sm:$0xff]
    %v1796 = vld [vmem:[#allocation3 + $0x2b0] sm:$0xff]
    %v1797 = vld [vmem:[#allocation3 + $0x2b8] sm:$0xff]
    %v1798 = vld [vmem:[#allocation3 + $0x2c0] sm:$0xff]
    %v1799 = vld [vmem:[#allocation3 + $0x2c8] sm:$0xff]
    %v1800 = vld [vmem:[#allocation3 + $0x2d0] sm:$0xff]
    %v1801 = vld [vmem:[#allocation3 + $0x2d8] sm:$0xff]
    %v1802 = vld [vmem:[#allocation3 + $0x2e0] sm:$0xff]
    %v1803 = vld [vmem:[#allocation3 + $0x2e8] sm:$0xff]
    %v1804 = vld [vmem:[#allocation3 + $0x2f0] sm:$0xff]
    %v1805 = vld [vmem:[#allocation3 + $0x2f8] sm:$0xff]
    %v1806 = vld [vmem:[#allocation3 + $0x300] sm:$0xff]
    %v1807 = vld [vmem:[#allocation3 + $0x308] sm:$0xff]
    %v1808 = vld [vmem:[#allocation3 + $0x310] sm:$0xff]
    %v1809 = vld [vmem:[#allocation3 + $0x318] sm:$0xff]
    %v1810 = vld [vmem:[#allocation3 + $0x320] sm:$0xff]
    %v1811 = vld [vmem:[#allocation3 + $0x328] sm:$0xff]
    %v1812 = vld [vmem:[#allocation3 + $0x330] sm:$0xff]
    %v1813 = vld [vmem:[#allocation3 + $0x338] sm:$0xff]
    %v1814 = vld [vmem:[#allocation3 + $0x340] sm:$0xff]
    %v1815 = vld [vmem:[#allocation3 + $0x348] sm:$0xff]
    %v1816 = vld [vmem:[#allocation3 + $0x350] sm:$0xff]
    %v1817 = vld [vmem:[#allocation3 + $0x358] sm:$0xff]
    %v1818 = vld [vmem:[#allocation3 + $0x360] sm:$0xff]
    %v1819 = vld [vmem:[#allocation3 + $0x368] sm:$0xff]
    %v1820 = vld [vmem:[#allocation3 + $0x370] sm:$0xff]
    %v1821 = vld [vmem:[#allocation3 + $0x378] sm:$0xff]
    %v1822 = vld [vmem:[#allocation3 + $0x380] sm:$0xff]
    %v1823 = vld [vmem:[#allocation3 + $0x388] sm:$0xff]
    %v1824 = vld [vmem:[#allocation3 + $0x390] sm:$0xff]
    %v1825 = vld [vmem:[#allocation3 + $0x398] sm:$0xff]
    %v1826 = vld [vmem:[#allocation3 + $0x3a0] sm:$0xff]
    %v1827 = vld [vmem:[#allocation3 + $0x3a8] sm:$0xff]
    %v1828 = vld [vmem:[#allocation3 + $0x3b0] sm:$0xff]
    %v1829 = vld [vmem:[#allocation3 + $0x3b8] sm:$0xff]
    %v1830 = vld [vmem:[#allocation3 + $0x3c0] sm:$0xff]
    %v1831 = vld [vmem:[#allocation3 + $0x3c8] sm:$0xff]
    %v1832 = vld [vmem:[#allocation3 + $0x3d0] sm:$0xff]
    %v1833 = vld [vmem:[#allocation3 + $0x3d8] sm:$0xff]
    %v1834 = vld [vmem:[#allocation3 + $0x3e0] sm:$0xff]
    %v1835 = vld [vmem:[#allocation3 + $0x3e8] sm:$0xff]
    %v1836 = vld [vmem:[#allocation3 + $0x3f0] sm:$0xff]
    %v1837 = vld [vmem:[#allocation3 + $0x3f8] sm:$0xff]
    %v1838 = vld [vmem:[#allocation3 + $0x400] sm:$0xff]
    %v1839 = vld [vmem:[#allocation3 + $0x408] sm:$0xff]
    %v1840 = vld [vmem:[#allocation3 + $0x410] sm:$0xff]
    %v1841 = vld [vmem:[#allocation3 + $0x418] sm:$0xff]
    %v1842 = vld [vmem:[#allocation3 + $0x420] sm:$0xff]
    %v1843 = vld [vmem:[#allocation3 + $0x428] sm:$0xff]
    %v1844 = vld [vmem:[#allocation3 + $0x430] sm:$0xff]
    %v1845 = vld [vmem:[#allocation3 + $0x438] sm:$0xff]
    %v1846 = vld [vmem:[#allocation3 + $0x440] sm:$0xff]
    %v1847 = vld [vmem:[#allocation3 + $0x448] sm:$0xff]
    %v1848 = vld [vmem:[#allocation3 + $0x450] sm:$0xff]
    %v1849 = vld [vmem:[#allocation3 + $0x458] sm:$0xff]
    %v1850 = vld [vmem:[#allocation3 + $0x460] sm:$0xff]
    %v1851 = vld [vmem:[#allocation3 + $0x468] sm:$0xff]
    %v1852 = vld [vmem:[#allocation3 + $0x470] sm:$0xff]
    %v1853 = vld [vmem:[#allocation3 + $0x478] sm:$0xff]
    %v1854 = vld [vmem:[#allocation3 + $0x480] sm:$0xff]
    %v1855 = vld [vmem:[#allocation3 + $0x488] sm:$0xff]
    %v1856 = vld [vmem:[#allocation3 + $0x490] sm:$0xff]
    %v1857 = vld [vmem:[#allocation3 + $0x498] sm:$0xff]
    %v1858 = vld [vmem:[#allocation3 + $0x4a0] sm:$0xff]
    %v1859 = vld [vmem:[#allocation3 + $0x4a8] sm:$0xff]
    %v1860 = vld [vmem:[#allocation3 + $0x4b0] sm:$0xff]
    %v1861 = vld [vmem:[#allocation3 + $0x4b8] sm:$0xff]
    %v1862 = vld [vmem:[#allocation3 + $0x4c0] sm:$0xff]
    %v1863 = vld [vmem:[#allocation3 + $0x4c8] sm:$0xff]
    %v1864 = vld [vmem:[#allocation3 + $0x4d0] sm:$0xff]
    %v1865 = vld [vmem:[#allocation3 + $0x4d8] sm:$0xff]
    %v1866 = vld [vmem:[#allocation3 + $0x4e0] sm:$0xff]
    %v1867 = vld [vmem:[#allocation3 + $0x4e8] sm:$0xff]
    %v1868 = vld [vmem:[#allocation3 + $0x4f0] sm:$0xff]
    %v1869 = vld [vmem:[#allocation3 + $0x4f8] sm:$0xff]
    %v1870 = vld [vmem:[#allocation3 + $0x500] sm:$0xff]
    %v1871 = vld [vmem:[#allocation3 + $0x508] sm:$0xff]
    %v1872 = vld [vmem:[#allocation3 + $0x510] sm:$0xff]
    %v1873 = vld [vmem:[#allocation3 + $0x518] sm:$0xff]
    %v1874 = vld [vmem:[#allocation3 + $0x520] sm:$0xff]
    %v1875 = vld [vmem:[#allocation3 + $0x528] sm:$0xff]
    %v1876 = vld [vmem:[#allocation3 + $0x530] sm:$0xff]
    %v1877 = vld [vmem:[#allocation3 + $0x538] sm:$0xff]
    %v1878 = vld [vmem:[#allocation3 + $0x540] sm:$0xff]
    %v1879 = vld [vmem:[#allocation3 + $0x548] sm:$0xff]
    %v1880 = vld [vmem:[#allocation3 + $0x550] sm:$0xff]
    %v1881 = vld [vmem:[#allocation3 + $0x558] sm:$0xff]
    %v1882 = vld [vmem:[#allocation3 + $0x560] sm:$0xff]
    %v1883 = vld [vmem:[#allocation3 + $0x568] sm:$0xff]
    %v1884 = vld [vmem:[#allocation3 + $0x570] sm:$0xff]
    %v1885 = vld [vmem:[#allocation3 + $0x578] sm:$0xff]
    %v1886 = vld [vmem:[#allocation3 + $0x580] sm:$0xff]
    %v1887 = vld [vmem:[#allocation3 + $0x588] sm:$0xff]
    %v1888 = vld [vmem:[#allocation3 + $0x590] sm:$0xff]
    %v1889 = vld [vmem:[#allocation3 + $0x598] sm:$0xff]
    %v1890 = vld [vmem:[#allocation3 + $0x5a0] sm:$0xff]
    %v1891 = vld [vmem:[#allocation3 + $0x5a8] sm:$0xff]
    %v1892 = vld [vmem:[#allocation3 + $0x5b0] sm:$0xff]
    %v1893 = vld [vmem:[#allocation3 + $0x5b8] sm:$0xff]
    %v1894 = vld [vmem:[#allocation3 + $0x5c0] sm:$0xff]
    %v1895 = vld [vmem:[#allocation3 + $0x5c8] sm:$0xff]
    %v1896 = vld [vmem:[#allocation3 + $0x5d0] sm:$0xff]
    %v1897 = vld [vmem:[#allocation3 + $0x5d8] sm:$0xff]
    %v1898 = vld [vmem:[#allocation3 + $0x5e0] sm:$0xff]
    %v1899 = vld [vmem:[#allocation3 + $0x5e8] sm:$0xff]
    %v1900 = vld [vmem:[#allocation3 + $0x5f0] sm:$0xff]
    %v1901 = vld [vmem:[#allocation3 + $0x5f8] sm:$0xff]
    %v1902 = vld [vmem:[#allocation3 + $0x600] sm:$0xff]
    %v1903 = vld [vmem:[#allocation3 + $0x608] sm:$0xff]
    %v1904 = vld [vmem:[#allocation3 + $0x610] sm:$0xff]
    %v1905 = vld [vmem:[#allocation3 + $0x618] sm:$0xff]
    %v1906 = vld [vmem:[#allocation3 + $0x620] sm:$0xff]
    %v1907 = vld [vmem:[#allocation3 + $0x628] sm:$0xff]
    %v1908 = vld [vmem:[#allocation3 + $0x630] sm:$0xff]
    %v1909 = vld [vmem:[#allocation3 + $0x638] sm:$0xff]
    %v1910 = vld [vmem:[#allocation3 + $0x640] sm:$0xff]
    %v1911 = vld [vmem:[#allocation3 + $0x648] sm:$0xff]
    %v1912 = vld [vmem:[#allocation3 + $0x650] sm:$0xff]
    %v1913 = vld [vmem:[#allocation3 + $0x658] sm:$0xff]
    %v1914 = vld [vmem:[#allocation3 + $0x660] sm:$0xff]
    %v1915 = vld [vmem:[#allocation3 + $0x668] sm:$0xff]
    %v1916 = vld [vmem:[#allocation3 + $0x670] sm:$0xff]
    %v1917 = vld [vmem:[#allocation3 + $0x678] sm:$0xff]
    %v1918 = vld [vmem:[#allocation3 + $0x680] sm:$0xff]
    %v1919 = vld [vmem:[#allocation3 + $0x688] sm:$0xff]
    %v1920 = vld [vmem:[#allocation3 + $0x690] sm:$0xff]
    %v1921 = vld [vmem:[#allocation3 + $0x698] sm:$0xff]
    %v1922 = vld [vmem:[#allocation3 + $0x6a0] sm:$0xff]
    %v1923 = vld [vmem:[#allocation3 + $0x6a8] sm:$0xff]
    %v1924 = vld [vmem:[#allocation3 + $0x6b0] sm:$0xff]
    %v1925 = vld [vmem:[#allocation3 + $0x6b8] sm:$0xff]
    %v1926 = vld [vmem:[#allocation3 + $0x6c0] sm:$0xff]
    %v1927 = vld [vmem:[#allocation3 + $0x6c8] sm:$0xff]
    %v1928 = vld [vmem:[#allocation3 + $0x6d0] sm:$0xff]
    %v1929 = vld [vmem:[#allocation3 + $0x6d8] sm:$0xff]
    %v1930 = vld [vmem:[#allocation3 + $0x6e0] sm:$0xff]
    %v1931 = vld [vmem:[#allocation3 + $0x6e8] sm:$0xff]
    %v1932 = vld [vmem:[#allocation3 + $0x6f0] sm:$0xff]
    %v1933 = vld [vmem:[#allocation3 + $0x6f8] sm:$0xff]
    %v1934 = vld [vmem:[#allocation3 + $0x700] sm:$0xff]
    %v1935 = vld [vmem:[#allocation3 + $0x708] sm:$0xff]
    %v1936 = vld [vmem:[#allocation3 + $0x710] sm:$0xff]
    %v1937 = vld [vmem:[#allocation3 + $0x718] sm:$0xff]
    %v1938 = vld [vmem:[#allocation3 + $0x720] sm:$0xff]
    %v1939 = vld [vmem:[#allocation3 + $0x728] sm:$0xff]
    %v1940 = vld [vmem:[#allocation3 + $0x730] sm:$0xff]
    %v1941 = vld [vmem:[#allocation3 + $0x738] sm:$0xff]
    %v1942 = vld [vmem:[#allocation3 + $0x740] sm:$0xff]
    %v1943 = vld [vmem:[#allocation3 + $0x748] sm:$0xff]
    %v1944 = vld [vmem:[#allocation3 + $0x750] sm:$0xff]
    %v1945 = vld [vmem:[#allocation3 + $0x758] sm:$0xff]
    %v1946 = vld [vmem:[#allocation3 + $0x760] sm:$0xff]
    %v1947 = vld [vmem:[#allocation3 + $0x768] sm:$0xff]
    %v1948 = vld [vmem:[#allocation3 + $0x770] sm:$0xff]
    %v1949 = vld [vmem:[#allocation3 + $0x778] sm:$0xff]
    %v1950 = vld [vmem:[#allocation3 + $0x780] sm:$0xff]
    %v1951 = vld [vmem:[#allocation3 + $0x788] sm:$0xff]
    %v1952 = vld [vmem:[#allocation3 + $0x790] sm:$0xff]
    %v1953 = vld [vmem:[#allocation3 + $0x798] sm:$0xff]
    %v1954 = vld [vmem:[#allocation3 + $0x7a0] sm:$0xff]
    %v1955 = vld [vmem:[#allocation3 + $0x7a8] sm:$0xff]
    %v1956 = vld [vmem:[#allocation3 + $0x7b0] sm:$0xff]
    %v1957 = vld [vmem:[#allocation3 + $0x7b8] sm:$0xff]
    %v1958 = vld [vmem:[#allocation3 + $0x7c0] sm:$0xff]
    %v1959 = vld [vmem:[#allocation3 + $0x7c8] sm:$0xff]
    %v1960 = vld [vmem:[#allocation3 + $0x7d0] sm:$0xff]
    %v1961 = vld [vmem:[#allocation3 + $0x7d8] sm:$0xff]
    %v1962 = vld [vmem:[#allocation3 + $0x7e0] sm:$0xff]
    %v1963 = vld [vmem:[#allocation3 + $0x7e8] sm:$0xff]
    %v1964 = vld [vmem:[#allocation3 + $0x7f0] sm:$0xff]
    %v1965 = vld [vmem:[#allocation3 + $0x7f8] sm:$0xff]
    %v1966 = vld [vmem:[#allocation3 + $0x800] sm:$0xff]
    %v1967 = vld [vmem:[#allocation3 + $0x808] sm:$0xff]
    %v1968 = vld [vmem:[#allocation3 + $0x810] sm:$0xff]
    %v1969 = vld [vmem:[#allocation3 + $0x818] sm:$0xff]
    %v1970 = vld [vmem:[#allocation3 + $0x820] sm:$0xff]
    %v1971 = vld [vmem:[#allocation3 + $0x828] sm:$0xff]
    %v1972 = vld [vmem:[#allocation3 + $0x830] sm:$0xff]
    %v1973 = vld [vmem:[#allocation3 + $0x838] sm:$0xff]
    %v1974 = vld [vmem:[#allocation3 + $0x840] sm:$0xff]
    %v1975 = vld [vmem:[#allocation3 + $0x848] sm:$0xff]
    %v1976 = vld [vmem:[#allocation3 + $0x850] sm:$0xff]
    %v1977 = vld [vmem:[#allocation3 + $0x858] sm:$0xff]
    %v1978 = vld [vmem:[#allocation3 + $0x860] sm:$0xff]
    %v1979 = vld [vmem:[#allocation3 + $0x868] sm:$0xff]
    %v1980 = vld [vmem:[#allocation3 + $0x870] sm:$0xff]
    %v1981 = vld [vmem:[#allocation3 + $0x878] sm:$0xff]
    %v1982 = vld [vmem:[#allocation3 + $0x880] sm:$0xff]
    %v1983 = vld [vmem:[#allocation3 + $0x888] sm:$0xff]
    %v1984 = vld [vmem:[#allocation3 + $0x890] sm:$0xff]
    %v1985 = vld [vmem:[#allocation3 + $0x898] sm:$0xff]
    %v1986 = vld [vmem:[#allocation3 + $0x8a0] sm:$0xff]
    %v1987 = vld [vmem:[#allocation3 + $0x8a8] sm:$0xff]
    %v1988 = vld [vmem:[#allocation3 + $0x8b0] sm:$0xff]
    %v1989 = vld [vmem:[#allocation3 + $0x8b8] sm:$0xff]
    %v1990 = vld [vmem:[#allocation3 + $0x8c0] sm:$0xff]
    %v1991 = vld [vmem:[#allocation3 + $0x8c8] sm:$0xff]
    %v1992 = vld [vmem:[#allocation3 + $0x8d0] sm:$0xff]
    %v1993 = vld [vmem:[#allocation3 + $0x8d8] sm:$0xff]
    %v1994 = vld [vmem:[#allocation3 + $0x8e0] sm:$0xff]
    %v1995 = vld [vmem:[#allocation3 + $0x8e8] sm:$0xff]
    %v1996 = vld [vmem:[#allocation3 + $0x8f0] sm:$0xff]
    %v1997 = vld [vmem:[#allocation3 + $0x8f8] sm:$0xff]
    %v1998 = vld [vmem:[#allocation3 + $0x900] sm:$0xff]
    %v1999 = vld [vmem:[#allocation3 + $0x908] sm:$0xff]
    %v2000 = vld [vmem:[#allocation3 + $0x910] sm:$0xff]
    %v2001 = vld [vmem:[#allocation3 + $0x918] sm:$0xff]
    %v2002 = vld [vmem:[#allocation3 + $0x920] sm:$0xff]
    %v2003 = vld [vmem:[#allocation3 + $0x928] sm:$0xff]
    %v2004 = vld [vmem:[#allocation3 + $0x930] sm:$0xff]
    %v2005 = vld [vmem:[#allocation3 + $0x938] sm:$0xff]
    %v2006 = vld [vmem:[#allocation3 + $0x940] sm:$0xff]
    %v2007 = vld [vmem:[#allocation3 + $0x948] sm:$0xff]
    %v2008 = vld [vmem:[#allocation3 + $0x950] sm:$0xff]
    %v2009 = vld [vmem:[#allocation3 + $0x958] sm:$0xff]
    %v2010 = vld [vmem:[#allocation3 + $0x960] sm:$0xff]
    %v2011 = vld [vmem:[#allocation3 + $0x968] sm:$0xff]
    %v2012 = vld [vmem:[#allocation3 + $0x970] sm:$0xff]
    %v2013 = vld [vmem:[#allocation3 + $0x978] sm:$0xff]
    %v2014 = vld [vmem:[#allocation3 + $0x980] sm:$0xff]
    %v2015 = vld [vmem:[#allocation3 + $0x988] sm:$0xff]
    %v2016 = vld [vmem:[#allocation3 + $0x990] sm:$0xff]
    %v2017 = vld [vmem:[#allocation3 + $0x998] sm:$0xff]
    %v2018 = vld [vmem:[#allocation3 + $0x9a0] sm:$0xff]
    %v2019 = vld [vmem:[#allocation3 + $0x9a8] sm:$0xff]
    %v2020 = vld [vmem:[#allocation3 + $0x9b0] sm:$0xff]
    %v2021 = vld [vmem:[#allocation3 + $0x9b8] sm:$0xff]
    %v2022 = vld [vmem:[#allocation3 + $0x9c0] sm:$0xff]
    %v2023 = vld [vmem:[#allocation3 + $0x9c8] sm:$0xff]
    %v2024 = vld [vmem:[#allocation3 + $0x9d0] sm:$0xff]
    %v2025 = vld [vmem:[#allocation3 + $0x9d8] sm:$0xff]
    %v2026 = vld [vmem:[#allocation3 + $0x9e0] sm:$0xff]
    %v2027 = vld [vmem:[#allocation3 + $0x9e8] sm:$0xff]
    %v2028 = vld [vmem:[#allocation3 + $0x9f0] sm:$0xff]
    %v2029 = vld [vmem:[#allocation3 + $0x9f8] sm:$0xff]
    %v2030 = vld [vmem:[#allocation3 + $0xa00] sm:$0xff]
    %v2031 = vld [vmem:[#allocation3 + $0xa08] sm:$0xff]
    %v2032 = vld [vmem:[#allocation3 + $0xa10] sm:$0xff]
    %v2033 = vld [vmem:[#allocation3 + $0xa18] sm:$0xff]
    %v2034 = vld [vmem:[#allocation3 + $0xa20] sm:$0xff]
    %v2035 = vld [vmem:[#allocation3 + $0xa28] sm:$0xff]
    %v2036 = vld [vmem:[#allocation3 + $0xa30] sm:$0xff]
    %v2037 = vld [vmem:[#allocation3 + $0xa38] sm:$0xff]
    %v2038 = vld [vmem:[#allocation3 + $0xa40] sm:$0xff]
    %v2039 = vld [vmem:[#allocation3 + $0xa48] sm:$0xff]
    %v2040 = vld [vmem:[#allocation3 + $0xa50] sm:$0xff]
    %v2041 = vld [vmem:[#allocation3 + $0xa58] sm:$0xff]
    %v2042 = vld [vmem:[#allocation3 + $0xa60] sm:$0xff]
    %v2043 = vld [vmem:[#allocation3 + $0xa68] sm:$0xff]
    %v2044 = vld [vmem:[#allocation3 + $0xa70] sm:$0xff]
    %v2045 = vld [vmem:[#allocation3 + $0xa78] sm:$0xff]
    %v2046 = vld [vmem:[#allocation3 + $0xa80] sm:$0xff]
    %v2047 = vld [vmem:[#allocation3 + $0xa88] sm:$0xff]
    %v2048 = vld [vmem:[#allocation3 + $0xa90] sm:$0xff]
    %v2049 = vld [vmem:[#allocation3 + $0xa98] sm:$0xff]
    %v2050 = vld [vmem:[#allocation3 + $0xaa0] sm:$0xff]
    %v2051 = vld [vmem:[#allocation3 + $0xaa8] sm:$0xff]
    %v2052 = vld [vmem:[#allocation3 + $0xab0] sm:$0xff]
    %v2053 = vld [vmem:[#allocation3 + $0xab8] sm:$0xff]
    %v2054 = vld [vmem:[#allocation3 + $0xac0] sm:$0xff]
    %v2055 = vld [vmem:[#allocation3 + $0xac8] sm:$0xff]
    %v2056 = vld [vmem:[#allocation3 + $0xad0] sm:$0xff]
    %v2057 = vld [vmem:[#allocation3 + $0xad8] sm:$0xff]
    %v2058 = vld [vmem:[#allocation3 + $0xae0] sm:$0xff]
    %v2059 = vld [vmem:[#allocation3 + $0xae8] sm:$0xff]
    %v2060 = vld [vmem:[#allocation3 + $0xaf0] sm:$0xff]
    %v2061 = vld [vmem:[#allocation3 + $0xaf8] sm:$0xff]
    %v2062 = vld [vmem:[#allocation3 + $0xb00] sm:$0xff]
    %v2063 = vld [vmem:[#allocation3 + $0xb08] sm:$0xff]
    %v2064 = vld [vmem:[#allocation3 + $0xb10] sm:$0xff]
    %v2065 = vld [vmem:[#allocation3 + $0xb18] sm:$0xff]
    %v2066 = vld [vmem:[#allocation3 + $0xb20] sm:$0xff]
    %v2067 = vld [vmem:[#allocation3 + $0xb28] sm:$0xff]
    %v2068 = vld [vmem:[#allocation3 + $0xb30] sm:$0xff]
    %v2069 = vld [vmem:[#allocation3 + $0xb38] sm:$0xff]
    %v2070 = vld [vmem:[#allocation3 + $0xb40] sm:$0xff]
    %v2071 = vld [vmem:[#allocation3 + $0xb48] sm:$0xff]
    %v2072 = vld [vmem:[#allocation3 + $0xb50] sm:$0xff]
    %v2073 = vld [vmem:[#allocation3 + $0xb58] sm:$0xff]
    %v2074 = vld [vmem:[#allocation3 + $0xb60] sm:$0xff]
    %v2075 = vld [vmem:[#allocation3 + $0xb68] sm:$0xff]
    %v2076 = vld [vmem:[#allocation3 + $0xb70] sm:$0xff]
    %v2077 = vld [vmem:[#allocation3 + $0xb78] sm:$0xff]
    %v2078 = vld [vmem:[#allocation3 + $0xb80] sm:$0xff]
    %v2079 = vld [vmem:[#allocation3 + $0xb88] sm:$0xff]
    %v2080 = vld [vmem:[#allocation3 + $0xb90] sm:$0xff]
    %v2081 = vld [vmem:[#allocation3 + $0xb98] sm:$0xff]
    %v2082 = vld [vmem:[#allocation3 + $0xba0] sm:$0xff]
    %v2083 = vld [vmem:[#allocation3 + $0xba8] sm:$0xff]
    %v2084 = vld [vmem:[#allocation3 + $0xbb0] sm:$0xff]
    %v2085 = vld [vmem:[#allocation3 + $0xbb8] sm:$0xff]
    %v2086 = vld [vmem:[#allocation3 + $0xbc0] sm:$0xff]
    %v2087 = vld [vmem:[#allocation3 + $0xbc8] sm:$0xff]
    %v2088 = vld [vmem:[#allocation3 + $0xbd0] sm:$0xff]
    %v2089 = vld [vmem:[#allocation3 + $0xbd8] sm:$0xff]
    %v2090 = vld [vmem:[#allocation3 + $0xbe0] sm:$0xff]
    %v2091 = vld [vmem:[#allocation3 + $0xbe8] sm:$0xff]
    %v2092 = vld [vmem:[#allocation3 + $0xbf0] sm:$0xff]
    %v2093 = vld [vmem:[#allocation3 + $0xbf8] sm:$0xff]
    %v2094 = vld [vmem:[#allocation3 + $0xc00] sm:$0xff]
    %v2095 = vld [vmem:[#allocation3 + $0xc08] sm:$0xff]
    %v2096 = vld [vmem:[#allocation3 + $0xc10] sm:$0xff]
    %v2097 = vld [vmem:[#allocation3 + $0xc18] sm:$0xff]
    %v2098 = vld [vmem:[#allocation3 + $0xc20] sm:$0xff]
    %v2099 = vld [vmem:[#allocation3 + $0xc28] sm:$0xff]
    %v2100 = vld [vmem:[#allocation3 + $0xc30] sm:$0xff]
    %v2101 = vld [vmem:[#allocation3 + $0xc38] sm:$0xff]
    %v2102 = vld [vmem:[#allocation3 + $0xc40] sm:$0xff]
    %v2103 = vld [vmem:[#allocation3 + $0xc48] sm:$0xff]
    %v2104 = vld [vmem:[#allocation3 + $0xc50] sm:$0xff]
    %v2105 = vld [vmem:[#allocation3 + $0xc58] sm:$0xff]
    %v2106 = vld [vmem:[#allocation3 + $0xc60] sm:$0xff]
    %v2107 = vld [vmem:[#allocation3 + $0xc68] sm:$0xff]
    %v2108 = vld [vmem:[#allocation3 + $0xc70] sm:$0xff]
    %v2109 = vld [vmem:[#allocation3 + $0xc78] sm:$0xff]
    %v2110 = vld [vmem:[#allocation3 + $0xc80] sm:$0xff]
    %v2111 = vld [vmem:[#allocation3 + $0xc88] sm:$0xff]
    %v2112 = vld [vmem:[#allocation3 + $0xc90] sm:$0xff]
    %v2113 = vld [vmem:[#allocation3 + $0xc98] sm:$0xff]
    %v2114 = vld [vmem:[#allocation3 + $0xca0] sm:$0xff]
    %v2115 = vld [vmem:[#allocation3 + $0xca8] sm:$0xff]
    %v2116 = vld [vmem:[#allocation3 + $0xcb0] sm:$0xff]
    %v2117 = vld [vmem:[#allocation3 + $0xcb8] sm:$0xff]
    %v2118 = vld [vmem:[#allocation3 + $0xcc0] sm:$0xff]
    %v2119 = vld [vmem:[#allocation3 + $0xcc8] sm:$0xff]
    %v2120 = vld [vmem:[#allocation3 + $0xcd0] sm:$0xff]
    %v2121 = vld [vmem:[#allocation3 + $0xcd8] sm:$0xff]
    %v2122 = vld [vmem:[#allocation3 + $0xce0] sm:$0xff]
    %v2123 = vld [vmem:[#allocation3 + $0xce8] sm:$0xff]
    %v2124 = vld [vmem:[#allocation3 + $0xcf0] sm:$0xff]
    %v2125 = vld [vmem:[#allocation3 + $0xcf8] sm:$0xff]
    %v2126 = vld [vmem:[#allocation3 + $0xd00] sm:$0xff]
    %v2127 = vld [vmem:[#allocation3 + $0xd08] sm:$0xff]
    %v2128 = vld [vmem:[#allocation3 + $0xd10] sm:$0xff]
    %v2129 = vld [vmem:[#allocation3 + $0xd18] sm:$0xff]
    %v2130 = vld [vmem:[#allocation3 + $0xd20] sm:$0xff]
    %v2131 = vld [vmem:[#allocation3 + $0xd28] sm:$0xff]
    %v2132 = vld [vmem:[#allocation3 + $0xd30] sm:$0xff]
    %v2133 = vld [vmem:[#allocation3 + $0xd38] sm:$0xff]
    %v2134 = vld [vmem:[#allocation3 + $0xd40] sm:$0xff]
    %v2135 = vld [vmem:[#allocation3 + $0xd48] sm:$0xff]
    %v2136 = vld [vmem:[#allocation3 + $0xd50] sm:$0xff]
    %v2137 = vld [vmem:[#allocation3 + $0xd58] sm:$0xff]
    %v2138 = vld [vmem:[#allocation3 + $0xd60] sm:$0xff]
    %v2139 = vld [vmem:[#allocation3 + $0xd68] sm:$0xff]
    %v2140 = vld [vmem:[#allocation3 + $0xd70] sm:$0xff]
    %v2141 = vld [vmem:[#allocation3 + $0xd78] sm:$0xff]
    %v2142 = vld [vmem:[#allocation3 + $0xd80] sm:$0xff]
    %v2143 = vld [vmem:[#allocation3 + $0xd88] sm:$0xff]
    %v2144 = vld [vmem:[#allocation3 + $0xd90] sm:$0xff]
    %v2145 = vld [vmem:[#allocation3 + $0xd98] sm:$0xff]
    %v2146 = vld [vmem:[#allocation3 + $0xda0] sm:$0xff]
    %v2147 = vld [vmem:[#allocation3 + $0xda8] sm:$0xff]
    %v2148 = vld [vmem:[#allocation3 + $0xdb0] sm:$0xff]
    %v2149 = vld [vmem:[#allocation3 + $0xdb8] sm:$0xff]
    %v2150 = vld [vmem:[#allocation3 + $0xdc0] sm:$0xff]
    %v2151 = vld [vmem:[#allocation3 + $0xdc8] sm:$0xff]
    %v2152 = vld [vmem:[#allocation3 + $0xdd0] sm:$0xff]
    %v2153 = vld [vmem:[#allocation3 + $0xdd8] sm:$0xff]
    %v2154 = vld [vmem:[#allocation3 + $0xde0] sm:$0xff]
    %v2155 = vld [vmem:[#allocation3 + $0xde8] sm:$0xff]
    %v2156 = vld [vmem:[#allocation3 + $0xdf0] sm:$0xff]
    %v2157 = vld [vmem:[#allocation3 + $0xdf8] sm:$0xff]
    %v2158 = vld [vmem:[#allocation3 + $0xe00] sm:$0xff]
    %v2159 = vld [vmem:[#allocation3 + $0xe08] sm:$0xff]
    %v2160 = vld [vmem:[#allocation3 + $0xe10] sm:$0xff]
    %v2161 = vld [vmem:[#allocation3 + $0xe18] sm:$0xff]
    %v2162 = vld [vmem:[#allocation3 + $0xe20] sm:$0xff]
    %v2163 = vld [vmem:[#allocation3 + $0xe28] sm:$0xff]
    %v2164 = vld [vmem:[#allocation3 + $0xe30] sm:$0xff]
    %v2165 = vld [vmem:[#allocation3 + $0xe38] sm:$0xff]
    %v2166 = vld [vmem:[#allocation3 + $0xe40] sm:$0xff]
    %v2167 = vld [vmem:[#allocation3 + $0xe48] sm:$0xff]
    %v2168 = vld [vmem:[#allocation3 + $0xe50] sm:$0xff]
    %v2169 = vld [vmem:[#allocation3 + $0xe58] sm:$0xff]
    %v2170 = vld [vmem:[#allocation3 + $0xe60] sm:$0xff]
    %v2171 = vld [vmem:[#allocation3 + $0xe68] sm:$0xff]
    %v2172 = vld [vmem:[#allocation3 + $0xe70] sm:$0xff]
    %v2173 = vld [vmem:[#allocation3 + $0xe78] sm:$0xff]
    %v2174 = vld [vmem:[#allocation3 + $0xe80] sm:$0xff]
    %v2175 = vld [vmem:[#allocation3 + $0xe88] sm:$0xff]
    %v2176 = vld [vmem:[#allocation3 + $0xe90] sm:$0xff]
    %v2177 = vld [vmem:[#allocation3 + $0xe98] sm:$0xff]
    %v2178 = vld [vmem:[#allocation3 + $0xea0] sm:$0xff]
    %v2179 = vld [vmem:[#allocation3 + $0xea8] sm:$0xff]
    %v2180 = vld [vmem:[#allocation3 + $0xeb0] sm:$0xff]
    %v2181 = vld [vmem:[#allocation3 + $0xeb8] sm:$0xff]
    %v2182 = vld [vmem:[#allocation3 + $0xec0] sm:$0xff]
    %v2183 = vld [vmem:[#allocation3 + $0xec8] sm:$0xff]
    %v2184 = vld [vmem:[#allocation3 + $0xed0] sm:$0xff]
    %v2185 = vld [vmem:[#allocation3 + $0xed8] sm:$0xff]
    %v2186 = vld [vmem:[#allocation3 + $0xee0] sm:$0xff]
    %v2187 = vld [vmem:[#allocation3 + $0xee8] sm:$0xff]
    %v2188 = vld [vmem:[#allocation3 + $0xef0] sm:$0xff]
    %v2189 = vld [vmem:[#allocation3 + $0xef8] sm:$0xff]
    %v2190 = vld [vmem:[#allocation3 + $0xf00] sm:$0xff]
    %v2191 = vld [vmem:[#allocation3 + $0xf08] sm:$0xff]
    %v2192 = vld [vmem:[#allocation3 + $0xf10] sm:$0xff]
    %v2193 = vld [vmem:[#allocation3 + $0xf18] sm:$0xff]
    %v2194 = vld [vmem:[#allocation3 + $0xf20] sm:$0xff]
    %v2195 = vld [vmem:[#allocation3 + $0xf28] sm:$0xff]
    %v2196 = vld [vmem:[#allocation3 + $0xf30] sm:$0xff]
    %v2197 = vld [vmem:[#allocation3 + $0xf38] sm:$0xff]
    %v2198 = vld [vmem:[#allocation3 + $0xf40] sm:$0xff]
    %v2199 = vld [vmem:[#allocation3 + $0xf48] sm:$0xff]
    %v2200 = vld [vmem:[#allocation3 + $0xf50] sm:$0xff]
    %v2201 = vld [vmem:[#allocation3 + $0xf58] sm:$0xff]
    %v2202 = vld [vmem:[#allocation3 + $0xf60] sm:$0xff]
    %v2203 = vld [vmem:[#allocation3 + $0xf68] sm:$0xff]
    %v2204 = vld [vmem:[#allocation3 + $0xf70] sm:$0xff]
    %v2205 = vld [vmem:[#allocation3 + $0xf78] sm:$0xff]
    %v2206 = vld [vmem:[#allocation3 + $0xf80] sm:$0xff]
    %v2207 = vld [vmem:[#allocation3 + $0xf88] sm:$0xff]
    %v2208 = vld [vmem:[#allocation3 + $0xf90] sm:$0xff]
    %v2209 = vld [vmem:[#allocation3 + $0xf98] sm:$0xff]
    %v2210 = vld [vmem:[#allocation3 + $0xfa0] sm:$0xff]
    %v2211 = vld [vmem:[#allocation3 + $0xfa8] sm:$0xff]
    %v2212 = vld [vmem:[#allocation3 + $0xfb0] sm:$0xff]
    %v2213 = vld [vmem:[#allocation3 + $0xfb8] sm:$0xff]
    %v2214 = vld [vmem:[#allocation3 + $0xfc0] sm:$0xff]
    %v2215 = vld [vmem:[#allocation3 + $0xfc8] sm:$0xff]
    %v2216 = vld [vmem:[#allocation3 + $0xfd0] sm:$0xff]
    %v2217 = vld [vmem:[#allocation3 + $0xfd8] sm:$0xff]
    %v2218 = vld [vmem:[#allocation3 + $0xfe0] sm:$0xff]
    %v2219 = vld [vmem:[#allocation3 + $0xfe8] sm:$0xff]
    %v2220 = vld [vmem:[#allocation3 + $0xff0] sm:$0xff]
    %v2221 = vld [vmem:[#allocation3 + $0xff8] sm:$0xff]
    %v2222 = vld [vmem:[#allocation3 + $0x1000] sm:$0xff]
    %v2223 = vld [vmem:[#allocation3 + $0x1008] sm:$0xff]
    %v2224 = vld [vmem:[#allocation3 + $0x1010] sm:$0xff]
    %v2225 = vld [vmem:[#allocation3 + $0x1018] sm:$0xff]
    %v2226 = vld [vmem:[#allocation3 + $0x1020] sm:$0xff]
    %v2227 = vld [vmem:[#allocation3 + $0x1028] sm:$0xff]
    %v2228 = vld [vmem:[#allocation3 + $0x1030] sm:$0xff]
    %v2229 = vld [vmem:[#allocation3 + $0x1038] sm:$0xff]
    %v2230 = vld [vmem:[#allocation3 + $0x1040] sm:$0xff]
    %v2231 = vld [vmem:[#allocation3 + $0x1048] sm:$0xff]
    %v2232 = vld [vmem:[#allocation3 + $0x1050] sm:$0xff]
    %v2233 = vld [vmem:[#allocation3 + $0x1058] sm:$0xff]
    %v2234 = vld [vmem:[#allocation3 + $0x1060] sm:$0xff]
    %v2235 = vld [vmem:[#allocation3 + $0x1068] sm:$0xff]
    %v2236 = vld [vmem:[#allocation3 + $0x1070] sm:$0xff]
    %v2237 = vld [vmem:[#allocation3 + $0x1078] sm:$0xff]
    %v2238 = vld [vmem:[#allocation3 + $0x1080] sm:$0xff]
    %v2239 = vld [vmem:[#allocation3 + $0x1088] sm:$0xff]
    %v2240 = vld [vmem:[#allocation3 + $0x1090] sm:$0xff]
    %v2241 = vld [vmem:[#allocation3 + $0x1098] sm:$0xff]
    %v2242 = vld [vmem:[#allocation3 + $0x10a0] sm:$0xff]
    %v2243 = vld [vmem:[#allocation3 + $0x10a8] sm:$0xff]
    %v2244 = vld [vmem:[#allocation3 + $0x10b0] sm:$0xff]
    %v2245 = vld [vmem:[#allocation3 + $0x10b8] sm:$0xff]
    %v2246 = vld [vmem:[#allocation3 + $0x10c0] sm:$0xff]
    %v2247 = vld [vmem:[#allocation3 + $0x10c8] sm:$0xff]
    %v2248 = vld [vmem:[#allocation3 + $0x10d0] sm:$0xff]
    %v2249 = vld [vmem:[#allocation3 + $0x10d8] sm:$0xff]
    %v2250 = vld [vmem:[#allocation3 + $0x10e0] sm:$0xff]
    %v2251 = vld [vmem:[#allocation3 + $0x10e8] sm:$0xff]
    %v2252 = vld [vmem:[#allocation3 + $0x10f0] sm:$0xff]
    %v2253 = vld [vmem:[#allocation3 + $0x10f8] sm:$0xff]
    %v2254 = vld [vmem:[#allocation3 + $0x1100] sm:$0xff]
    %v2255 = vld [vmem:[#allocation3 + $0x1108] sm:$0xff]
    %v2256 = vld [vmem:[#allocation3 + $0x1110] sm:$0xff]
    %v2257 = vld [vmem:[#allocation3 + $0x1118] sm:$0xff]
    %v2258 = vld [vmem:[#allocation3 + $0x1120] sm:$0xff]
    %v2259 = vld [vmem:[#allocation3 + $0x1128] sm:$0xff]
    %v2260 = vld [vmem:[#allocation3 + $0x1130] sm:$0xff]
    %v2261 = vld [vmem:[#allocation3 + $0x1138] sm:$0xff]
    %v2262 = vld [vmem:[#allocation3 + $0x1140] sm:$0xff]
    %v2263 = vld [vmem:[#allocation3 + $0x1148] sm:$0xff]
    %v2264 = vld [vmem:[#allocation3 + $0x1150] sm:$0xff]
    %v2265 = vld [vmem:[#allocation3 + $0x1158] sm:$0xff]
    %v2266 = vld [vmem:[#allocation3 + $0x1160] sm:$0xff]
    %v2267 = vld [vmem:[#allocation3 + $0x1168] sm:$0xff]
    %v2268 = vld [vmem:[#allocation3 + $0x1170] sm:$0xff]
    %v2269 = vld [vmem:[#allocation3 + $0x1178] sm:$0xff]
    %v2270 = vld [vmem:[#allocation3 + $0x1180] sm:$0xff]
    %v2271 = vld [vmem:[#allocation3 + $0x1188] sm:$0xff]
    %v2272 = vld [vmem:[#allocation3 + $0x1190] sm:$0xff]
    %v2273 = vld [vmem:[#allocation3 + $0x1198] sm:$0xff]
    %v2274 = vld [vmem:[#allocation3 + $0x11a0] sm:$0xff]
    %v2275 = vld [vmem:[#allocation3 + $0x11a8] sm:$0xff]
    %v2276 = vld [vmem:[#allocation3 + $0x11b0] sm:$0xff]
    %v2277 = vld [vmem:[#allocation3 + $0x11b8] sm:$0xff]
    %v2278 = vld [vmem:[#allocation3 + $0x11c0] sm:$0xff]
    %v2279 = vld [vmem:[#allocation3 + $0x11c8] sm:$0xff]
    %v2280 = vld [vmem:[#allocation3 + $0x11d0] sm:$0xff]
    %v2281 = vld [vmem:[#allocation3 + $0x11d8] sm:$0xff]
    %v2282 = vld [vmem:[#allocation3 + $0x11e0] sm:$0xff]
    %v2283 = vld [vmem:[#allocation3 + $0x11e8] sm:$0xff]
    %v2284 = vld [vmem:[#allocation3 + $0x11f0] sm:$0xff]
    %v2285 = vld [vmem:[#allocation3 + $0x11f8] sm:$0xff]
    %v2286 = vld [vmem:[#allocation3 + $0x1200] sm:$0xff]
    %v2287 = vld [vmem:[#allocation3 + $0x1208] sm:$0xff]
    %v2288 = vld [vmem:[#allocation3 + $0x1210] sm:$0xff]
    %v2289 = vld [vmem:[#allocation3 + $0x1218] sm:$0xff]
    %v2290 = vld [vmem:[#allocation3 + $0x1220] sm:$0xff]
    %v2291 = vld [vmem:[#allocation3 + $0x1228] sm:$0xff]
    %v2292 = vld [vmem:[#allocation3 + $0x1230] sm:$0xff]
    %v2293 = vld [vmem:[#allocation3 + $0x1238] sm:$0xff]
    %v2294 = vld [vmem:[#allocation3 + $0x1240] sm:$0xff]
    %v2295 = vld [vmem:[#allocation3 + $0x1248] sm:$0xff]
    %v2296 = vld [vmem:[#allocation3 + $0x1250] sm:$0xff]
    %v2297 = vld [vmem:[#allocation3 + $0x1258] sm:$0xff]
    %v2298 = vld [vmem:[#allocation3 + $0x1260] sm:$0xff]
    %v2299 = vld [vmem:[#allocation3 + $0x1268] sm:$0xff]
    %v2300 = vld [vmem:[#allocation3 + $0x1270] sm:$0xff]
    %v2301 = vld [vmem:[#allocation3 + $0x1278] sm:$0xff]
    %v2302 = vld [vmem:[#allocation3 + $0x1280] sm:$0xff]
    %v2303 = vld [vmem:[#allocation3 + $0x1288] sm:$0xff]
    %v2304 = vld [vmem:[#allocation3 + $0x1290] sm:$0xff]
    %v2305 = vld [vmem:[#allocation3 + $0x1298] sm:$0xff]
    %v2306 = vld [vmem:[#allocation3 + $0x12a0] sm:$0xff]
    %v2307 = vld [vmem:[#allocation3 + $0x12a8] sm:$0xff]
    %v2308 = vld [vmem:[#allocation3 + $0x12b0] sm:$0xff]
    %v2309 = vld [vmem:[#allocation3 + $0x12b8] sm:$0xff]
    %v2310 = vld [vmem:[#allocation3 + $0x12c0] sm:$0xff]
    %v2311 = vld [vmem:[#allocation3 + $0x12c8] sm:$0xff]
    %v2312 = vld [vmem:[#allocation3 + $0x12d0] sm:$0xff]
    %v2313 = vld [vmem:[#allocation3 + $0x12d8] sm:$0xff]
    %v2314 = vld [vmem:[#allocation3 + $0x12e0] sm:$0xff]
    %v2315 = vld [vmem:[#allocation3 + $0x12e8] sm:$0xff]
    %v2316 = vld [vmem:[#allocation3 + $0x12f0] sm:$0xff]
    %v2317 = vld [vmem:[#allocation3 + $0x12f8] sm:$0xff]
    %v2318 = vld [vmem:[#allocation3 + $0x1300] sm:$0xff]
    %v2319 = vld [vmem:[#allocation3 + $0x1308] sm:$0xff]
    %v2320 = vld [vmem:[#allocation3 + $0x1310] sm:$0xff]
    %v2321 = vld [vmem:[#allocation3 + $0x1318] sm:$0xff]
    %v2322 = vld [vmem:[#allocation3 + $0x1320] sm:$0xff]
    %v2323 = vld [vmem:[#allocation3 + $0x1328] sm:$0xff]
    %v2324 = vld [vmem:[#allocation3 + $0x1330] sm:$0xff]
    %v2325 = vld [vmem:[#allocation3 + $0x1338] sm:$0xff]
    %v2326 = vld [vmem:[#allocation3 + $0x1340] sm:$0xff]
    %v2327 = vld [vmem:[#allocation3 + $0x1348] sm:$0xff]
    %v2328 = vld [vmem:[#allocation3 + $0x1350] sm:$0xff]
    %v2329 = vld [vmem:[#allocation3 + $0x1358] sm:$0xff]
    %v2330 = vld [vmem:[#allocation3 + $0x1360] sm:$0xff]
    %v2331 = vld [vmem:[#allocation3 + $0x1368] sm:$0xff]
    %v2332 = vld [vmem:[#allocation3 + $0x1370] sm:$0xff]
    %v2333 = vld [vmem:[#allocation3 + $0x1378] sm:$0xff]
    %v2334 = vld [vmem:[#allocation3 + $0x1380] sm:$0xff]
    %v2335 = vld [vmem:[#allocation3 + $0x1388] sm:$0xff]
    %v2336 = vld [vmem:[#allocation3 + $0x1390] sm:$0xff]
    %v2337 = vld [vmem:[#allocation3 + $0x1398] sm:$0xff]
    %v2338 = vld [vmem:[#allocation3 + $0x13a0] sm:$0xff]
    %v2339 = vld [vmem:[#allocation3 + $0x13a8] sm:$0xff]
    %v2340 = vld [vmem:[#allocation3 + $0x13b0] sm:$0xff]
    %v2341 = vld [vmem:[#allocation3 + $0x13b8] sm:$0xff]
    %v2342 = vld [vmem:[#allocation3 + $0x13c0] sm:$0xff]
    %v2343 = vld [vmem:[#allocation3 + $0x13c8] sm:$0xff]
    %v2344 = vld [vmem:[#allocation3 + $0x13d0] sm:$0xff]
    %v2345 = vld [vmem:[#allocation3 + $0x13d8] sm:$0xff]
    %v2346 = vld [vmem:[#allocation3 + $0x13e0] sm:$0xff]
    %v2347 = vld [vmem:[#allocation3 + $0x13e8] sm:$0xff]
    %v2348 = vld [vmem:[#allocation3 + $0x13f0] sm:$0xff]
    %v2349 = vld [vmem:[#allocation3 + $0x13f8] sm:$0xff]
    %v2350 = vld [vmem:[#allocation3 + $0x1400] sm:$0xff]
    %v2351 = vld [vmem:[#allocation3 + $0x1408] sm:$0xff]
    %v2352 = vld [vmem:[#allocation3 + $0x1410] sm:$0xff]
    %v2353 = vld [vmem:[#allocation3 + $0x1418] sm:$0xff]
    %v2354 = vld [vmem:[#allocation3 + $0x1420] sm:$0xff]
    %v2355 = vld [vmem:[#allocation3 + $0x1428] sm:$0xff]
    %v2356 = vld [vmem:[#allocation3 + $0x1430] sm:$0xff]
    %v2357 = vld [vmem:[#allocation3 + $0x1438] sm:$0xff]
    %v2358 = vld [vmem:[#allocation3 + $0x1440] sm:$0xff]
    %v2359 = vld [vmem:[#allocation3 + $0x1448] sm:$0xff]
    %v2360 = vld [vmem:[#allocation3 + $0x1450] sm:$0xff]
    %v2361 = vld [vmem:[#allocation3 + $0x1458] sm:$0xff]
    %v2362 = vld [vmem:[#allocation3 + $0x1460] sm:$0xff]
    %v2363 = vld [vmem:[#allocation3 + $0x1468] sm:$0xff]
    %v2364 = vld [vmem:[#allocation3 + $0x1470] sm:$0xff]
    %v2365 = vld [vmem:[#allocation3 + $0x1478] sm:$0xff]
    %v2366 = vld [vmem:[#allocation3 + $0x1480] sm:$0xff]
    %v2367 = vld [vmem:[#allocation3 + $0x1488] sm:$0xff]
    %v2368 = vld [vmem:[#allocation3 + $0x1490] sm:$0xff]
    %v2369 = vld [vmem:[#allocation3 + $0x1498] sm:$0xff]
    %v2370 = vld [vmem:[#allocation3 + $0x14a0] sm:$0xff]
    %v2371 = vld [vmem:[#allocation3 + $0x14a8] sm:$0xff]
    %v2372 = vld [vmem:[#allocation3 + $0x14b0] sm:$0xff]
    %v2373 = vld [vmem:[#allocation3 + $0x14b8] sm:$0xff]
    %v2374 = vld [vmem:[#allocation3 + $0x14c0] sm:$0xff]
    %v2375 = vld [vmem:[#allocation3 + $0x14c8] sm:$0xff]
    %v2376 = vld [vmem:[#allocation3 + $0x14d0] sm:$0xff]
    %v2377 = vld [vmem:[#allocation3 + $0x14d8] sm:$0xff]
    %v2378 = vld [vmem:[#allocation3 + $0x14e0] sm:$0xff]
    %v2379 = vld [vmem:[#allocation3 + $0x14e8] sm:$0xff]
    %v2380 = vld [vmem:[#allocation3 + $0x14f0] sm:$0xff]
    %v2381 = vld [vmem:[#allocation3 + $0x14f8] sm:$0xff]
    %v2382 = vld [vmem:[#allocation3 + $0x1500] sm:$0xff]
    %v2383 = vld [vmem:[#allocation3 + $0x1508] sm:$0xff]
    %v2384 = vld [vmem:[#allocation3 + $0x1510] sm:$0xff]
    %v2385 = vld [vmem:[#allocation3 + $0x1518] sm:$0xff]
    %v2386 = vld [vmem:[#allocation3 + $0x1520] sm:$0xff]
    %v2387 = vld [vmem:[#allocation3 + $0x1528] sm:$0xff]
    %v2388 = vld [vmem:[#allocation3 + $0x1530] sm:$0xff]
    %v2389 = vld [vmem:[#allocation3 + $0x1538] sm:$0xff]
    %v2390 = vld [vmem:[#allocation3 + $0x1540] sm:$0xff]
    %v2391 = vld [vmem:[#allocation3 + $0x1548] sm:$0xff]
    %v2392 = vld [vmem:[#allocation3 + $0x1550] sm:$0xff]
    %v2393 = vld [vmem:[#allocation3 + $0x1558] sm:$0xff]
    %v2394 = vld [vmem:[#allocation3 + $0x1560] sm:$0xff]
    %v2395 = vld [vmem:[#allocation3 + $0x1568] sm:$0xff]
    %v2396 = vld [vmem:[#allocation3 + $0x1570] sm:$0xff]
    %v2397 = vld [vmem:[#allocation3 + $0x1578] sm:$0xff]
    %v2398 = vld [vmem:[#allocation3 + $0x1580] sm:$0xff]
    %v2399 = vld [vmem:[#allocation3 + $0x1588] sm:$0xff]
    %v2400 = vld [vmem:[#allocation3 + $0x1590] sm:$0xff]
    %v2401 = vld [vmem:[#allocation3 + $0x1598] sm:$0xff]
    %v2402 = vld [vmem:[#allocation3 + $0x15a0] sm:$0xff]
    %v2403 = vld [vmem:[#allocation3 + $0x15a8] sm:$0xff]
    %v2404 = vld [vmem:[#allocation3 + $0x15b0] sm:$0xff]
    %v2405 = vld [vmem:[#allocation3 + $0x15b8] sm:$0xff]
    %v2406 = vld [vmem:[#allocation3 + $0x15c0] sm:$0xff]
    %v2407 = vld [vmem:[#allocation3 + $0x15c8] sm:$0xff]
    %v2408 = vld [vmem:[#allocation3 + $0x15d0] sm:$0xff]
    %v2409 = vld [vmem:[#allocation3 + $0x15d8] sm:$0xff]
    %v2410 = vld [vmem:[#allocation3 + $0x15e0] sm:$0xff]
    %v2411 = vld [vmem:[#allocation3 + $0x15e8] sm:$0xff]
    %v2412 = vld [vmem:[#allocation3 + $0x15f0] sm:$0xff]
    %v2413 = vld [vmem:[#allocation3 + $0x15f8] sm:$0xff]
    %v2414 = vld [vmem:[#allocation3 + $0x1600] sm:$0xff]
    %v2415 = vld [vmem:[#allocation3 + $0x1608] sm:$0xff]
    %v2416 = vld [vmem:[#allocation3 + $0x1610] sm:$0xff]
    %v2417 = vld [vmem:[#allocation3 + $0x1618] sm:$0xff]
    %v2418 = vld [vmem:[#allocation3 + $0x1620] sm:$0xff]
    %v2419 = vld [vmem:[#allocation3 + $0x1628] sm:$0xff]
    %v2420 = vld [vmem:[#allocation3 + $0x1630] sm:$0xff]
    %v2421 = vld [vmem:[#allocation3 + $0x1638] sm:$0xff]
    %v2422 = vld [vmem:[#allocation3 + $0x1640] sm:$0xff]
    %v2423 = vld [vmem:[#allocation3 + $0x1648] sm:$0xff]
    %v2424 = vld [vmem:[#allocation3 + $0x1650] sm:$0xff]
    %v2425 = vld [vmem:[#allocation3 + $0x1658] sm:$0xff]
    %v2426 = vld [vmem:[#allocation3 + $0x1660] sm:$0xff]
    %v2427 = vld [vmem:[#allocation3 + $0x1668] sm:$0xff]
    %v2428 = vld [vmem:[#allocation3 + $0x1670] sm:$0xff]
    %v2429 = vld [vmem:[#allocation3 + $0x1678] sm:$0xff]
    %v2430 = vld [vmem:[#allocation3 + $0x1680] sm:$0xff]
    %v2431 = vld [vmem:[#allocation3 + $0x1688] sm:$0xff]
    %v2432 = vld [vmem:[#allocation3 + $0x1690] sm:$0xff]
    %v2433 = vld [vmem:[#allocation3 + $0x1698] sm:$0xff]
    %v2434 = vld [vmem:[#allocation3 + $0x16a0] sm:$0xff]
    %v2435 = vld [vmem:[#allocation3 + $0x16a8] sm:$0xff]
    %v2436 = vld [vmem:[#allocation3 + $0x16b0] sm:$0xff]
    %v2437 = vld [vmem:[#allocation3 + $0x16b8] sm:$0xff]
    %v2438 = vld [vmem:[#allocation3 + $0x16c0] sm:$0xff]
    %v2439 = vld [vmem:[#allocation3 + $0x16c8] sm:$0xff]
    %v2440 = vld [vmem:[#allocation3 + $0x16d0] sm:$0xff]
    %v2441 = vld [vmem:[#allocation3 + $0x16d8] sm:$0xff]
    %v2442 = vld [vmem:[#allocation3 + $0x16e0] sm:$0xff]
    %v2443 = vld [vmem:[#allocation3 + $0x16e8] sm:$0xff]
    %v2444 = vld [vmem:[#allocation3 + $0x16f0] sm:$0xff]
    %v2445 = vld [vmem:[#allocation3 + $0x16f8] sm:$0xff]
    %v2446 = vld [vmem:[#allocation3 + $0x1700] sm:$0xff]
    %v2447 = vld [vmem:[#allocation3 + $0x1708] sm:$0xff]
    %v2448 = vld [vmem:[#allocation3 + $0x1710] sm:$0xff]
    %v2449 = vld [vmem:[#allocation3 + $0x1718] sm:$0xff]
    %v2450 = vld [vmem:[#allocation3 + $0x1720] sm:$0xff]
    %v2451 = vld [vmem:[#allocation3 + $0x1728] sm:$0xff]
    %v2452 = vld [vmem:[#allocation3 + $0x1730] sm:$0xff]
    %v2453 = vld [vmem:[#allocation3 + $0x1738] sm:$0xff]
    %v2454 = vld [vmem:[#allocation3 + $0x1740] sm:$0xff]
    %v2455 = vld [vmem:[#allocation3 + $0x1748] sm:$0xff]
    %v2456 = vld [vmem:[#allocation3 + $0x1750] sm:$0xff]
    %v2457 = vld [vmem:[#allocation3 + $0x1758] sm:$0xff]
    %v2458 = vld [vmem:[#allocation3 + $0x1760] sm:$0xff]
    %v2459 = vld [vmem:[#allocation3 + $0x1768] sm:$0xff]
    %v2460 = vld [vmem:[#allocation3 + $0x1770] sm:$0xff]
    %v2461 = vld [vmem:[#allocation3 + $0x1778] sm:$0xff]
    %v2462 = vld [vmem:[#allocation3 + $0x1780] sm:$0xff]
    %v2463 = vld [vmem:[#allocation3 + $0x1788] sm:$0xff]
    %v2464 = vld [vmem:[#allocation3 + $0x1790] sm:$0xff]
    %v2465 = vld [vmem:[#allocation3 + $0x1798] sm:$0xff]
    %v2466 = vld [vmem:[#allocation3 + $0x17a0] sm:$0xff]
    %v2467 = vld [vmem:[#allocation3 + $0x17a8] sm:$0xff]
    %v2468 = vld [vmem:[#allocation3 + $0x17b0] sm:$0xff]
    %v2469 = vld [vmem:[#allocation3 + $0x17b8] sm:$0xff]
    %v2470 = vld [vmem:[#allocation3 + $0x17c0] sm:$0xff]
    %v2471 = vld [vmem:[#allocation3 + $0x17c8] sm:$0xff]
    %v2472 = vld [vmem:[#allocation3 + $0x17d0] sm:$0xff]
    %v2473 = vld [vmem:[#allocation3 + $0x17d8] sm:$0xff]
    %v2474 = vld [vmem:[#allocation3 + $0x17e0] sm:$0xff]
    %v2475 = vld [vmem:[#allocation3 + $0x17e8] sm:$0xff]
    %v2476 = vld [vmem:[#allocation3 + $0x17f0] sm:$0xff]
    %v2477 = vld [vmem:[#allocation3 + $0x17f8] sm:$0xff]
    %v2478 = vld [vmem:[#allocation3 + $0x1800] sm:$0xff]
    %v2479 = vld [vmem:[#allocation3 + $0x1808] sm:$0xff]
    %v2480 = vld [vmem:[#allocation3 + $0x1810] sm:$0xff]
    %v2481 = vld [vmem:[#allocation3 + $0x1818] sm:$0xff]
    %v2482 = vld [vmem:[#allocation3 + $0x1820] sm:$0xff]
    %v2483 = vld [vmem:[#allocation3 + $0x1828] sm:$0xff]
    %v2484 = vld [vmem:[#allocation3 + $0x1830] sm:$0xff]
    %v2485 = vld [vmem:[#allocation3 + $0x1838] sm:$0xff]
    %v2486 = vld [vmem:[#allocation3 + $0x1840] sm:$0xff]
    %v2487 = vld [vmem:[#allocation3 + $0x1848] sm:$0xff]
    %v2488 = vld [vmem:[#allocation3 + $0x1850] sm:$0xff]
    %v2489 = vld [vmem:[#allocation3 + $0x1858] sm:$0xff]
    %v2490 = vld [vmem:[#allocation3 + $0x1860] sm:$0xff]
    %v2491 = vld [vmem:[#allocation3 + $0x1868] sm:$0xff]
    %v2492 = vld [vmem:[#allocation3 + $0x1870] sm:$0xff]
    %v2493 = vld [vmem:[#allocation3 + $0x1878] sm:$0xff]
    %v2494 = vld [vmem:[#allocation3 + $0x1880] sm:$0xff]
    %v2495 = vld [vmem:[#allocation3 + $0x1888] sm:$0xff]
    %v2496 = vld [vmem:[#allocation3 + $0x1890] sm:$0xff]
    %v2497 = vld [vmem:[#allocation3 + $0x1898] sm:$0xff]
    %v2498 = vld [vmem:[#allocation3 + $0x18a0] sm:$0xff]
    %v2499 = vld [vmem:[#allocation3 + $0x18a8] sm:$0xff]
    %v2500 = vld [vmem:[#allocation3 + $0x18b0] sm:$0xff]
    %v2501 = vld [vmem:[#allocation3 + $0x18b8] sm:$0xff]
    %v2502 = vld [vmem:[#allocation3 + $0x18c0] sm:$0xff]
    %v2503 = vld [vmem:[#allocation3 + $0x18c8] sm:$0xff]
    %v2504 = vld [vmem:[#allocation3 + $0x18d0] sm:$0xff]
    %v2505 = vld [vmem:[#allocation3 + $0x18d8] sm:$0xff]
    %v2506 = vld [vmem:[#allocation3 + $0x18e0] sm:$0xff]
    %v2507 = vld [vmem:[#allocation3 + $0x18e8] sm:$0xff]
    %v2508 = vld [vmem:[#allocation3 + $0x18f0] sm:$0xff]
    %v2509 = vld [vmem:[#allocation3 + $0x18f8] sm:$0xff]
    %v2510 = vld [vmem:[#allocation3 + $0x1900] sm:$0xff]
    %v2511 = vld [vmem:[#allocation3 + $0x1908] sm:$0xff]
    %v2512 = vld [vmem:[#allocation3 + $0x1910] sm:$0xff]
    %v2513 = vld [vmem:[#allocation3 + $0x1918] sm:$0xff]
    %v2514 = vld [vmem:[#allocation3 + $0x1920] sm:$0xff]
    %v2515 = vld [vmem:[#allocation3 + $0x1928] sm:$0xff]
    %v2516 = vld [vmem:[#allocation3 + $0x1930] sm:$0xff]
    %v2517 = vld [vmem:[#allocation3 + $0x1938] sm:$0xff]
    %v2518 = vld [vmem:[#allocation3 + $0x1940] sm:$0xff]
    %v2519 = vld [vmem:[#allocation3 + $0x1948] sm:$0xff]
    %v2520 = vld [vmem:[#allocation3 + $0x1950] sm:$0xff]
    %v2521 = vld [vmem:[#allocation3 + $0x1958] sm:$0xff]
    %v2522 = vld [vmem:[#allocation3 + $0x1960] sm:$0xff]
    %v2523 = vld [vmem:[#allocation3 + $0x1968] sm:$0xff]
    %v2524 = vld [vmem:[#allocation3 + $0x1970] sm:$0xff]
    %v2525 = vld [vmem:[#allocation3 + $0x1978] sm:$0xff]
    %v2526 = vld [vmem:[#allocation3 + $0x1980] sm:$0xff]
    %v2527 = vld [vmem:[#allocation3 + $0x1988] sm:$0xff]
    %v2528 = vld [vmem:[#allocation3 + $0x1990] sm:$0xff]
    %v2529 = vld [vmem:[#allocation3 + $0x1998] sm:$0xff]
    %v2530 = vld [vmem:[#allocation3 + $0x19a0] sm:$0xff]
    %v2531 = vld [vmem:[#allocation3 + $0x19a8] sm:$0xff]
    %v2532 = vld [vmem:[#allocation3 + $0x19b0] sm:$0xff]
    %v2533 = vld [vmem:[#allocation3 + $0x19b8] sm:$0xff]
    %v2534 = vld [vmem:[#allocation3 + $0x19c0] sm:$0xff]
    %v2535 = vld [vmem:[#allocation3 + $0x19c8] sm:$0xff]
    %v2536 = vld [vmem:[#allocation3 + $0x19d0] sm:$0xff]
    %v2537 = vld [vmem:[#allocation3 + $0x19d8] sm:$0xff]
    %v2538 = vld [vmem:[#allocation3 + $0x19e0] sm:$0xff]
    %v2539 = vld [vmem:[#allocation3 + $0x19e8] sm:$0xff]
    %v2540 = vld [vmem:[#allocation3 + $0x19f0] sm:$0xff]
    %v2541 = vld [vmem:[#allocation3 + $0x19f8] sm:$0xff]
    %v2542 = vld [vmem:[#allocation3 + $0x1a00] sm:$0xff]
    %v2543 = vld [vmem:[#allocation3 + $0x1a08] sm:$0xff]
    %v2544 = vld [vmem:[#allocation3 + $0x1a10] sm:$0xff]
    %v2545 = vld [vmem:[#allocation3 + $0x1a18] sm:$0xff]
    %v2546 = vld [vmem:[#allocation3 + $0x1a20] sm:$0xff]
    %v2547 = vld [vmem:[#allocation3 + $0x1a28] sm:$0xff]
    %v2548 = vld [vmem:[#allocation3 + $0x1a30] sm:$0xff]
    %v2549 = vld [vmem:[#allocation3 + $0x1a38] sm:$0xff]
    %v2550 = vld [vmem:[#allocation3 + $0x1a40] sm:$0xff]
    %v2551 = vld [vmem:[#allocation3 + $0x1a48] sm:$0xff]
    %v2552 = vld [vmem:[#allocation3 + $0x1a50] sm:$0xff]
    %v2553 = vld [vmem:[#allocation3 + $0x1a58] sm:$0xff]
    %v2554 = vld [vmem:[#allocation3 + $0x1a60] sm:$0xff]
    %v2555 = vld [vmem:[#allocation3 + $0x1a68] sm:$0xff]
    %v2556 = vld [vmem:[#allocation3 + $0x1a70] sm:$0xff]
    %v2557 = vld [vmem:[#allocation3 + $0x1a78] sm:$0xff]
    %v2558 = vld [vmem:[#allocation3 + $0x1a80] sm:$0xff]
    %v2559 = vld [vmem:[#allocation3 + $0x1a88] sm:$0xff]
    %v2560 = vld [vmem:[#allocation3 + $0x1a90] sm:$0xff]
    %v2561 = vld [vmem:[#allocation3 + $0x1a98] sm:$0xff]
    %v2562 = vld [vmem:[#allocation3 + $0x1aa0] sm:$0xff]
    %v2563 = vld [vmem:[#allocation3 + $0x1aa8] sm:$0xff]
    %v2564 = vld [vmem:[#allocation3 + $0x1ab0] sm:$0xff]
    %v2565 = vld [vmem:[#allocation3 + $0x1ab8] sm:$0xff]
    %v2566 = vld [vmem:[#allocation3 + $0x1ac0] sm:$0xff]
    %v2567 = vld [vmem:[#allocation3 + $0x1ac8] sm:$0xff]
    %v2568 = vld [vmem:[#allocation3 + $0x1ad0] sm:$0xff]
    %v2569 = vld [vmem:[#allocation3 + $0x1ad8] sm:$0xff]
    %v2570 = vld [vmem:[#allocation3 + $0x1ae0] sm:$0xff]
    %v2571 = vld [vmem:[#allocation3 + $0x1ae8] sm:$0xff]
    %v2572 = vld [vmem:[#allocation3 + $0x1af0] sm:$0xff]
    %v2573 = vld [vmem:[#allocation3 + $0x1af8] sm:$0xff]
    %v2574 = vld [vmem:[#allocation3 + $0x1b00] sm:$0xff]
    %v2575 = vld [vmem:[#allocation3 + $0x1b08] sm:$0xff]
    %v2576 = vld [vmem:[#allocation3 + $0x1b10] sm:$0xff]
    %v2577 = vld [vmem:[#allocation3 + $0x1b18] sm:$0xff]
    %v2578 = vld [vmem:[#allocation3 + $0x1b20] sm:$0xff]
    %v2579 = vld [vmem:[#allocation3 + $0x1b28] sm:$0xff]
    %v2580 = vld [vmem:[#allocation3 + $0x1b30] sm:$0xff]
    %v2581 = vld [vmem:[#allocation3 + $0x1b38] sm:$0xff]
    %v2582 = vld [vmem:[#allocation3 + $0x1b40] sm:$0xff]
    %v2583 = vld [vmem:[#allocation3 + $0x1b48] sm:$0xff]
    %v2584 = vld [vmem:[#allocation3 + $0x1b50] sm:$0xff]
    %v2585 = vld [vmem:[#allocation3 + $0x1b58] sm:$0xff]
    %v2586 = vld [vmem:[#allocation3 + $0x1b60] sm:$0xff]
    %v2587 = vld [vmem:[#allocation3 + $0x1b68] sm:$0xff]
    %v2588 = vld [vmem:[#allocation3 + $0x1b70] sm:$0xff]
    %v2589 = vld [vmem:[#allocation3 + $0x1b78] sm:$0xff]
    %v2590 = vld [vmem:[#allocation3 + $0x1b80] sm:$0xff]
    %v2591 = vld [vmem:[#allocation3 + $0x1b88] sm:$0xff]
    %v2592 = vld [vmem:[#allocation3 + $0x1b90] sm:$0xff]
    %v2593 = vld [vmem:[#allocation3 + $0x1b98] sm:$0xff]
    %v2594 = vld [vmem:[#allocation3 + $0x1ba0] sm:$0xff]
    %v2595 = vld [vmem:[#allocation3 + $0x1ba8] sm:$0xff]
    %v2596 = vld [vmem:[#allocation3 + $0x1bb0] sm:$0xff]
    %v2597 = vld [vmem:[#allocation3 + $0x1bb8] sm:$0xff]
    %v2598 = vld [vmem:[#allocation3 + $0x1bc0] sm:$0xff]
    %v2599 = vld [vmem:[#allocation3 + $0x1bc8] sm:$0xff]
    %v2600 = vld [vmem:[#allocation3 + $0x1bd0] sm:$0xff]
    %v2601 = vld [vmem:[#allocation3 + $0x1bd8] sm:$0xff]
    %v2602 = vld [vmem:[#allocation3 + $0x1be0] sm:$0xff]
    %v2603 = vld [vmem:[#allocation3 + $0x1be8] sm:$0xff]
    %v2604 = vld [vmem:[#allocation3 + $0x1bf0] sm:$0xff]
    %v2605 = vld [vmem:[#allocation3 + $0x1bf8] sm:$0xff]
    %v2606 = vld [vmem:[#allocation3 + $0x1c00] sm:$0xff]
    %v2607 = vld [vmem:[#allocation3 + $0x1c08] sm:$0xff]
    %v2608 = vld [vmem:[#allocation3 + $0x1c10] sm:$0xff]
    %v2609 = vld [vmem:[#allocation3 + $0x1c18] sm:$0xff]
    %v2610 = vld [vmem:[#allocation3 + $0x1c20] sm:$0xff]
    %v2611 = vld [vmem:[#allocation3 + $0x1c28] sm:$0xff]
    %v2612 = vld [vmem:[#allocation3 + $0x1c30] sm:$0xff]
    %v2613 = vld [vmem:[#allocation3 + $0x1c38] sm:$0xff]
    %v2614 = vld [vmem:[#allocation3 + $0x1c40] sm:$0xff]
    %v2615 = vld [vmem:[#allocation3 + $0x1c48] sm:$0xff]
    %v2616 = vld [vmem:[#allocation3 + $0x1c50] sm:$0xff]
    %v2617 = vld [vmem:[#allocation3 + $0x1c58] sm:$0xff]
    %v2618 = vld [vmem:[#allocation3 + $0x1c60] sm:$0xff]
    %v2619 = vld [vmem:[#allocation3 + $0x1c68] sm:$0xff]
    %v2620 = vld [vmem:[#allocation3 + $0x1c70] sm:$0xff]
    %v2621 = vld [vmem:[#allocation3 + $0x1c78] sm:$0xff]
    %v2622 = vld [vmem:[#allocation3 + $0x1c80] sm:$0xff]
    %v2623 = vld [vmem:[#allocation3 + $0x1c88] sm:$0xff]
    %v2624 = vld [vmem:[#allocation3 + $0x1c90] sm:$0xff]
    %v2625 = vld [vmem:[#allocation3 + $0x1c98] sm:$0xff]
    %v2626 = vld [vmem:[#allocation3 + $0x1ca0] sm:$0xff]
    %v2627 = vld [vmem:[#allocation3 + $0x1ca8] sm:$0xff]
    %v2628 = vld [vmem:[#allocation3 + $0x1cb0] sm:$0xff]
    %v2629 = vld [vmem:[#allocation3 + $0x1cb8] sm:$0xff]
    %v2630 = vld [vmem:[#allocation3 + $0x1cc0] sm:$0xff]
    %v2631 = vld [vmem:[#allocation3 + $0x1cc8] sm:$0xff]
    %v2632 = vld [vmem:[#allocation3 + $0x1cd0] sm:$0xff]
    %v2633 = vld [vmem:[#allocation3 + $0x1cd8] sm:$0xff]
    %v2634 = vld [vmem:[#allocation3 + $0x1ce0] sm:$0xff]
    %v2635 = vld [vmem:[#allocation3 + $0x1ce8] sm:$0xff]
    %v2636 = vld [vmem:[#allocation3 + $0x1cf0] sm:$0xff]
    %v2637 = vld [vmem:[#allocation3 + $0x1cf8] sm:$0xff]
    %v2638 = vld [vmem:[#allocation3 + $0x1d00] sm:$0xff]
    %v2639 = vld [vmem:[#allocation3 + $0x1d08] sm:$0xff]
    %v2640 = vld [vmem:[#allocation3 + $0x1d10] sm:$0xff]
    %v2641 = vld [vmem:[#allocation3 + $0x1d18] sm:$0xff]
    %v2642 = vld [vmem:[#allocation3 + $0x1d20] sm:$0xff]
    %v2643 = vld [vmem:[#allocation3 + $0x1d28] sm:$0xff]
    %v2644 = vld [vmem:[#allocation3 + $0x1d30] sm:$0xff]
    %v2645 = vld [vmem:[#allocation3 + $0x1d38] sm:$0xff]
    %v2646 = vld [vmem:[#allocation3 + $0x1d40] sm:$0xff]
    %v2647 = vld [vmem:[#allocation3 + $0x1d48] sm:$0xff]
    %v2648 = vld [vmem:[#allocation3 + $0x1d50] sm:$0xff]
    %v2649 = vld [vmem:[#allocation3 + $0x1d58] sm:$0xff]
    %v2650 = vld [vmem:[#allocation3 + $0x1d60] sm:$0xff]
    %v2651 = vld [vmem:[#allocation3 + $0x1d68] sm:$0xff]
    %v2652 = vld [vmem:[#allocation3 + $0x1d70] sm:$0xff]
    %v2653 = vld [vmem:[#allocation3 + $0x1d78] sm:$0xff]
    %v2654 = vld [vmem:[#allocation3 + $0x1d80] sm:$0xff]
    %v2655 = vld [vmem:[#allocation3 + $0x1d88] sm:$0xff]
    %v2656 = vld [vmem:[#allocation3 + $0x1d90] sm:$0xff]
    %v2657 = vld [vmem:[#allocation3 + $0x1d98] sm:$0xff]
    %v2658 = vld [vmem:[#allocation3 + $0x1da0] sm:$0xff]
    %v2659 = vld [vmem:[#allocation3 + $0x1da8] sm:$0xff]
    %v2660 = vld [vmem:[#allocation3 + $0x1db0] sm:$0xff]
    %v2661 = vld [vmem:[#allocation3 + $0x1db8] sm:$0xff]
    %v2662 = vld [vmem:[#allocation3 + $0x1dc0] sm:$0xff]
    %v2663 = vld [vmem:[#allocation3 + $0x1dc8] sm:$0xff]
    %v2664 = vld [vmem:[#allocation3 + $0x1dd0] sm:$0xff]
    %v2665 = vld [vmem:[#allocation3 + $0x1dd8] sm:$0xff]
    %v2666 = vld [vmem:[#allocation3 + $0x1de0] sm:$0xff]
    %v2667 = vld [vmem:[#allocation3 + $0x1de8] sm:$0xff]
    %v2668 = vld [vmem:[#allocation3 + $0x1df0] sm:$0xff]
    %v2669 = vld [vmem:[#allocation3 + $0x1df8] sm:$0xff]
    %v2670 = vld [vmem:[#allocation3 + $0x1e00] sm:$0xff]
    %v2671 = vld [vmem:[#allocation3 + $0x1e08] sm:$0xff]
    %v2672 = vld [vmem:[#allocation3 + $0x1e10] sm:$0xff]
    %v2673 = vld [vmem:[#allocation3 + $0x1e18] sm:$0xff]
    %v2674 = vld [vmem:[#allocation3 + $0x1e20] sm:$0xff]
    %v2675 = vld [vmem:[#allocation3 + $0x1e28] sm:$0xff]
    %v2676 = vld [vmem:[#allocation3 + $0x1e30] sm:$0xff]
    %v2677 = vld [vmem:[#allocation3 + $0x1e38] sm:$0xff]
    %v2678 = vld [vmem:[#allocation3 + $0x1e40] sm:$0xff]
    %v2679 = vld [vmem:[#allocation3 + $0x1e48] sm:$0xff]
    %v2680 = vld [vmem:[#allocation3 + $0x1e50] sm:$0xff]
    %v2681 = vld [vmem:[#allocation3 + $0x1e58] sm:$0xff]
    %v2682 = vld [vmem:[#allocation3 + $0x1e60] sm:$0xff]
    %v2683 = vld [vmem:[#allocation3 + $0x1e68] sm:$0xff]
    %v2684 = vld [vmem:[#allocation3 + $0x1e70] sm:$0xff]
    %v2685 = vld [vmem:[#allocation3 + $0x1e78] sm:$0xff]
    %v2686 = vld [vmem:[#allocation3 + $0x1e80] sm:$0xff]
    %v2687 = vld [vmem:[#allocation3 + $0x1e88] sm:$0xff]
    %v2688 = vld [vmem:[#allocation3 + $0x1e90] sm:$0xff]
    %v2689 = vld [vmem:[#allocation3 + $0x1e98] sm:$0xff]
    %v2690 = vld [vmem:[#allocation3 + $0x1ea0] sm:$0xff]
    %v2691 = vld [vmem:[#allocation3 + $0x1ea8] sm:$0xff]
    %v2692 = vld [vmem:[#allocation3 + $0x1eb0] sm:$0xff]
    %v2693 = vld [vmem:[#allocation3 + $0x1eb8] sm:$0xff]
    %v2694 = vld [vmem:[#allocation3 + $0x1ec0] sm:$0xff]
    %v2695 = vld [vmem:[#allocation3 + $0x1ec8] sm:$0xff]
    %v2696 = vld [vmem:[#allocation3 + $0x1ed0] sm:$0xff]
    %v2697 = vld [vmem:[#allocation3 + $0x1ed8] sm:$0xff]
    %v2698 = vld [vmem:[#allocation3 + $0x1ee0] sm:$0xff]
    %v2699 = vld [vmem:[#allocation3 + $0x1ee8] sm:$0xff]
    %v2700 = vld [vmem:[#allocation3 + $0x1ef0] sm:$0xff]
    %v2701 = vld [vmem:[#allocation3 + $0x1ef8] sm:$0xff]
    %v2702 = vld [vmem:[#allocation3 + $0x1f00] sm:$0xff]
    %v2703 = vld [vmem:[#allocation3 + $0x1f08] sm:$0xff]
    %v2704 = vld [vmem:[#allocation3 + $0x1f10] sm:$0xff]
    %v2705 = vld [vmem:[#allocation3 + $0x1f18] sm:$0xff]
    %v2706 = vld [vmem:[#allocation3 + $0x1f20] sm:$0xff]
    %v2707 = vld [vmem:[#allocation3 + $0x1f28] sm:$0xff]
    %v2708 = vld [vmem:[#allocation3 + $0x1f30] sm:$0xff]
    %v2709 = vld [vmem:[#allocation3 + $0x1f38] sm:$0xff]
    %v2710 = vld [vmem:[#allocation3 + $0x1f40] sm:$0xff]
    %v2711 = vld [vmem:[#allocation3 + $0x1f48] sm:$0xff]
    %v2712 = vld [vmem:[#allocation3 + $0x1f50] sm:$0xff]
    %v2713 = vld [vmem:[#allocation3 + $0x1f58] sm:$0xff]
    %v2714 = vld [vmem:[#allocation3 + $0x1f60] sm:$0xff]
    %v2715 = vld [vmem:[#allocation3 + $0x1f68] sm:$0xff]
    %v2716 = vld [vmem:[#allocation3 + $0x1f70] sm:$0xff]
    %v2717 = vld [vmem:[#allocation3 + $0x1f78] sm:$0xff]
    %v2718 = vld [vmem:[#allocation3 + $0x1f80] sm:$0xff]
    %v2719 = vld [vmem:[#allocation3 + $0x1f88] sm:$0xff]
    %v2720 = vld [vmem:[#allocation3 + $0x1f90] sm:$0xff]
    %v2721 = vld [vmem:[#allocation3 + $0x1f98] sm:$0xff]
    %v2722 = vld [vmem:[#allocation3 + $0x1fa0] sm:$0xff]
    %v2723 = vld [vmem:[#allocation3 + $0x1fa8] sm:$0xff]
    %v2724 = vld [vmem:[#allocation3 + $0x1fb0] sm:$0xff]
    %v2725 = vld [vmem:[#allocation3 + $0x1fb8] sm:$0xff]
    %v2726 = vld [vmem:[#allocation3 + $0x1fc0] sm:$0xff]
    %v2727 = vld [vmem:[#allocation3 + $0x1fc8] sm:$0xff]
    %v2728 = vld [vmem:[#allocation3 + $0x1fd0] sm:$0xff]
    %v2729 = vld [vmem:[#allocation3 + $0x1fd8] sm:$0xff]
    %v2730 = vld [vmem:[#allocation3 + $0x1fe0] sm:$0xff]
    %v2731 = vld [vmem:[#allocation3 + $0x1fe8] sm:$0xff]
    %v2732 = vld [vmem:[#allocation3 + $0x1ff0] sm:$0xff]
    %v2733 = vld [vmem:[#allocation3 + $0x1ff8] sm:$0xff]
    %v2734 = vpack.c.bf16 %v1690, %v1690
    %v2735 = vpack.c.bf16 %v1691, %v1691
    %v2736 = vpack.c.bf16 %v1692, %v1692
    %v2737 = vpack.c.bf16 %v1693, %v1693
    %v2738 = vpack.c.bf16 %v1694, %v1694
    %v2739 = vpack.c.bf16 %v1695, %v1695
    %v2740 = vpack.c.bf16 %v1696, %v1696
    %v2741 = vpack.c.bf16 %v1697, %v1697
    %v2742 = vld [vmem:[#allocation14 + $0x10] sm:$0xff]
    %v2743 = vld [vmem:[#allocation14 + $0x18] sm:$0xff]
    %v2746 = vlaneseq
    %v2747 = vshrl.u32 %v2746, 7
    %v2748 = vsub.s32 0, %v2747
    %v2749 = vrot.slane %v2742, %v2748
    %v2750 = vlaneseq
    %v2751 = vshrl.u32 %v2750, 7
    %v2752 = vsub.s32 1, %v2751
    %v2753 = vrot.slane %v2742, %v2752
    %v2754 = vlaneseq
    %v2755 = vshrl.u32 %v2754, 7
    %v2756 = vsub.s32 2, %v2755
    %v2757 = vrot.slane %v2742, %v2756
    %v2758 = vlaneseq
    %v2759 = vshrl.u32 %v2758, 7
    %v2760 = vsub.s32 3, %v2759
    %v2761 = vrot.slane %v2742, %v2760
    %v2762 = vlaneseq
    %v2763 = vshrl.u32 %v2762, 7
    %v2764 = vsub.s32 4, %v2763
    %v2765 = vrot.slane %v2742, %v2764
    %v2766 = vlaneseq
    %v2767 = vshrl.u32 %v2766, 7
    %v2768 = vsub.s32 5, %v2767
    %v2769 = vrot.slane %v2742, %v2768
    %v2770 = vlaneseq
    %v2771 = vshrl.u32 %v2770, 7
    %v2772 = vsub.s32 6, %v2771
    %v2773 = vrot.slane %v2742, %v2772
    %v2774 = vlaneseq
    %v2775 = vshrl.u32 %v2774, 7
    %v2776 = vsub.s32 7, %v2775
    %v2777 = vrot.slane %v2742, %v2776
    %v2778 = vlaneseq
    %v2779 = vshrl.u32 %v2778, 7
    %v2780 = vsub.s32 0, %v2779
    %v2781 = vrot.slane %v2743, %v2780
    %v2782 = vlaneseq
    %v2783 = vshrl.u32 %v2782, 7
    %v2784 = vsub.s32 1, %v2783
    %v2785 = vrot.slane %v2743, %v2784
    %v2786 = vlaneseq
    %v2787 = vshrl.u32 %v2786, 7
    %v2788 = vsub.s32 2, %v2787
    %v2789 = vrot.slane %v2743, %v2788
    %v2790 = vlaneseq
    %v2791 = vshrl.u32 %v2790, 7
    %v2792 = vsub.s32 3, %v2791
    %v2793 = vrot.slane %v2743, %v2792
    %v2794 = vlaneseq
    %v2795 = vshrl.u32 %v2794, 7
    %v2796 = vsub.s32 4, %v2795
    %v2797 = vrot.slane %v2743, %v2796
    %v2798 = vlaneseq
    %v2799 = vshrl.u32 %v2798, 7
    %v2800 = vsub.s32 5, %v2799
    %v2801 = vrot.slane %v2743, %v2800
    %v2802 = vlaneseq
    %v2803 = vshrl.u32 %v2802, 7
    %v2804 = vsub.s32 6, %v2803
    %v2805 = vrot.slane %v2743, %v2804
    %v2806 = vlaneseq
    %v2807 = vshrl.u32 %v2806, 7
    %v2808 = vsub.s32 7, %v2807
    %v2809 = vrot.slane %v2743, %v2808
    %2826 = vmatprep.subr.bf16.mxu0 %v1711
    %2827 = vmatpush1.bf16.msra.mxu0 %v1710
    %2828 = vmatprep.subr.bf16.mxu0 %v1727
    %2829 = vmatpush1.bf16.msra.mxu0 %v1726
    %2830 = vmatprep.subr.bf16.mxu0 %v1743
    %2831 = vmatpush1.bf16.msra.mxu0 %v1742
    %2832 = vmatprep.subr.bf16.mxu0 %v1759
    %2833 = vmatpush1.bf16.msra.mxu0 %v1758
    %2834 = vmatprep.subr.bf16.mxu0 %v1775
    %2835 = vmatpush1.bf16.msra.mxu0 %v1774
    %2836 = vmatprep.subr.bf16.mxu0 %v1791
    %2837 = vmatpush1.bf16.msra.mxu0 %v1790
    %2838 = vmatprep.subr.bf16.mxu0 %v1807
    %2839 = vmatpush1.bf16.msra.mxu0 %v1806
    %2840 = vmatprep.subr.bf16.mxu0 %v1823
    %2841 = vmatpush1.bf16.msra.mxu0 %v1822
    %2842 = vmatprep.subr.bf16.mxu0 %v1839
    %2843 = vmatpush1.bf16.msra.mxu0 %v1838
    %2844 = vmatprep.subr.bf16.mxu0 %v1855
    %2845 = vmatpush1.bf16.msra.mxu0 %v1854
    %2846 = vmatprep.subr.bf16.mxu0 %v1871
    %2847 = vmatpush1.bf16.msra.mxu0 %v1870
    %2848 = vmatprep.subr.bf16.mxu0 %v1887
    %2849 = vmatpush1.bf16.msra.mxu0 %v1886
    %2850 = vmatprep.subr.bf16.mxu0 %v1903
    %2851 = vmatpush1.bf16.msra.mxu0 %v1902
    %2852 = vmatprep.subr.bf16.mxu0 %v1919
    %2853 = vmatpush1.bf16.msra.mxu0 %v1918
    %2854 = vmatprep.subr.bf16.mxu0 %v1935
    %2855 = vmatpush1.bf16.msra.mxu0 %v1934
    %2856 = vmatprep.subr.bf16.mxu0 %v1951
    %2857 = vmatpush1.bf16.msra.mxu0 %v1950
    %2858 = vmatprep.mubr.bf16.mxu0 %v2735
    %2859 = vmatmul.mubr.bf16.gmra.mrb[0].mxu0 %v2734
    %v2860 = vpop.f32.mrb[0].mxu0
    %v2861 = vadd.f32 %v2749, %v2860
    %v2862 = vpop.f32.mrb[0].mxu0
    %v2863 = vadd.f32 %v2753, %v2862
    %v2864 = vpop.f32.mrb[0].mxu0
    %v2865 = vpop.f32.mrb[0].mxu0
    %2866 = vdwg.mxu0
    %2867 = vmatprep.subr.bf16.mxu0 %v1967
    %2868 = vmatpush1.bf16.msra.mxu0 %v1966
    %2869 = vmatprep.subr.bf16.mxu0 %v1983
    %2870 = vmatpush1.bf16.msra.mxu0 %v1982
    %2871 = vmatprep.subr.bf16.mxu0 %v1999
    %2872 = vmatpush1.bf16.msra.mxu0 %v1998
    %2873 = vmatprep.subr.bf16.mxu0 %v2015
    %2874 = vmatpush1.bf16.msra.mxu0 %v2014
    %2875 = vmatprep.subr.bf16.mxu0 %v2031
    %2876 = vmatpush1.bf16.msra.mxu0 %v2030
    %2877 = vmatprep.subr.bf16.mxu0 %v2047
    %2878 = vmatpush1.bf16.msra.mxu0 %v2046
    %2879 = vmatprep.subr.bf16.mxu0 %v2063
    %2880 = vmatpush1.bf16.msra.mxu0 %v2062
    %2881 = vmatprep.subr.bf16.mxu0 %v2079
    %2882 = vmatpush1.bf16.msra.mxu0 %v2078
    %2883 = vmatprep.subr.bf16.mxu0 %v2095
    %2884 = vmatpush1.bf16.msra.mxu0 %v2094
    %2885 = vmatprep.subr.bf16.mxu0 %v2111
    %2886 = vmatpush1.bf16.msra.mxu0 %v2110
    %2887 = vmatprep.subr.bf16.mxu0 %v2127
    %2888 = vmatpush1.bf16.msra.mxu0 %v2126
    %2889 = vmatprep.subr.bf16.mxu0 %v2143
    %2890 = vmatpush1.bf16.msra.mxu0 %v2142
    %2891 = vmatprep.subr.bf16.mxu0 %v2159
    %2892 = vmatpush1.bf16.msra.mxu0 %v2158
    %2893 = vmatprep.subr.bf16.mxu0 %v2175
    %2894 = vmatpush1.bf16.msra.mxu0 %v2174
    %2895 = vmatprep.subr.bf16.mxu0 %v2191
    %2896 = vmatpush1.bf16.msra.mxu0 %v2190
    %2897 = vmatprep.subr.bf16.mxu0 %v2207
    %2898 = vmatpush1.bf16.msra.mxu0 %v2206
    %2899 = vmatprep.mubr.bf16.mxu0 %v2737
    %2900 = vmatmul.mubr.bf16.gmra.mrb[0].mxu0 %v2736
    %v2901 = vpop.f32.mrb[0].mxu0
    %v2902 = vadd.f32 %v2861, %v2901
    %v2903 = vpop.f32.mrb[0].mxu0
    %v2904 = vadd.f32 %v2863, %v2903
    %v2905 = vpop.f32.mrb[0].mxu0
    %v2906 = vpop.f32.mrb[0].mxu0
    %2907 = vdwg.mxu0
    %2908 = vmatprep.subr.bf16.mxu0 %v2223
    %2909 = vmatpush1.bf16.msra.mxu0 %v2222
    %2910 = vmatprep.subr.bf16.mxu0 %v2239
    %2911 = vmatpush1.bf16.msra.mxu0 %v2238
    %2912 = vmatprep.subr.bf16.mxu0 %v2255
    %2913 = vmatpush1.bf16.msra.mxu0 %v2254
    %2914 = vmatprep.subr.bf16.mxu0 %v2271
    %2915 = vmatpush1.bf16.msra.mxu0 %v2270
    %2916 = vmatprep.subr.bf16.mxu0 %v2287
    %2917 = vmatpush1.bf16.msra.mxu0 %v2286
    %2918 = vmatprep.subr.bf16.mxu0 %v2303
    %2919 = vmatpush1.bf16.msra.mxu0 %v2302
    %2920 = vmatprep.subr.bf16.mxu0 %v2319
    %2921 = vmatpush1.bf16.msra.mxu0 %v2318
    %2922 = vmatprep.subr.bf16.mxu0 %v2335
    %2923 = vmatpush1.bf16.msra.mxu0 %v2334
    %2924 = vmatprep.subr.bf16.mxu0 %v2351
    %2925 = vmatpush1.bf16.msra.mxu0 %v2350
    %2926 = vmatprep.subr.bf16.mxu0 %v2367
    %2927 = vmatpush1.bf16.msra.mxu0 %v2366
    %2928 = vmatprep.subr.bf16.mxu0 %v2383
    %2929 = vmatpush1.bf16.msra.mxu0 %v2382
    %2930 = vmatprep.subr.bf16.mxu0 %v2399
    %2931 = vmatpush1.bf16.msra.mxu0 %v2398
    %2932 = vmatprep.subr.bf16.mxu0 %v2415
    %2933 = vmatpush1.bf16.msra.mxu0 %v2414
    %2934 = vmatprep.subr.bf16.mxu0 %v2431
    %2935 = vmatpush1.bf16.msra.mxu0 %v2430
    %2936 = vmatprep.subr.bf16.mxu0 %v2447
    %2937 = vmatpush1.bf16.msra.mxu0 %v2446
    %2938 = vmatprep.subr.bf16.mxu0 %v2463
    %2939 = vmatpush1.bf16.msra.mxu0 %v2462
    %2940 = vmatprep.mubr.bf16.mxu0 %v2739
    %2941 = vmatmul.mubr.bf16.gmra.mrb[0].mxu0 %v2738
    %v2942 = vpop.f32.mrb[0].mxu0
    %v2943 = vadd.f32 %v2902, %v2942
    %v2944 = vpop.f32.mrb[0].mxu0
    %v2945 = vadd.f32 %v2904, %v2944
    %v2946 = vpop.f32.mrb[0].mxu0
    %v2947 = vpop.f32.mrb[0].mxu0
    %2948 = vdwg.mxu0
    %2949 = vmatprep.subr.bf16.mxu0 %v2479
    %2950 = vmatpush1.bf16.msra.mxu0 %v2478
    %2951 = vmatprep.subr.bf16.mxu0 %v2495
    %2952 = vmatpush1.bf16.msra.mxu0 %v2494
    %2953 = vmatprep.subr.bf16.mxu0 %v2511
    %2954 = vmatpush1.bf16.msra.mxu0 %v2510
    %2955 = vmatprep.subr.bf16.mxu0 %v2527
    %2956 = vmatpush1.bf16.msra.mxu0 %v2526
    %2957 = vmatprep.subr.bf16.mxu0 %v2543
    %2958 = vmatpush1.bf16.msra.mxu0 %v2542
    %2959 = vmatprep.subr.bf16.mxu0 %v2559
    %2960 = vmatpush1.bf16.msra.mxu0 %v2558
    %2961 = vmatprep.subr.bf16.mxu0 %v2575
    %2962 = vmatpush1.bf16.msra.mxu0 %v2574
    %2963 = vmatprep.subr.bf16.mxu0 %v2591
    %2964 = vmatpush1.bf16.msra.mxu0 %v2590
    %2965 = vmatprep.subr.bf16.mxu0 %v2607
    %2966 = vmatpush1.bf16.msra.mxu0 %v2606
    %2967 = vmatprep.subr.bf16.mxu0 %v2623
    %2968 = vmatpush1.bf16.msra.mxu0 %v2622
    %2969 = vmatprep.subr.bf16.mxu0 %v2639
    %2970 = vmatpush1.bf16.msra.mxu0 %v2638
    %2971 = vmatprep.subr.bf16.mxu0 %v2655
    %2972 = vmatpush1.bf16.msra.mxu0 %v2654
    %2973 = vmatprep.subr.bf16.mxu0 %v2671
    %2974 = vmatpush1.bf16.msra.mxu0 %v2670
    %2975 = vmatprep.subr.bf16.mxu0 %v2687
    %2976 = vmatpush1.bf16.msra.mxu0 %v2686
    %2977 = vmatprep.subr.bf16.mxu0 %v2703
    %2978 = vmatpush1.bf16.msra.mxu0 %v2702
    %2979 = vmatprep.subr.bf16.mxu0 %v2719
    %2980 = vmatpush1.bf16.msra.mxu0 %v2718
    %2981 = vmatprep.mubr.bf16.mxu0 %v2741
    %2982 = vmatmul.mubr.bf16.gmra.mrb[0].mxu0 %v2740
    %v2983 = vpop.f32.mrb[0].mxu0
    %v2984 = vadd.f32 %v2943, %v2983
    %v2985 = vpop.f32.mrb[0].mxu0
    %v2986 = vadd.f32 %v2945, %v2985
    %v2987 = vpop.f32.mrb[0].mxu0
    %v2988 = vpop.f32.mrb[0].mxu0
    %2989 = vdwg.mxu0
    %2990 = vmatprep.subr.bf16.mxu0 %v1713
    %2991 = vmatpush1.bf16.msra.mxu0 %v1712
    %2992 = vmatprep.subr.bf16.mxu0 %v1729
    %2993 = vmatpush1.bf16.msra.mxu0 %v1728
    %2994 = vmatprep.subr.bf16.mxu0 %v1745
    %2995 = vmatpush1.bf16.msra.mxu0 %v1744
    %2996 = vmatprep.subr.bf16.mxu0 %v1761
    %2997 = vmatpush1.bf16.msra.mxu0 %v1760
    %2998 = vmatprep.subr.bf16.mxu0 %v1777
    %2999 = vmatpush1.bf16.msra.mxu0 %v1776
    %3000 = vmatprep.subr.bf16.mxu0 %v1793
    %3001 = vmatpush1.bf16.msra.mxu0 %v1792
    %3002 = vmatprep.subr.bf16.mxu0 %v1809
    %3003 = vmatpush1.bf16.msra.mxu0 %v1808
    %3004 = vmatprep.subr.bf16.mxu0 %v1825
    %3005 = vmatpush1.bf16.msra.mxu0 %v1824
    %3006 = vmatprep.subr.bf16.mxu0 %v1841
    %3007 = vmatpush1.bf16.msra.mxu0 %v1840
    %3008 = vmatprep.subr.bf16.mxu0 %v1857
    %3009 = vmatpush1.bf16.msra.mxu0 %v1856
    %3010 = vmatprep.subr.bf16.mxu0 %v1873
    %3011 = vmatpush1.bf16.msra.mxu0 %v1872
    %3012 = vmatprep.subr.bf16.mxu0 %v1889
    %3013 = vmatpush1.bf16.msra.mxu0 %v1888
    %3014 = vmatprep.subr.bf16.mxu0 %v1905
    %3015 = vmatpush1.bf16.msra.mxu0 %v1904
    %3016 = vmatprep.subr.bf16.mxu0 %v1921
    %3017 = vmatpush1.bf16.msra.mxu0 %v1920
    %3018 = vmatprep.subr.bf16.mxu0 %v1937
    %3019 = vmatpush1.bf16.msra.mxu0 %v1936
    %3020 = vmatprep.subr.bf16.mxu0 %v1953
    %3021 = vmatpush1.bf16.msra.mxu0 %v1952
    %3022 = vmatprep.mubr.bf16.mxu0 %v2735
    %3023 = vmatmul.mubr.bf16.gmra.mrb[0].mxu0 %v2734
    %v3024 = vpop.f32.mrb[0].mxu0
    %v3025 = vadd.f32 %v2757, %v3024
    %v3026 = vpop.f32.mrb[0].mxu0
    %v3027 = vadd.f32 %v2761, %v3026
    %v3028 = vpop.f32.mrb[0].mxu0
    %v3029 = vpop.f32.mrb[0].mxu0
    %3030 = vdwg.mxu0
    %3031 = vmatprep.subr.bf16.mxu0 %v1969
    %3032 = vmatpush1.bf16.msra.mxu0 %v1968
    %3033 = vmatprep.subr.bf16.mxu0 %v1985
    %3034 = vmatpush1.bf16.msra.mxu0 %v1984
    %3035 = vmatprep.subr.bf16.mxu0 %v2001
    %3036 = vmatpush1.bf16.msra.mxu0 %v2000
    %3037 = vmatprep.subr.bf16.mxu0 %v2017
    %3038 = vmatpush1.bf16.msra.mxu0 %v2016
    %3039 = vmatprep.subr.bf16.mxu0 %v2033
    %3040 = vmatpush1.bf16.msra.mxu0 %v2032
    %3041 = vmatprep.subr.bf16.mxu0 %v2049
    %3042 = vmatpush1.bf16.msra.mxu0 %v2048
    %3043 = vmatprep.subr.bf16.mxu0 %v2065
    %3044 = vmatpush1.bf16.msra.mxu0 %v2064
    %3045 = vmatprep.subr.bf16.mxu0 %v2081
    %3046 = vmatpush1.bf16.msra.mxu0 %v2080
    %3047 = vmatprep.subr.bf16.mxu0 %v2097
    %3048 = vmatpush1.bf16.msra.mxu0 %v2096
    %3049 = vmatprep.subr.bf16.mxu0 %v2113
    %3050 = vmatpush1.bf16.msra.mxu0 %v2112
    %3051 = vmatprep.subr.bf16.mxu0 %v2129
    %3052 = vmatpush1.bf16.msra.mxu0 %v2128
    %3053 = vmatprep.subr.bf16.mxu0 %v2145
    %3054 = vmatpush1.bf16.msra.mxu0 %v2144
    %3055 = vmatprep.subr.bf16.mxu0 %v2161
    %3056 = vmatpush1.bf16.msra.mxu0 %v2160
    %3057 = vmatprep.subr.bf16.mxu0 %v2177
    %3058 = vmatpush1.bf16.msra.mxu0 %v2176
    %3059 = vmatprep.subr.bf16.mxu0 %v2193
    %3060 = vmatpush1.bf16.msra.mxu0 %v2192
    %3061 = vmatprep.subr.bf16.mxu0 %v2209
    %3062 = vmatpush1.bf16.msra.mxu0 %v2208
    %3063 = vmatprep.mubr.bf16.mxu0 %v2737
    %3064 = vmatmul.mubr.bf16.gmra.mrb[0].mxu0 %v2736
    %v3065 = vpop.f32.mrb[0].mxu0
    %v3066 = vadd.f32 %v3025, %v3065
    %v3067 = vpop.f32.mrb[0].mxu0
    %v3068 = vadd.f32 %v3027, %v3067
    %v3069 = vpop.f32.mrb[0].mxu0
    %v3070 = vpop.f32.mrb[0].mxu0
    %3071 = vdwg.mxu0
    %3072 = vmatprep.subr.bf16.mxu0 %v2225
    %3073 = vmatpush1.bf16.msra.mxu0 %v2224
    %3074 = vmatprep.subr.bf16.mxu0 %v2241
    %3075 = vmatpush1.bf16.msra.mxu0 %v2240
    %3076 = vmatprep.subr.bf16.mxu0 %v2257
    %3077 = vmatpush1.bf16.msra.mxu0 %v2256
    %3078 = vmatprep.subr.bf16.mxu0 %v2273
    %3079 = vmatpush1.bf16.msra.mxu0 %v2272
    %3080 = vmatprep.subr.bf16.mxu0 %v2289
    %3081 = vmatpush1.bf16.msra.mxu0 %v2288
    %3082 = vmatprep.subr.bf16.mxu0 %v2305
    %3083 = vmatpush1.bf16.msra.mxu0 %v2304
    %3084 = vmatprep.subr.bf16.mxu0 %v2321
    %3085 = vmatpush1.bf16.msra.mxu0 %v2320
    %3086 = vmatprep.subr.bf16.mxu0 %v2337
    %3087 = vmatpush1.bf16.msra.mxu0 %v2336
    %3088 = vmatprep.subr.bf16.mxu0 %v2353
    %3089 = vmatpush1.bf16.msra.mxu0 %v2352
    %3090 = vmatprep.subr.bf16.mxu0 %v2369
    %3091 = vmatpush1.bf16.msra.mxu0 %v2368
    %3092 = vmatprep.subr.bf16.mxu0 %v2385
    %3093 = vmatpush1.bf16.msra.mxu0 %v2384
    %3094 = vmatprep.subr.bf16.mxu0 %v2401
    %3095 = vmatpush1.bf16.msra.mxu0 %v2400
    %3096 = vmatprep.subr.bf16.mxu0 %v2417
    %3097 = vmatpush1.bf16.msra.mxu0 %v2416
    %3098 = vmatprep.subr.bf16.mxu0 %v2433
    %3099 = vmatpush1.bf16.msra.mxu0 %v2432
    %3100 = vmatprep.subr.bf16.mxu0 %v2449
    %3101 = vmatpush1.bf16.msra.mxu0 %v2448
    %3102 = vmatprep.subr.bf16.mxu0 %v2465
    %3103 = vmatpush1.bf16.msra.mxu0 %v2464
    %3104 = vmatprep.mubr.bf16.mxu0 %v2739
    %3105 = vmatmul.mubr.bf16.gmra.mrb[0].mxu0 %v2738
    %v3106 = vpop.f32.mrb[0].mxu0
    %v3107 = vadd.f32 %v3066, %v3106
    %v3108 = vpop.f32.mrb[0].mxu0
    %v3109 = vadd.f32 %v3068, %v3108
    %v3110 = vpop.f32.mrb[0].mxu0
    %v3111 = vpop.f32.mrb[0].mxu0
    %3112 = vdwg.mxu0
    %3113 = vmatprep.subr.bf16.mxu0 %v2481
    %3114 = vmatpush1.bf16.msra.mxu0 %v2480
    %3115 = vmatprep.subr.bf16.mxu0 %v2497
    %3116 = vmatpush1.bf16.msra.mxu0 %v2496
    %3117 = vmatprep.subr.bf16.mxu0 %v2513
    %3118 = vmatpush1.bf16.msra.mxu0 %v2512
    %3119 = vmatprep.subr.bf16.mxu0 %v2529
    %3120 = vmatpush1.bf16.msra.mxu0 %v2528
    %3121 = vmatprep.subr.bf16.mxu0 %v2545
    %3122 = vmatpush1.bf16.msra.mxu0 %v2544
    %3123 = vmatprep.subr.bf16.mxu0 %v2561
    %3124 = vmatpush1.bf16.msra.mxu0 %v2560
    %3125 = vmatprep.subr.bf16.mxu0 %v2577
    %3126 = vmatpush1.bf16.msra.mxu0 %v2576
    %3127 = vmatprep.subr.bf16.mxu0 %v2593
    %3128 = vmatpush1.bf16.msra.mxu0 %v2592
    %3129 = vmatprep.subr.bf16.mxu0 %v2609
    %3130 = vmatpush1.bf16.msra.mxu0 %v2608
    %3131 = vmatprep.subr.bf16.mxu0 %v2625
    %3132 = vmatpush1.bf16.msra.mxu0 %v2624
    %3133 = vmatprep.subr.bf16.mxu0 %v2641
    %3134 = vmatpush1.bf16.msra.mxu0 %v2640
    %3135 = vmatprep.subr.bf16.mxu0 %v2657
    %3136 = vmatpush1.bf16.msra.mxu0 %v2656
    %3137 = vmatprep.subr.bf16.mxu0 %v2673
    %3138 = vmatpush1.bf16.msra.mxu0 %v2672
    %3139 = vmatprep.subr.bf16.mxu0 %v2689
    %3140 = vmatpush1.bf16.msra.mxu0 %v2688
    %3141 = vmatprep.subr.bf16.mxu0 %v2705
    %3142 = vmatpush1.bf16.msra.mxu0 %v2704
    %3143 = vmatprep.subr.bf16.mxu0 %v2721
    %3144 = vmatpush1.bf16.msra.mxu0 %v2720
    %3145 = vmatprep.mubr.bf16.mxu0 %v2741
    %3146 = vmatmul.mubr.bf16.gmra.mrb[0].mxu0 %v2740
    %v3147 = vpop.f32.mrb[0].mxu0
    %v3148 = vadd.f32 %v3107, %v3147
    %v3149 = vpop.f32.mrb[0].mxu0
    %v3150 = vadd.f32 %v3109, %v3149
    %v3151 = vpop.f32.mrb[0].mxu0
    %v3152 = vpop.f32.mrb[0].mxu0
    %3153 = vdwg.mxu0
    %3154 = vmatprep.subr.bf16.mxu0 %v1715
    %3155 = vmatpush1.bf16.msra.mxu0 %v1714
    %3156 = vmatprep.subr.bf16.mxu0 %v1731
    %3157 = vmatpush1.bf16.msra.mxu0 %v1730
    %3158 = vmatprep.subr.bf16.mxu0 %v1747
    %3159 = vmatpush1.bf16.msra.mxu0 %v1746
    %3160 = vmatprep.subr.bf16.mxu0 %v1763
    %3161 = vmatpush1.bf16.msra.mxu0 %v1762
    %3162 = vmatprep.subr.bf16.mxu0 %v1779
    %3163 = vmatpush1.bf16.msra.mxu0 %v1778
    %3164 = vmatprep.subr.bf16.mxu0 %v1795
    %3165 = vmatpush1.bf16.msra.mxu0 %v1794
    %3166 = vmatprep.subr.bf16.mxu0 %v1811
    %3167 = vmatpush1.bf16.msra.mxu0 %v1810
    %3168 = vmatprep.subr.bf16.mxu0 %v1827
    %3169 = vmatpush1.bf16.msra.mxu0 %v1826
    %3170 = vmatprep.subr.bf16.mxu0 %v1843
    %3171 = vmatpush1.bf16.msra.mxu0 %v1842
    %3172 = vmatprep.subr.bf16.mxu0 %v1859
    %3173 = vmatpush1.bf16.msra.mxu0 %v1858
    %3174 = vmatprep.subr.bf16.mxu0 %v1875
    %3175 = vmatpush1.bf16.msra.mxu0 %v1874
    %3176 = vmatprep.subr.bf16.mxu0 %v1891
    %3177 = vmatpush1.bf16.msra.mxu0 %v1890
    %3178 = vmatprep.subr.bf16.mxu0 %v1907
    %3179 = vmatpush1.bf16.msra.mxu0 %v1906
    %3180 = vmatprep.subr.bf16.mxu0 %v1923
    %3181 = vmatpush1.bf16.msra.mxu0 %v1922
    %3182 = vmatprep.subr.bf16.mxu0 %v1939
    %3183 = vmatpush1.bf16.msra.mxu0 %v1938
    %3184 = vmatprep.subr.bf16.mxu0 %v1955
    %3185 = vmatpush1.bf16.msra.mxu0 %v1954
    %3186 = vmatprep.mubr.bf16.mxu0 %v2735
    %3187 = vmatmul.mubr.bf16.gmra.mrb[0].mxu0 %v2734
    %v3188 = vpop.f32.mrb[0].mxu0
    %v3189 = vadd.f32 %v2765, %v3188
    %v3190 = vpop.f32.mrb[0].mxu0
    %v3191 = vadd.f32 %v2769, %v3190
    %v3192 = vpop.f32.mrb[0].mxu0
    %v3193 = vpop.f32.mrb[0].mxu0
    %3194 = vdwg.mxu0
    %3195 = vmatprep.subr.bf16.mxu0 %v1971
    %3196 = vmatpush1.bf16.msra.mxu0 %v1970
    %3197 = vmatprep.subr.bf16.mxu0 %v1987
    %3198 = vmatpush1.bf16.msra.mxu0 %v1986
    %3199 = vmatprep.subr.bf16.mxu0 %v2003
    %3200 = vmatpush1.bf16.msra.mxu0 %v2002
    %3201 = vmatprep.subr.bf16.mxu0 %v2019
    %3202 = vmatpush1.bf16.msra.mxu0 %v2018
    %3203 = vmatprep.subr.bf16.mxu0 %v2035
    %3204 = vmatpush1.bf16.msra.mxu0 %v2034
    %3205 = vmatprep.subr.bf16.mxu0 %v2051
    %3206 = vmatpush1.bf16.msra.mxu0 %v2050
    %3207 = vmatprep.subr.bf16.mxu0 %v2067
    %3208 = vmatpush1.bf16.msra.mxu0 %v2066
    %3209 = vmatprep.subr.bf16.mxu0 %v2083
    %3210 = vmatpush1.bf16.msra.mxu0 %v2082
    %3211 = vmatprep.subr.bf16.mxu0 %v2099
    %3212 = vmatpush1.bf16.msra.mxu0 %v2098
    %3213 = vmatprep.subr.bf16.mxu0 %v2115
    %3214 = vmatpush1.bf16.msra.mxu0 %v2114
    %3215 = vmatprep.subr.bf16.mxu0 %v2131
    %3216 = vmatpush1.bf16.msra.mxu0 %v2130
    %3217 = vmatprep.subr.bf16.mxu0 %v2147
    %3218 = vmatpush1.bf16.msra.mxu0 %v2146
    %3219 = vmatprep.subr.bf16.mxu0 %v2163
    %3220 = vmatpush1.bf16.msra.mxu0 %v2162
    %3221 = vmatprep.subr.bf16.mxu0 %v2179
    %3222 = vmatpush1.bf16.msra.mxu0 %v2178
    %3223 = vmatprep.subr.bf16.mxu0 %v2195
    %3224 = vmatpush1.bf16.msra.mxu0 %v2194
    %3225 = vmatprep.subr.bf16.mxu0 %v2211
    %3226 = vmatpush1.bf16.msra.mxu0 %v2210
    %3227 = vmatprep.mubr.bf16.mxu0 %v2737
    %3228 = vmatmul.mubr.bf16.gmra.mrb[0].mxu0 %v2736
    %v3229 = vpop.f32.mrb[0].mxu0
    %v3230 = vadd.f32 %v3189, %v3229
    %v3231 = vpop.f32.mrb[0].mxu0
    %v3232 = vadd.f32 %v3191, %v3231
    %v3233 = vpop.f32.mrb[0].mxu0
    %v3234 = vpop.f32.mrb[0].mxu0
    %3235 = vdwg.mxu0
    %3236 = vmatprep.subr.bf16.mxu0 %v2227
    %3237 = vmatpush1.bf16.msra.mxu0 %v2226
    %3238 = vmatprep.subr.bf16.mxu0 %v2243
    %3239 = vmatpush1.bf16.msra.mxu0 %v2242
    %3240 = vmatprep.subr.bf16.mxu0 %v2259
    %3241 = vmatpush1.bf16.msra.mxu0 %v2258
    %3242 = vmatprep.subr.bf16.mxu0 %v2275
    %3243 = vmatpush1.bf16.msra.mxu0 %v2274
    %3244 = vmatprep.subr.bf16.mxu0 %v2291
    %3245 = vmatpush1.bf16.msra.mxu0 %v2290
    %3246 = vmatprep.subr.bf16.mxu0 %v2307
    %3247 = vmatpush1.bf16.msra.mxu0 %v2306
    %3248 = vmatprep.subr.bf16.mxu0 %v2323
    %3249 = vmatpush1.bf16.msra.mxu0 %v2322
    %3250 = vmatprep.subr.bf16.mxu0 %v2339
    %3251 = vmatpush1.bf16.msra.mxu0 %v2338
    %3252 = vmatprep.subr.bf16.mxu0 %v2355
    %3253 = vmatpush1.bf16.msra.mxu0 %v2354
    %3254 = vmatprep.subr.bf16.mxu0 %v2371
    %3255 = vmatpush1.bf16.msra.mxu0 %v2370
    %3256 = vmatprep.subr.bf16.mxu0 %v2387
    %3257 = vmatpush1.bf16.msra.mxu0 %v2386
    %3258 = vmatprep.subr.bf16.mxu0 %v2403
    %3259 = vmatpush1.bf16.msra.mxu0 %v2402
    %3260 = vmatprep.subr.bf16.mxu0 %v2419
    %3261 = vmatpush1.bf16.msra.mxu0 %v2418
    %3262 = vmatprep.subr.bf16.mxu0 %v2435
    %3263 = vmatpush1.bf16.msra.mxu0 %v2434
    %3264 = vmatprep.subr.bf16.mxu0 %v2451
    %3265 = vmatpush1.bf16.msra.mxu0 %v2450
    %3266 = vmatprep.subr.bf16.mxu0 %v2467
    %3267 = vmatpush1.bf16.msra.mxu0 %v2466
    %3268 = vmatprep.mubr.bf16.mxu0 %v2739
    %3269 = vmatmul.mubr.bf16.gmra.mrb[0].mxu0 %v2738
    %v3270 = vpop.f32.mrb[0].mxu0
    %v3271 = vadd.f32 %v3230, %v3270
    %v3272 = vpop.f32.mrb[0].mxu0
    %v3273 = vadd.f32 %v3232, %v3272
    %v3274 = vpop.f32.mrb[0].mxu0
    %v3275 = vpop.f32.mrb[0].mxu0
    %3276 = vdwg.mxu0
    %3277 = vmatprep.subr.bf16.mxu0 %v2483
    %3278 = vmatpush1.bf16.msra.mxu0 %v2482
    %3279 = vmatprep.subr.bf16.mxu0 %v2499
    %3280 = vmatpush1.bf16.msra.mxu0 %v2498
    %3281 = vmatprep.subr.bf16.mxu0 %v2515
    %3282 = vmatpush1.bf16.msra.mxu0 %v2514
    %3283 = vmatprep.subr.bf16.mxu0 %v2531
    %3284 = vmatpush1.bf16.msra.mxu0 %v2530
    %3285 = vmatprep.subr.bf16.mxu0 %v2547
    %3286 = vmatpush1.bf16.msra.mxu0 %v2546
    %3287 = vmatprep.subr.bf16.mxu0 %v2563
    %3288 = vmatpush1.bf16.msra.mxu0 %v2562
    %3289 = vmatprep.subr.bf16.mxu0 %v2579
    %3290 = vmatpush1.bf16.msra.mxu0 %v2578
    %3291 = vmatprep.subr.bf16.mxu0 %v2595
    %3292 = vmatpush1.bf16.msra.mxu0 %v2594
    %3293 = vmatprep.subr.bf16.mxu0 %v2611
    %3294 = vmatpush1.bf16.msra.mxu0 %v2610
    %3295 = vmatprep.subr.bf16.mxu0 %v2627
    %3296 = vmatpush1.bf16.msra.mxu0 %v2626
    %3297 = vmatprep.subr.bf16.mxu0 %v2643
    %3298 = vmatpush1.bf16.msra.mxu0 %v2642
    %3299 = vmatprep.subr.bf16.mxu0 %v2659
    %3300 = vmatpush1.bf16.msra.mxu0 %v2658
    %3301 = vmatprep.subr.bf16.mxu0 %v2675
    %3302 = vmatpush1.bf16.msra.mxu0 %v2674
    %3303 = vmatprep.subr.bf16.mxu0 %v2691
    %3304 = vmatpush1.bf16.msra.mxu0 %v2690
    %3305 = vmatprep.subr.bf16.mxu0 %v2707
    %3306 = vmatpush1.bf16.msra.mxu0 %v2706
    %3307 = vmatprep.subr.bf16.mxu0 %v2723
    %3308 = vmatpush1.bf16.msra.mxu0 %v2722
    %3309 = vmatprep.mubr.bf16.mxu0 %v2741
    %3310 = vmatmul.mubr.bf16.gmra.mrb[0].mxu0 %v2740
    %v3311 = vpop.f32.mrb[0].mxu0
    %v3312 = vadd.f32 %v3271, %v3311
    %v3313 = vpop.f32.mrb[0].mxu0
    %v3314 = vadd.f32 %v3273, %v3313
    %v3315 = vpop.f32.mrb[0].mxu0
    %v3316 = vpop.f32.mrb[0].mxu0
    %3317 = vdwg.mxu0
    %3318 = vmatprep.subr.bf16.mxu0 %v1717
    %3319 = vmatpush1.bf16.msra.mxu0 %v1716
    %3320 = vmatprep.subr.bf16.mxu0 %v1733
    %3321 = vmatpush1.bf16.msra.mxu0 %v1732
    %3322 = vmatprep.subr.bf16.mxu0 %v1749
    %3323 = vmatpush1.bf16.msra.mxu0 %v1748
    %3324 = vmatprep.subr.bf16.mxu0 %v1765
    %3325 = vmatpush1.bf16.msra.mxu0 %v1764
    %3326 = vmatprep.subr.bf16.mxu0 %v1781
    %3327 = vmatpush1.bf16.msra.mxu0 %v1780
    %3328 = vmatprep.subr.bf16.mxu0 %v1797
    %3329 = vmatpush1.bf16.msra.mxu0 %v1796
    %3330 = vmatprep.subr.bf16.mxu0 %v1813
    %3331 = vmatpush1.bf16.msra.mxu0 %v1812
    %3332 = vmatprep.subr.bf16.mxu0 %v1829
    %3333 = vmatpush1.bf16.msra.mxu0 %v1828
    %3334 = vmatprep.subr.bf16.mxu0 %v1845
    %3335 = vmatpush1.bf16.msra.mxu0 %v1844
    %3336 = vmatprep.subr.bf16.mxu0 %v1861
    %3337 = vmatpush1.bf16.msra.mxu0 %v1860
    %3338 = vmatprep.subr.bf16.mxu0 %v1877
    %3339 = vmatpush1.bf16.msra.mxu0 %v1876
    %3340 = vmatprep.subr.bf16.mxu0 %v1893
    %3341 = vmatpush1.bf16.msra.mxu0 %v1892
    %3342 = vmatprep.subr.bf16.mxu0 %v1909
    %3343 = vmatpush1.bf16.msra.mxu0 %v1908
    %3344 = vmatprep.subr.bf16.mxu0 %v1925
    %3345 = vmatpush1.bf16.msra.mxu0 %v1924
    %3346 = vmatprep.subr.bf16.mxu0 %v1941
    %3347 = vmatpush1.bf16.msra.mxu0 %v1940
    %3348 = vmatprep.subr.bf16.mxu0 %v1957
    %3349 = vmatpush1.bf16.msra.mxu0 %v1956
    %3350 = vmatprep.mubr.bf16.mxu0 %v2735
    %3351 = vmatmul.mubr.bf16.gmra.mrb[0].mxu0 %v2734
    %v3352 = vpop.f32.mrb[0].mxu0
    %v3353 = vadd.f32 %v2773, %v3352
    %v3354 = vpop.f32.mrb[0].mxu0
    %v3355 = vadd.f32 %v2777, %v3354
    %v3356 = vpop.f32.mrb[0].mxu0
    %v3357 = vpop.f32.mrb[0].mxu0
    %3358 = vdwg.mxu0
    %3359 = vmatprep.subr.bf16.mxu0 %v1973
    %3360 = vmatpush1.bf16.msra.mxu0 %v1972
    %3361 = vmatprep.subr.bf16.mxu0 %v1989
    %3362 = vmatpush1.bf16.msra.mxu0 %v1988
    %3363 = vmatprep.subr.bf16.mxu0 %v2005
    %3364 = vmatpush1.bf16.msra.mxu0 %v2004
    %3365 = vmatprep.subr.bf16.mxu0 %v2021
    %3366 = vmatpush1.bf16.msra.mxu0 %v2020
    %3367 = vmatprep.subr.bf16.mxu0 %v2037
    %3368 = vmatpush1.bf16.msra.mxu0 %v2036
    %3369 = vmatprep.subr.bf16.mxu0 %v2053
    %3370 = vmatpush1.bf16.msra.mxu0 %v2052
    %3371 = vmatprep.subr.bf16.mxu0 %v2069
    %3372 = vmatpush1.bf16.msra.mxu0 %v2068
    %3373 = vmatprep.subr.bf16.mxu0 %v2085
    %3374 = vmatpush1.bf16.msra.mxu0 %v2084
    %3375 = vmatprep.subr.bf16.mxu0 %v2101
    %3376 = vmatpush1.bf16.msra.mxu0 %v2100
    %3377 = vmatprep.subr.bf16.mxu0 %v2117
    %3378 = vmatpush1.bf16.msra.mxu0 %v2116
    %3379 = vmatprep.subr.bf16.mxu0 %v2133
    %3380 = vmatpush1.bf16.msra.mxu0 %v2132
    %3381 = vmatprep.subr.bf16.mxu0 %v2149
    %3382 = vmatpush1.bf16.msra.mxu0 %v2148
    %3383 = vmatprep.subr.bf16.mxu0 %v2165
    %3384 = vmatpush1.bf16.msra.mxu0 %v2164
    %3385 = vmatprep.subr.bf16.mxu0 %v2181
    %3386 = vmatpush1.bf16.msra.mxu0 %v2180
    %3387 = vmatprep.subr.bf16.mxu0 %v2197
    %3388 = vmatpush1.bf16.msra.mxu0 %v2196
    %3389 = vmatprep.subr.bf16.mxu0 %v2213
    %3390 = vmatpush1.bf16.msra.mxu0 %v2212
    %3391 = vmatprep.mubr.bf16.mxu0 %v2737
    %3392 = vmatmul.mubr.bf16.gmra.mrb[0].mxu0 %v2736
    %v3393 = vpop.f32.mrb[0].mxu0
    %v3394 = vadd.f32 %v3353, %v3393
    %v3395 = vpop.f32.mrb[0].mxu0
    %v3396 = vadd.f32 %v3355, %v3395
    %v3397 = vpop.f32.mrb[0].mxu0
    %v3398 = vpop.f32.mrb[0].mxu0
    %3399 = vdwg.mxu0
    %3400 = vmatprep.subr.bf16.mxu0 %v2229
    %3401 = vmatpush1.bf16.msra.mxu0 %v2228
    %3402 = vmatprep.subr.bf16.mxu0 %v2245
    %3403 = vmatpush1.bf16.msra.mxu0 %v2244
    %3404 = vmatprep.subr.bf16.mxu0 %v2261
    %3405 = vmatpush1.bf16.msra.mxu0 %v2260
    %3406 = vmatprep.subr.bf16.mxu0 %v2277
    %3407 = vmatpush1.bf16.msra.mxu0 %v2276
    %3408 = vmatprep.subr.bf16.mxu0 %v2293
    %3409 = vmatpush1.bf16.msra.mxu0 %v2292
    %3410 = vmatprep.subr.bf16.mxu0 %v2309
    %3411 = vmatpush1.bf16.msra.mxu0 %v2308
    %3412 = vmatprep.subr.bf16.mxu0 %v2325
    %3413 = vmatpush1.bf16.msra.mxu0 %v2324
    %3414 = vmatprep.subr.bf16.mxu0 %v2341
    %3415 = vmatpush1.bf16.msra.mxu0 %v2340
    %3416 = vmatprep.subr.bf16.mxu0 %v2357
    %3417 = vmatpush1.bf16.msra.mxu0 %v2356
    %3418 = vmatprep.subr.bf16.mxu0 %v2373
    %3419 = vmatpush1.bf16.msra.mxu0 %v2372
    %3420 = vmatprep.subr.bf16.mxu0 %v2389
    %3421 = vmatpush1.bf16.msra.mxu0 %v2388
    %3422 = vmatprep.subr.bf16.mxu0 %v2405
    %3423 = vmatpush1.bf16.msra.mxu0 %v2404
    %3424 = vmatprep.subr.bf16.mxu0 %v2421
    %3425 = vmatpush1.bf16.msra.mxu0 %v2420
    %3426 = vmatprep.subr.bf16.mxu0 %v2437
    %3427 = vmatpush1.bf16.msra.mxu0 %v2436
    %3428 = vmatprep.subr.bf16.mxu0 %v2453
    %3429 = vmatpush1.bf16.msra.mxu0 %v2452
    %3430 = vmatprep.subr.bf16.mxu0 %v2469
    %3431 = vmatpush1.bf16.msra.mxu0 %v2468
    %3432 = vmatprep.mubr.bf16.mxu0 %v2739
    %3433 = vmatmul.mubr.bf16.gmra.mrb[0].mxu0 %v2738
    %v3434 = vpop.f32.mrb[0].mxu0
    %v3435 = vadd.f32 %v3394, %v3434
    %v3436 = vpop.f32.mrb[0].mxu0
    %v3437 = vadd.f32 %v3396, %v3436
    %v3438 = vpop.f32.mrb[0].mxu0
    %v3439 = vpop.f32.mrb[0].mxu0
    %3440 = vdwg.mxu0
    %3441 = vmatprep.subr.bf16.mxu0 %v2485
    %3442 = vmatpush1.bf16.msra.mxu0 %v2484
    %3443 = vmatprep.subr.bf16.mxu0 %v2501
    %3444 = vmatpush1.bf16.msra.mxu0 %v2500
    %3445 = vmatprep.subr.bf16.mxu0 %v2517
    %3446 = vmatpush1.bf16.msra.mxu0 %v2516
    %3447 = vmatprep.subr.bf16.mxu0 %v2533
    %3448 = vmatpush1.bf16.msra.mxu0 %v2532
    %3449 = vmatprep.subr.bf16.mxu0 %v2549
    %3450 = vmatpush1.bf16.msra.mxu0 %v2548
    %3451 = vmatprep.subr.bf16.mxu0 %v2565
    %3452 = vmatpush1.bf16.msra.mxu0 %v2564
    %3453 = vmatprep.subr.bf16.mxu0 %v2581
    %3454 = vmatpush1.bf16.msra.mxu0 %v2580
    %3455 = vmatprep.subr.bf16.mxu0 %v2597
    %3456 = vmatpush1.bf16.msra.mxu0 %v2596
    %3457 = vmatprep.subr.bf16.mxu0 %v2613
    %3458 = vmatpush1.bf16.msra.mxu0 %v2612
    %3459 = vmatprep.subr.bf16.mxu0 %v2629
    %3460 = vmatpush1.bf16.msra.mxu0 %v2628
    %3461 = vmatprep.subr.bf16.mxu0 %v2645
    %3462 = vmatpush1.bf16.msra.mxu0 %v2644
    %3463 = vmatprep.subr.bf16.mxu0 %v2661
    %3464 = vmatpush1.bf16.msra.mxu0 %v2660
    %3465 = vmatprep.subr.bf16.mxu0 %v2677
    %3466 = vmatpush1.bf16.msra.mxu0 %v2676
    %3467 = vmatprep.subr.bf16.mxu0 %v2693
    %3468 = vmatpush1.bf16.msra.mxu0 %v2692
    %3469 = vmatprep.subr.bf16.mxu0 %v2709
    %3470 = vmatpush1.bf16.msra.mxu0 %v2708
    %3471 = vmatprep.subr.bf16.mxu0 %v2725
    %3472 = vmatpush1.bf16.msra.mxu0 %v2724
    %3473 = vmatprep.mubr.bf16.mxu0 %v2741
    %3474 = vmatmul.mubr.bf16.gmra.mrb[0].mxu0 %v2740
    %v3475 = vpop.f32.mrb[0].mxu0
    %v3476 = vadd.f32 %v3435, %v3475
    %v3477 = vpop.f32.mrb[0].mxu0
    %v3478 = vadd.f32 %v3437, %v3477
    %v3479 = vpop.f32.mrb[0].mxu0
    %v3480 = vpop.f32.mrb[0].mxu0
    %3481 = vdwg.mxu0
    %3482 = vmatprep.subr.bf16.mxu0 %v1719
    %3483 = vmatpush1.bf16.msra.mxu0 %v1718
    %3484 = vmatprep.subr.bf16.mxu0 %v1735
    %3485 = vmatpush1.bf16.msra.mxu0 %v1734
    %3486 = vmatprep.subr.bf16.mxu0 %v1751
    %3487 = vmatpush1.bf16.msra.mxu0 %v1750
    %3488 = vmatprep.subr.bf16.mxu0 %v1767
    %3489 = vmatpush1.bf16.msra.mxu0 %v1766
    %3490 = vmatprep.subr.bf16.mxu0 %v1783
    %3491 = vmatpush1.bf16.msra.mxu0 %v1782
    %3492 = vmatprep.subr.bf16.mxu0 %v1799
    %3493 = vmatpush1.bf16.msra.mxu0 %v1798
    %3494 = vmatprep.subr.bf16.mxu0 %v1815
    %3495 = vmatpush1.bf16.msra.mxu0 %v1814
    %3496 = vmatprep.subr.bf16.mxu0 %v1831
    %3497 = vmatpush1.bf16.msra.mxu0 %v1830
    %3498 = vmatprep.subr.bf16.mxu0 %v1847
    %3499 = vmatpush1.bf16.msra.mxu0 %v1846
    %3500 = vmatprep.subr.bf16.mxu0 %v1863
    %3501 = vmatpush1.bf16.msra.mxu0 %v1862
    %3502 = vmatprep.subr.bf16.mxu0 %v1879
    %3503 = vmatpush1.bf16.msra.mxu0 %v1878
    %3504 = vmatprep.subr.bf16.mxu0 %v1895
    %3505 = vmatpush1.bf16.msra.mxu0 %v1894
    %3506 = vmatprep.subr.bf16.mxu0 %v1911
    %3507 = vmatpush1.bf16.msra.mxu0 %v1910
    %3508 = vmatprep.subr.bf16.mxu0 %v1927
    %3509 = vmatpush1.bf16.msra.mxu0 %v1926
    %3510 = vmatprep.subr.bf16.mxu0 %v1943
    %3511 = vmatpush1.bf16.msra.mxu0 %v1942
    %3512 = vmatprep.subr.bf16.mxu0 %v1959
    %3513 = vmatpush1.bf16.msra.mxu0 %v1958
    %3514 = vmatprep.mubr.bf16.mxu0 %v2735
    %3515 = vmatmul.mubr.bf16.gmra.mrb[0].mxu0 %v2734
    %v3516 = vpop.f32.mrb[0].mxu0
    %v3517 = vadd.f32 %v2781, %v3516
    %v3518 = vpop.f32.mrb[0].mxu0
    %v3519 = vadd.f32 %v2785, %v3518
    %v3520 = vpop.f32.mrb[0].mxu0
    %v3521 = vpop.f32.mrb[0].mxu0
    %3522 = vdwg.mxu0
    %3523 = vmatprep.subr.bf16.mxu0 %v1975
    %3524 = vmatpush1.bf16.msra.mxu0 %v1974
    %3525 = vmatprep.subr.bf16.mxu0 %v1991
    %3526 = vmatpush1.bf16.msra.mxu0 %v1990
    %3527 = vmatprep.subr.bf16.mxu0 %v2007
    %3528 = vmatpush1.bf16.msra.mxu0 %v2006
    %3529 = vmatprep.subr.bf16.mxu0 %v2023
    %3530 = vmatpush1.bf16.msra.mxu0 %v2022
    %3531 = vmatprep.subr.bf16.mxu0 %v2039
    %3532 = vmatpush1.bf16.msra.mxu0 %v2038
    %3533 = vmatprep.subr.bf16.mxu0 %v2055
    %3534 = vmatpush1.bf16.msra.mxu0 %v2054
    %3535 = vmatprep.subr.bf16.mxu0 %v2071
    %3536 = vmatpush1.bf16.msra.mxu0 %v2070
    %3537 = vmatprep.subr.bf16.mxu0 %v2087
    %3538 = vmatpush1.bf16.msra.mxu0 %v2086
    %3539 = vmatprep.subr.bf16.mxu0 %v2103
    %3540 = vmatpush1.bf16.msra.mxu0 %v2102
    %3541 = vmatprep.subr.bf16.mxu0 %v2119
    %3542 = vmatpush1.bf16.msra.mxu0 %v2118
    %3543 = vmatprep.subr.bf16.mxu0 %v2135
    %3544 = vmatpush1.bf16.msra.mxu0 %v2134
    %3545 = vmatprep.subr.bf16.mxu0 %v2151
    %3546 = vmatpush1.bf16.msra.mxu0 %v2150
    %3547 = vmatprep.subr.bf16.mxu0 %v2167
    %3548 = vmatpush1.bf16.msra.mxu0 %v2166
    %3549 = vmatprep.subr.bf16.mxu0 %v2183
    %3550 = vmatpush1.bf16.msra.mxu0 %v2182
    %3551 = vmatprep.subr.bf16.mxu0 %v2199
    %3552 = vmatpush1.bf16.msra.mxu0 %v2198
    %3553 = vmatprep.subr.bf16.mxu0 %v2215
    %3554 = vmatpush1.bf16.msra.mxu0 %v2214
    %3555 = vmatprep.mubr.bf16.mxu0 %v2737
    %3556 = vmatmul.mubr.bf16.gmra.mrb[0].mxu0 %v2736
    %v3557 = vpop.f32.mrb[0].mxu0
    %v3558 = vadd.f32 %v3517, %v3557
    %v3559 = vpop.f32.mrb[0].mxu0
    %v3560 = vadd.f32 %v3519, %v3559
    %v3561 = vpop.f32.mrb[0].mxu0
    %v3562 = vpop.f32.mrb[0].mxu0
    %3563 = vdwg.mxu0
    %3564 = vmatprep.subr.bf16.mxu0 %v2231
    %3565 = vmatpush1.bf16.msra.mxu0 %v2230
    %3566 = vmatprep.subr.bf16.mxu0 %v2247
    %3567 = vmatpush1.bf16.msra.mxu0 %v2246
    %3568 = vmatprep.subr.bf16.mxu0 %v2263
    %3569 = vmatpush1.bf16.msra.mxu0 %v2262
    %3570 = vmatprep.subr.bf16.mxu0 %v2279
    %3571 = vmatpush1.bf16.msra.mxu0 %v2278
    %3572 = vmatprep.subr.bf16.mxu0 %v2295
    %3573 = vmatpush1.bf16.msra.mxu0 %v2294
    %3574 = vmatprep.subr.bf16.mxu0 %v2311
    %3575 = vmatpush1.bf16.msra.mxu0 %v2310
    %3576 = vmatprep.subr.bf16.mxu0 %v2327
    %3577 = vmatpush1.bf16.msra.mxu0 %v2326
    %3578 = vmatprep.subr.bf16.mxu0 %v2343
    %3579 = vmatpush1.bf16.msra.mxu0 %v2342
    %3580 = vmatprep.subr.bf16.mxu0 %v2359
    %3581 = vmatpush1.bf16.msra.mxu0 %v2358
    %3582 = vmatprep.subr.bf16.mxu0 %v2375
    %3583 = vmatpush1.bf16.msra.mxu0 %v2374
    %3584 = vmatprep.subr.bf16.mxu0 %v2391
    %3585 = vmatpush1.bf16.msra.mxu0 %v2390
    %3586 = vmatprep.subr.bf16.mxu0 %v2407
    %3587 = vmatpush1.bf16.msra.mxu0 %v2406
    %3588 = vmatprep.subr.bf16.mxu0 %v2423
    %3589 = vmatpush1.bf16.msra.mxu0 %v2422
    %3590 = vmatprep.subr.bf16.mxu0 %v2439
    %3591 = vmatpush1.bf16.msra.mxu0 %v2438
    %3592 = vmatprep.subr.bf16.mxu0 %v2455
    %3593 = vmatpush1.bf16.msra.mxu0 %v2454
    %3594 = vmatprep.subr.bf16.mxu0 %v2471
    %3595 = vmatpush1.bf16.msra.mxu0 %v2470
    %3596 = vmatprep.mubr.bf16.mxu0 %v2739
    %3597 = vmatmul.mubr.bf16.gmra.mrb[0].mxu0 %v2738
    %v3598 = vpop.f32.mrb[0].mxu0
    %v3599 = vadd.f32 %v3558, %v3598
    %v3600 = vpop.f32.mrb[0].mxu0
    %v3601 = vadd.f32 %v3560, %v3600
    %v3602 = vpop.f32.mrb[0].mxu0
    %v3603 = vpop.f32.mrb[0].mxu0
    %3604 = vdwg.mxu0
    %3605 = vmatprep.subr.bf16.mxu0 %v2487
    %3606 = vmatpush1.bf16.msra.mxu0 %v2486
    %3607 = vmatprep.subr.bf16.mxu0 %v2503
    %3608 = vmatpush1.bf16.msra.mxu0 %v2502
    %3609 = vmatprep.subr.bf16.mxu0 %v2519
    %3610 = vmatpush1.bf16.msra.mxu0 %v2518
    %3611 = vmatprep.subr.bf16.mxu0 %v2535
    %3612 = vmatpush1.bf16.msra.mxu0 %v2534
    %3613 = vmatprep.subr.bf16.mxu0 %v2551
    %3614 = vmatpush1.bf16.msra.mxu0 %v2550
    %3615 = vmatprep.subr.bf16.mxu0 %v2567
    %3616 = vmatpush1.bf16.msra.mxu0 %v2566
    %3617 = vmatprep.subr.bf16.mxu0 %v2583
    %3618 = vmatpush1.bf16.msra.mxu0 %v2582
    %3619 = vmatprep.subr.bf16.mxu0 %v2599
    %3620 = vmatpush1.bf16.msra.mxu0 %v2598
    %3621 = vmatprep.subr.bf16.mxu0 %v2615
    %3622 = vmatpush1.bf16.msra.mxu0 %v2614
    %3623 = vmatprep.subr.bf16.mxu0 %v2631
    %3624 = vmatpush1.bf16.msra.mxu0 %v2630
    %3625 = vmatprep.subr.bf16.mxu0 %v2647
    %3626 = vmatpush1.bf16.msra.mxu0 %v2646
    %3627 = vmatprep.subr.bf16.mxu0 %v2663
    %3628 = vmatpush1.bf16.msra.mxu0 %v2662
    %3629 = vmatprep.subr.bf16.mxu0 %v2679
    %3630 = vmatpush1.bf16.msra.mxu0 %v2678
    %3631 = vmatprep.subr.bf16.mxu0 %v2695
    %3632 = vmatpush1.bf16.msra.mxu0 %v2694
    %3633 = vmatprep.subr.bf16.mxu0 %v2711
    %3634 = vmatpush1.bf16.msra.mxu0 %v2710
    %3635 = vmatprep.subr.bf16.mxu0 %v2727
    %3636 = vmatpush1.bf16.msra.mxu0 %v2726
    %3637 = vmatprep.mubr.bf16.mxu0 %v2741
    %3638 = vmatmul.mubr.bf16.gmra.mrb[0].mxu0 %v2740
    %v3639 = vpop.f32.mrb[0].mxu0
    %v3640 = vadd.f32 %v3599, %v3639
    %v3641 = vpop.f32.mrb[0].mxu0
    %v3642 = vadd.f32 %v3601, %v3641
    %v3643 = vpop.f32.mrb[0].mxu0
    %v3644 = vpop.f32.mrb[0].mxu0
    %3645 = vdwg.mxu0
    %3646 = vmatprep.subr.bf16.mxu0 %v1721
    %3647 = vmatpush1.bf16.msra.mxu0 %v1720
    %3648 = vmatprep.subr.bf16.mxu0 %v1737
    %3649 = vmatpush1.bf16.msra.mxu0 %v1736
    %3650 = vmatprep.subr.bf16.mxu0 %v1753
    %3651 = vmatpush1.bf16.msra.mxu0 %v1752
    %3652 = vmatprep.subr.bf16.mxu0 %v1769
    %3653 = vmatpush1.bf16.msra.mxu0 %v1768
    %3654 = vmatprep.subr.bf16.mxu0 %v1785
    %3655 = vmatpush1.bf16.msra.mxu0 %v1784
    %3656 = vmatprep.subr.bf16.mxu0 %v1801
    %3657 = vmatpush1.bf16.msra.mxu0 %v1800
    %3658 = vmatprep.subr.bf16.mxu0 %v1817
    %3659 = vmatpush1.bf16.msra.mxu0 %v1816
    %3660 = vmatprep.subr.bf16.mxu0 %v1833
    %3661 = vmatpush1.bf16.msra.mxu0 %v1832
    %3662 = vmatprep.subr.bf16.mxu0 %v1849
    %3663 = vmatpush1.bf16.msra.mxu0 %v1848
    %3664 = vmatprep.subr.bf16.mxu0 %v1865
    %3665 = vmatpush1.bf16.msra.mxu0 %v1864
    %3666 = vmatprep.subr.bf16.mxu0 %v1881
    %3667 = vmatpush1.bf16.msra.mxu0 %v1880
    %3668 = vmatprep.subr.bf16.mxu0 %v1897
    %3669 = vmatpush1.bf16.msra.mxu0 %v1896
    %3670 = vmatprep.subr.bf16.mxu0 %v1913
    %3671 = vmatpush1.bf16.msra.mxu0 %v1912
    %3672 = vmatprep.subr.bf16.mxu0 %v1929
    %3673 = vmatpush1.bf16.msra.mxu0 %v1928
    %3674 = vmatprep.subr.bf16.mxu0 %v1945
    %3675 = vmatpush1.bf16.msra.mxu0 %v1944
    %3676 = vmatprep.subr.bf16.mxu0 %v1961
    %3677 = vmatpush1.bf16.msra.mxu0 %v1960
    %3678 = vmatprep.mubr.bf16.mxu0 %v2735
    %3679 = vmatmul.mubr.bf16.gmra.mrb[0].mxu0 %v2734
    %v3680 = vpop.f32.mrb[0].mxu0
    %v3681 = vadd.f32 %v2789, %v3680
    %v3682 = vpop.f32.mrb[0].mxu0
    %v3683 = vadd.f32 %v2793, %v3682
    %v3684 = vpop.f32.mrb[0].mxu0
    %v3685 = vpop.f32.mrb[0].mxu0
    %3686 = vdwg.mxu0
    %3687 = vmatprep.subr.bf16.mxu0 %v1977
    %3688 = vmatpush1.bf16.msra.mxu0 %v1976
    %3689 = vmatprep.subr.bf16.mxu0 %v1993
    %3690 = vmatpush1.bf16.msra.mxu0 %v1992
    %3691 = vmatprep.subr.bf16.mxu0 %v2009
    %3692 = vmatpush1.bf16.msra.mxu0 %v2008
    %3693 = vmatprep.subr.bf16.mxu0 %v2025
    %3694 = vmatpush1.bf16.msra.mxu0 %v2024
    %3695 = vmatprep.subr.bf16.mxu0 %v2041
    %3696 = vmatpush1.bf16.msra.mxu0 %v2040
    %3697 = vmatprep.subr.bf16.mxu0 %v2057
    %3698 = vmatpush1.bf16.msra.mxu0 %v2056
    %3699 = vmatprep.subr.bf16.mxu0 %v2073
    %3700 = vmatpush1.bf16.msra.mxu0 %v2072
    %3701 = vmatprep.subr.bf16.mxu0 %v2089
    %3702 = vmatpush1.bf16.msra.mxu0 %v2088
    %3703 = vmatprep.subr.bf16.mxu0 %v2105
    %3704 = vmatpush1.bf16.msra.mxu0 %v2104
    %3705 = vmatprep.subr.bf16.mxu0 %v2121
    %3706 = vmatpush1.bf16.msra.mxu0 %v2120
    %3707 = vmatprep.subr.bf16.mxu0 %v2137
    %3708 = vmatpush1.bf16.msra.mxu0 %v2136
    %3709 = vmatprep.subr.bf16.mxu0 %v2153
    %3710 = vmatpush1.bf16.msra.mxu0 %v2152
    %3711 = vmatprep.subr.bf16.mxu0 %v2169
    %3712 = vmatpush1.bf16.msra.mxu0 %v2168
    %3713 = vmatprep.subr.bf16.mxu0 %v2185
    %3714 = vmatpush1.bf16.msra.mxu0 %v2184
    %3715 = vmatprep.subr.bf16.mxu0 %v2201
    %3716 = vmatpush1.bf16.msra.mxu0 %v2200
    %3717 = vmatprep.subr.bf16.mxu0 %v2217
    %3718 = vmatpush1.bf16.msra.mxu0 %v2216
    %3719 = vmatprep.mubr.bf16.mxu0 %v2737
    %3720 = vmatmul.mubr.bf16.gmra.mrb[0].mxu0 %v2736
    %v3721 = vpop.f32.mrb[0].mxu0
    %v3722 = vadd.f32 %v3681, %v3721
    %v3723 = vpop.f32.mrb[0].mxu0
    %v3724 = vadd.f32 %v3683, %v3723
    %v3725 = vpop.f32.mrb[0].mxu0
    %v3726 = vpop.f32.mrb[0].mxu0
    %3727 = vdwg.mxu0
    %3728 = vmatprep.subr.bf16.mxu0 %v2233
    %3729 = vmatpush1.bf16.msra.mxu0 %v2232
    %3730 = vmatprep.subr.bf16.mxu0 %v2249
    %3731 = vmatpush1.bf16.msra.mxu0 %v2248
    %3732 = vmatprep.subr.bf16.mxu0 %v2265
    %3733 = vmatpush1.bf16.msra.mxu0 %v2264
    %3734 = vmatprep.subr.bf16.mxu0 %v2281
    %3735 = vmatpush1.bf16.msra.mxu0 %v2280
    %3736 = vmatprep.subr.bf16.mxu0 %v2297
    %3737 = vmatpush1.bf16.msra.mxu0 %v2296
    %3738 = vmatprep.subr.bf16.mxu0 %v2313
    %3739 = vmatpush1.bf16.msra.mxu0 %v2312
    %3740 = vmatprep.subr.bf16.mxu0 %v2329
    %3741 = vmatpush1.bf16.msra.mxu0 %v2328
    %3742 = vmatprep.subr.bf16.mxu0 %v2345
    %3743 = vmatpush1.bf16.msra.mxu0 %v2344
    %3744 = vmatprep.subr.bf16.mxu0 %v2361
    %3745 = vmatpush1.bf16.msra.mxu0 %v2360
    %3746 = vmatprep.subr.bf16.mxu0 %v2377
    %3747 = vmatpush1.bf16.msra.mxu0 %v2376
    %3748 = vmatprep.subr.bf16.mxu0 %v2393
    %3749 = vmatpush1.bf16.msra.mxu0 %v2392
    %3750 = vmatprep.subr.bf16.mxu0 %v2409
    %3751 = vmatpush1.bf16.msra.mxu0 %v2408
    %3752 = vmatprep.subr.bf16.mxu0 %v2425
    %3753 = vmatpush1.bf16.msra.mxu0 %v2424
    %3754 = vmatprep.subr.bf16.mxu0 %v2441
    %3755 = vmatpush1.bf16.msra.mxu0 %v2440
    %3756 = vmatprep.subr.bf16.mxu0 %v2457
    %3757 = vmatpush1.bf16.msra.mxu0 %v2456
    %3758 = vmatprep.subr.bf16.mxu0 %v2473
    %3759 = vmatpush1.bf16.msra.mxu0 %v2472
    %3760 = vmatprep.mubr.bf16.mxu0 %v2739
    %3761 = vmatmul.mubr.bf16.gmra.mrb[0].mxu0 %v2738
    %v3762 = vpop.f32.mrb[0].mxu0
    %v3763 = vadd.f32 %v3722, %v3762
    %v3764 = vpop.f32.mrb[0].mxu0
    %v3765 = vadd.f32 %v3724, %v3764
    %v3766 = vpop.f32.mrb[0].mxu0
    %v3767 = vpop.f32.mrb[0].mxu0
    %3768 = vdwg.mxu0
    %3769 = vmatprep.subr.bf16.mxu0 %v2489
    %3770 = vmatpush1.bf16.msra.mxu0 %v2488
    %3771 = vmatprep.subr.bf16.mxu0 %v2505
    %3772 = vmatpush1.bf16.msra.mxu0 %v2504
    %3773 = vmatprep.subr.bf16.mxu0 %v2521
    %3774 = vmatpush1.bf16.msra.mxu0 %v2520
    %3775 = vmatprep.subr.bf16.mxu0 %v2537
    %3776 = vmatpush1.bf16.msra.mxu0 %v2536
    %3777 = vmatprep.subr.bf16.mxu0 %v2553
    %3778 = vmatpush1.bf16.msra.mxu0 %v2552
    %3779 = vmatprep.subr.bf16.mxu0 %v2569
    %3780 = vmatpush1.bf16.msra.mxu0 %v2568
    %3781 = vmatprep.subr.bf16.mxu0 %v2585
    %3782 = vmatpush1.bf16.msra.mxu0 %v2584
    %3783 = vmatprep.subr.bf16.mxu0 %v2601
    %3784 = vmatpush1.bf16.msra.mxu0 %v2600
    %3785 = vmatprep.subr.bf16.mxu0 %v2617
    %3786 = vmatpush1.bf16.msra.mxu0 %v2616
    %3787 = vmatprep.subr.bf16.mxu0 %v2633
    %3788 = vmatpush1.bf16.msra.mxu0 %v2632
    %3789 = vmatprep.subr.bf16.mxu0 %v2649
    %3790 = vmatpush1.bf16.msra.mxu0 %v2648
    %3791 = vmatprep.subr.bf16.mxu0 %v2665
    %3792 = vmatpush1.bf16.msra.mxu0 %v2664
    %3793 = vmatprep.subr.bf16.mxu0 %v2681
    %3794 = vmatpush1.bf16.msra.mxu0 %v2680
    %3795 = vmatprep.subr.bf16.mxu0 %v2697
    %3796 = vmatpush1.bf16.msra.mxu0 %v2696
    %3797 = vmatprep.subr.bf16.mxu0 %v2713
    %3798 = vmatpush1.bf16.msra.mxu0 %v2712
    %3799 = vmatprep.subr.bf16.mxu0 %v2729
    %3800 = vmatpush1.bf16.msra.mxu0 %v2728
    %3801 = vmatprep.mubr.bf16.mxu0 %v2741
    %3802 = vmatmul.mubr.bf16.gmra.mrb[0].mxu0 %v2740
    %v3803 = vpop.f32.mrb[0].mxu0
    %v3804 = vadd.f32 %v3763, %v3803
    %v3805 = vpop.f32.mrb[0].mxu0
    %v3806 = vadd.f32 %v3765, %v3805
    %v3807 = vpop.f32.mrb[0].mxu0
    %v3808 = vpop.f32.mrb[0].mxu0
    %3809 = vdwg.mxu0
    %3810 = vmatprep.subr.bf16.mxu0 %v1723
    %3811 = vmatpush1.bf16.msra.mxu0 %v1722
    %3812 = vmatprep.subr.bf16.mxu0 %v1739
    %3813 = vmatpush1.bf16.msra.mxu0 %v1738
    %3814 = vmatprep.subr.bf16.mxu0 %v1755
    %3815 = vmatpush1.bf16.msra.mxu0 %v1754
    %3816 = vmatprep.subr.bf16.mxu0 %v1771
    %3817 = vmatpush1.bf16.msra.mxu0 %v1770
    %3818 = vmatprep.subr.bf16.mxu0 %v1787
    %3819 = vmatpush1.bf16.msra.mxu0 %v1786
    %3820 = vmatprep.subr.bf16.mxu0 %v1803
    %3821 = vmatpush1.bf16.msra.mxu0 %v1802
    %3822 = vmatprep.subr.bf16.mxu0 %v1819
    %3823 = vmatpush1.bf16.msra.mxu0 %v1818
    %3824 = vmatprep.subr.bf16.mxu0 %v1835
    %3825 = vmatpush1.bf16.msra.mxu0 %v1834
    %3826 = vmatprep.subr.bf16.mxu0 %v1851
    %3827 = vmatpush1.bf16.msra.mxu0 %v1850
    %3828 = vmatprep.subr.bf16.mxu0 %v1867
    %3829 = vmatpush1.bf16.msra.mxu0 %v1866
    %3830 = vmatprep.subr.bf16.mxu0 %v1883
    %3831 = vmatpush1.bf16.msra.mxu0 %v1882
    %3832 = vmatprep.subr.bf16.mxu0 %v1899
    %3833 = vmatpush1.bf16.msra.mxu0 %v1898
    %3834 = vmatprep.subr.bf16.mxu0 %v1915
    %3835 = vmatpush1.bf16.msra.mxu0 %v1914
    %3836 = vmatprep.subr.bf16.mxu0 %v1931
    %3837 = vmatpush1.bf16.msra.mxu0 %v1930
    %3838 = vmatprep.subr.bf16.mxu0 %v1947
    %3839 = vmatpush1.bf16.msra.mxu0 %v1946
    %3840 = vmatprep.subr.bf16.mxu0 %v1963
    %3841 = vmatpush1.bf16.msra.mxu0 %v1962
    %3842 = vmatprep.mubr.bf16.mxu0 %v2735
    %3843 = vmatmul.mubr.bf16.gmra.mrb[0].mxu0 %v2734
    %v3844 = vpop.f32.mrb[0].mxu0
    %v3845 = vadd.f32 %v2797, %v3844
    %v3846 = vpop.f32.mrb[0].mxu0
    %v3847 = vadd.f32 %v2801, %v3846
    %v3848 = vpop.f32.mrb[0].mxu0
    %v3849 = vpop.f32.mrb[0].mxu0
    %3850 = vdwg.mxu0
    %3851 = vmatprep.subr.bf16.mxu0 %v1979
    %3852 = vmatpush1.bf16.msra.mxu0 %v1978
    %3853 = vmatprep.subr.bf16.mxu0 %v1995
    %3854 = vmatpush1.bf16.msra.mxu0 %v1994
    %3855 = vmatprep.subr.bf16.mxu0 %v2011
    %3856 = vmatpush1.bf16.msra.mxu0 %v2010
    %3857 = vmatprep.subr.bf16.mxu0 %v2027
    %3858 = vmatpush1.bf16.msra.mxu0 %v2026
    %3859 = vmatprep.subr.bf16.mxu0 %v2043
    %3860 = vmatpush1.bf16.msra.mxu0 %v2042
    %3861 = vmatprep.subr.bf16.mxu0 %v2059
    %3862 = vmatpush1.bf16.msra.mxu0 %v2058
    %3863 = vmatprep.subr.bf16.mxu0 %v2075
    %3864 = vmatpush1.bf16.msra.mxu0 %v2074
    %3865 = vmatprep.subr.bf16.mxu0 %v2091
    %3866 = vmatpush1.bf16.msra.mxu0 %v2090
    %3867 = vmatprep.subr.bf16.mxu0 %v2107
    %3868 = vmatpush1.bf16.msra.mxu0 %v2106
    %3869 = vmatprep.subr.bf16.mxu0 %v2123
    %3870 = vmatpush1.bf16.msra.mxu0 %v2122
    %3871 = vmatprep.subr.bf16.mxu0 %v2139
    %3872 = vmatpush1.bf16.msra.mxu0 %v2138
    %3873 = vmatprep.subr.bf16.mxu0 %v2155
    %3874 = vmatpush1.bf16.msra.mxu0 %v2154
    %3875 = vmatprep.subr.bf16.mxu0 %v2171
    %3876 = vmatpush1.bf16.msra.mxu0 %v2170
    %3877 = vmatprep.subr.bf16.mxu0 %v2187
    %3878 = vmatpush1.bf16.msra.mxu0 %v2186
    %3879 = vmatprep.subr.bf16.mxu0 %v2203
    %3880 = vmatpush1.bf16.msra.mxu0 %v2202
    %3881 = vmatprep.subr.bf16.mxu0 %v2219
    %3882 = vmatpush1.bf16.msra.mxu0 %v2218
    %3883 = vmatprep.mubr.bf16.mxu0 %v2737
    %3884 = vmatmul.mubr.bf16.gmra.mrb[0].mxu0 %v2736
    %v3885 = vpop.f32.mrb[0].mxu0
    %v3886 = vadd.f32 %v3845, %v3885
    %v3887 = vpop.f32.mrb[0].mxu0
    %v3888 = vadd.f32 %v3847, %v3887
    %v3889 = vpop.f32.mrb[0].mxu0
    %v3890 = vpop.f32.mrb[0].mxu0
    %3891 = vdwg.mxu0
    %3892 = vmatprep.subr.bf16.mxu0 %v2235
    %3893 = vmatpush1.bf16.msra.mxu0 %v2234
    %3894 = vmatprep.subr.bf16.mxu0 %v2251
    %3895 = vmatpush1.bf16.msra.mxu0 %v2250
    %3896 = vmatprep.subr.bf16.mxu0 %v2267
    %3897 = vmatpush1.bf16.msra.mxu0 %v2266
    %3898 = vmatprep.subr.bf16.mxu0 %v2283
    %3899 = vmatpush1.bf16.msra.mxu0 %v2282
    %3900 = vmatprep.subr.bf16.mxu0 %v2299
    %3901 = vmatpush1.bf16.msra.mxu0 %v2298
    %3902 = vmatprep.subr.bf16.mxu0 %v2315
    %3903 = vmatpush1.bf16.msra.mxu0 %v2314
    %3904 = vmatprep.subr.bf16.mxu0 %v2331
    %3905 = vmatpush1.bf16.msra.mxu0 %v2330
    %3906 = vmatprep.subr.bf16.mxu0 %v2347
    %3907 = vmatpush1.bf16.msra.mxu0 %v2346
    %3908 = vmatprep.subr.bf16.mxu0 %v2363
    %3909 = vmatpush1.bf16.msra.mxu0 %v2362
    %3910 = vmatprep.subr.bf16.mxu0 %v2379
    %3911 = vmatpush1.bf16.msra.mxu0 %v2378
    %3912 = vmatprep.subr.bf16.mxu0 %v2395
    %3913 = vmatpush1.bf16.msra.mxu0 %v2394
    %3914 = vmatprep.subr.bf16.mxu0 %v2411
    %3915 = vmatpush1.bf16.msra.mxu0 %v2410
    %3916 = vmatprep.subr.bf16.mxu0 %v2427
    %3917 = vmatpush1.bf16.msra.mxu0 %v2426
    %3918 = vmatprep.subr.bf16.mxu0 %v2443
    %3919 = vmatpush1.bf16.msra.mxu0 %v2442
    %3920 = vmatprep.subr.bf16.mxu0 %v2459
    %3921 = vmatpush1.bf16.msra.mxu0 %v2458
    %3922 = vmatprep.subr.bf16.mxu0 %v2475
    %3923 = vmatpush1.bf16.msra.mxu0 %v2474
    %3924 = vmatprep.mubr.bf16.mxu0 %v2739
    %3925 = vmatmul.mubr.bf16.gmra.mrb[0].mxu0 %v2738
    %v3926 = vpop.f32.mrb[0].mxu0
    %v3927 = vadd.f32 %v3886, %v3926
    %v3928 = vpop.f32.mrb[0].mxu0
    %v3929 = vadd.f32 %v3888, %v3928
    %v3930 = vpop.f32.mrb[0].mxu0
    %v3931 = vpop.f32.mrb[0].mxu0
    %3932 = vdwg.mxu0
    %3933 = vmatprep.subr.bf16.mxu0 %v2491
    %3934 = vmatpush1.bf16.msra.mxu0 %v2490
    %3935 = vmatprep.subr.bf16.mxu0 %v2507
    %3936 = vmatpush1.bf16.msra.mxu0 %v2506
    %3937 = vmatprep.subr.bf16.mxu0 %v2523
    %3938 = vmatpush1.bf16.msra.mxu0 %v2522
    %3939 = vmatprep.subr.bf16.mxu0 %v2539
    %3940 = vmatpush1.bf16.msra.mxu0 %v2538
    %3941 = vmatprep.subr.bf16.mxu0 %v2555
    %3942 = vmatpush1.bf16.msra.mxu0 %v2554
    %3943 = vmatprep.subr.bf16.mxu0 %v2571
    %3944 = vmatpush1.bf16.msra.mxu0 %v2570
    %3945 = vmatprep.subr.bf16.mxu0 %v2587
    %3946 = vmatpush1.bf16.msra.mxu0 %v2586
    %3947 = vmatprep.subr.bf16.mxu0 %v2603
    %3948 = vmatpush1.bf16.msra.mxu0 %v2602
    %3949 = vmatprep.subr.bf16.mxu0 %v2619
    %3950 = vmatpush1.bf16.msra.mxu0 %v2618
    %3951 = vmatprep.subr.bf16.mxu0 %v2635
    %3952 = vmatpush1.bf16.msra.mxu0 %v2634
    %3953 = vmatprep.subr.bf16.mxu0 %v2651
    %3954 = vmatpush1.bf16.msra.mxu0 %v2650
    %3955 = vmatprep.subr.bf16.mxu0 %v2667
    %3956 = vmatpush1.bf16.msra.mxu0 %v2666
    %3957 = vmatprep.subr.bf16.mxu0 %v2683
    %3958 = vmatpush1.bf16.msra.mxu0 %v2682
    %3959 = vmatprep.subr.bf16.mxu0 %v2699
    %3960 = vmatpush1.bf16.msra.mxu0 %v2698
    %3961 = vmatprep.subr.bf16.mxu0 %v2715
    %3962 = vmatpush1.bf16.msra.mxu0 %v2714
    %3963 = vmatprep.subr.bf16.mxu0 %v2731
    %3964 = vmatpush1.bf16.msra.mxu0 %v2730
    %3965 = vmatprep.mubr.bf16.mxu0 %v2741
    %3966 = vmatmul.mubr.bf16.gmra.mrb[0].mxu0 %v2740
    %v3967 = vpop.f32.mrb[0].mxu0
    %v3968 = vadd.f32 %v3927, %v3967
    %v3969 = vpop.f32.mrb[0].mxu0
    %v3970 = vadd.f32 %v3929, %v3969
    %v3971 = vpop.f32.mrb[0].mxu0
    %v3972 = vpop.f32.mrb[0].mxu0
    %3973 = vdwg.mxu0
    %3974 = vmatprep.subr.bf16.mxu0 %v1725
    %3975 = vmatpush1.bf16.msra.mxu0 %v1724
    %3976 = vmatprep.subr.bf16.mxu0 %v1741
    %3977 = vmatpush1.bf16.msra.mxu0 %v1740
    %3978 = vmatprep.subr.bf16.mxu0 %v1757
    %3979 = vmatpush1.bf16.msra.mxu0 %v1756
    %3980 = vmatprep.subr.bf16.mxu0 %v1773
    %3981 = vmatpush1.bf16.msra.mxu0 %v1772
    %3982 = vmatprep.subr.bf16.mxu0 %v1789
    %3983 = vmatpush1.bf16.msra.mxu0 %v1788
    %3984 = vmatprep.subr.bf16.mxu0 %v1805
    %3985 = vmatpush1.bf16.msra.mxu0 %v1804
    %3986 = vmatprep.subr.bf16.mxu0 %v1821
    %3987 = vmatpush1.bf16.msra.mxu0 %v1820
    %3988 = vmatprep.subr.bf16.mxu0 %v1837
    %3989 = vmatpush1.bf16.msra.mxu0 %v1836
    %3990 = vmatprep.subr.bf16.mxu0 %v1853
    %3991 = vmatpush1.bf16.msra.mxu0 %v1852
    %3992 = vmatprep.subr.bf16.mxu0 %v1869
    %3993 = vmatpush1.bf16.msra.mxu0 %v1868
    %3994 = vmatprep.subr.bf16.mxu0 %v1885
    %3995 = vmatpush1.bf16.msra.mxu0 %v1884
    %3996 = vmatprep.subr.bf16.mxu0 %v1901
    %3997 = vmatpush1.bf16.msra.mxu0 %v1900
    %3998 = vmatprep.subr.bf16.mxu0 %v1917
    %3999 = vmatpush1.bf16.msra.mxu0 %v1916
    %4000 = vmatprep.subr.bf16.mxu0 %v1933
    %4001 = vmatpush1.bf16.msra.mxu0 %v1932
    %4002 = vmatprep.subr.bf16.mxu0 %v1949
    %4003 = vmatpush1.bf16.msra.mxu0 %v1948
    %4004 = vmatprep.subr.bf16.mxu0 %v1965
    %4005 = vmatpush1.bf16.msra.mxu0 %v1964
    %4006 = vmatprep.mubr.bf16.mxu0 %v2735
    %4007 = vmatmul.mubr.bf16.gmra.mrb[0].mxu0 %v2734
    %v4008 = vpop.f32.mrb[0].mxu0
    %v4009 = vadd.f32 %v2805, %v4008
    %v4010 = vpop.f32.mrb[0].mxu0
    %v4011 = vadd.f32 %v2809, %v4010
    %v4012 = vpop.f32.mrb[0].mxu0
    %v4013 = vpop.f32.mrb[0].mxu0
    %4014 = vdwg.mxu0
    %4015 = vmatprep.subr.bf16.mxu0 %v1981
    %4016 = vmatpush1.bf16.msra.mxu0 %v1980
    %4017 = vmatprep.subr.bf16.mxu0 %v1997
    %4018 = vmatpush1.bf16.msra.mxu0 %v1996
    %4019 = vmatprep.subr.bf16.mxu0 %v2013
    %4020 = vmatpush1.bf16.msra.mxu0 %v2012
    %4021 = vmatprep.subr.bf16.mxu0 %v2029
    %4022 = vmatpush1.bf16.msra.mxu0 %v2028
    %4023 = vmatprep.subr.bf16.mxu0 %v2045
    %4024 = vmatpush1.bf16.msra.mxu0 %v2044
    %4025 = vmatprep.subr.bf16.mxu0 %v2061
    %4026 = vmatpush1.bf16.msra.mxu0 %v2060
    %4027 = vmatprep.subr.bf16.mxu0 %v2077
    %4028 = vmatpush1.bf16.msra.mxu0 %v2076
    %4029 = vmatprep.subr.bf16.mxu0 %v2093
    %4030 = vmatpush1.bf16.msra.mxu0 %v2092
    %4031 = vmatprep.subr.bf16.mxu0 %v2109
    %4032 = vmatpush1.bf16.msra.mxu0 %v2108
    %4033 = vmatprep.subr.bf16.mxu0 %v2125
    %4034 = vmatpush1.bf16.msra.mxu0 %v2124
    %4035 = vmatprep.subr.bf16.mxu0 %v2141
    %4036 = vmatpush1.bf16.msra.mxu0 %v2140
    %4037 = vmatprep.subr.bf16.mxu0 %v2157
    %4038 = vmatpush1.bf16.msra.mxu0 %v2156
    %4039 = vmatprep.subr.bf16.mxu0 %v2173
    %4040 = vmatpush1.bf16.msra.mxu0 %v2172
    %4041 = vmatprep.subr.bf16.mxu0 %v2189
    %4042 = vmatpush1.bf16.msra.mxu0 %v2188
    %4043 = vmatprep.subr.bf16.mxu0 %v2205
    %4044 = vmatpush1.bf16.msra.mxu0 %v2204
    %4045 = vmatprep.subr.bf16.mxu0 %v2221
    %4046 = vmatpush1.bf16.msra.mxu0 %v2220
    %4047 = vmatprep.mubr.bf16.mxu0 %v2737
    %4048 = vmatmul.mubr.bf16.gmra.mrb[0].mxu0 %v2736
    %v4049 = vpop.f32.mrb[0].mxu0
    %v4050 = vadd.f32 %v4009, %v4049
    %v4051 = vpop.f32.mrb[0].mxu0
    %v4052 = vadd.f32 %v4011, %v4051
    %v4053 = vpop.f32.mrb[0].mxu0
    %v4054 = vpop.f32.mrb[0].mxu0
    %4055 = vdwg.mxu0
    %4056 = vmatprep.subr.bf16.mxu0 %v2237
    %4057 = vmatpush1.bf16.msra.mxu0 %v2236
    %4058 = vmatprep.subr.bf16.mxu0 %v2253
    %4059 = vmatpush1.bf16.msra.mxu0 %v2252
    %4060 = vmatprep.subr.bf16.mxu0 %v2269
    %4061 = vmatpush1.bf16.msra.mxu0 %v2268
    %4062 = vmatprep.subr.bf16.mxu0 %v2285
    %4063 = vmatpush1.bf16.msra.mxu0 %v2284
    %4064 = vmatprep.subr.bf16.mxu0 %v2301
    %4065 = vmatpush1.bf16.msra.mxu0 %v2300
    %4066 = vmatprep.subr.bf16.mxu0 %v2317
    %4067 = vmatpush1.bf16.msra.mxu0 %v2316
    %4068 = vmatprep.subr.bf16.mxu0 %v2333
    %4069 = vmatpush1.bf16.msra.mxu0 %v2332
    %4070 = vmatprep.subr.bf16.mxu0 %v2349
    %4071 = vmatpush1.bf16.msra.mxu0 %v2348
    %4072 = vmatprep.subr.bf16.mxu0 %v2365
    %4073 = vmatpush1.bf16.msra.mxu0 %v2364
    %4074 = vmatprep.subr.bf16.mxu0 %v2381
    %4075 = vmatpush1.bf16.msra.mxu0 %v2380
    %4076 = vmatprep.subr.bf16.mxu0 %v2397
    %4077 = vmatpush1.bf16.msra.mxu0 %v2396
    %4078 = vmatprep.subr.bf16.mxu0 %v2413
    %4079 = vmatpush1.bf16.msra.mxu0 %v2412
    %4080 = vmatprep.subr.bf16.mxu0 %v2429
    %4081 = vmatpush1.bf16.msra.mxu0 %v2428
    %4082 = vmatprep.subr.bf16.mxu0 %v2445
    %4083 = vmatpush1.bf16.msra.mxu0 %v2444
    %4084 = vmatprep.subr.bf16.mxu0 %v2461
    %4085 = vmatpush1.bf16.msra.mxu0 %v2460
    %4086 = vmatprep.subr.bf16.mxu0 %v2477
    %4087 = vmatpush1.bf16.msra.mxu0 %v2476
    %4088 = vmatprep.mubr.bf16.mxu0 %v2739
    %4089 = vmatmul.mubr.bf16.gmra.mrb[0].mxu0 %v2738
    %v4090 = vpop.f32.mrb[0].mxu0
    %v4091 = vadd.f32 %v4050, %v4090
    %v4092 = vpop.f32.mrb[0].mxu0
    %v4093 = vadd.f32 %v4052, %v4092
    %v4094 = vpop.f32.mrb[0].mxu0
    %v4095 = vpop.f32.mrb[0].mxu0
    %4096 = vdwg.mxu0
    %4097 = vmatprep.subr.bf16.mxu0 %v2493
    %4098 = vmatpush1.bf16.msra.mxu0 %v2492
    %4099 = vmatprep.subr.bf16.mxu0 %v2509
    %4100 = vmatpush1.bf16.msra.mxu0 %v2508
    %4101 = vmatprep.subr.bf16.mxu0 %v2525
    %4102 = vmatpush1.bf16.msra.mxu0 %v2524
    %4103 = vmatprep.subr.bf16.mxu0 %v2541
    %4104 = vmatpush1.bf16.msra.mxu0 %v2540
    %4105 = vmatprep.subr.bf16.mxu0 %v2557
    %4106 = vmatpush1.bf16.msra.mxu0 %v2556
    %4107 = vmatprep.subr.bf16.mxu0 %v2573
    %4108 = vmatpush1.bf16.msra.mxu0 %v2572
    %4109 = vmatprep.subr.bf16.mxu0 %v2589
    %4110 = vmatpush1.bf16.msra.mxu0 %v2588
    %4111 = vmatprep.subr.bf16.mxu0 %v2605
    %4112 = vmatpush1.bf16.msra.mxu0 %v2604
    %4113 = vmatprep.subr.bf16.mxu0 %v2621
    %4114 = vmatpush1.bf16.msra.mxu0 %v2620
    %4115 = vmatprep.subr.bf16.mxu0 %v2637
    %4116 = vmatpush1.bf16.msra.mxu0 %v2636
    %4117 = vmatprep.subr.bf16.mxu0 %v2653
    %4118 = vmatpush1.bf16.msra.mxu0 %v2652
    %4119 = vmatprep.subr.bf16.mxu0 %v2669
    %4120 = vmatpush1.bf16.msra.mxu0 %v2668
    %4121 = vmatprep.subr.bf16.mxu0 %v2685
    %4122 = vmatpush1.bf16.msra.mxu0 %v2684
    %4123 = vmatprep.subr.bf16.mxu0 %v2701
    %4124 = vmatpush1.bf16.msra.mxu0 %v2700
    %4125 = vmatprep.subr.bf16.mxu0 %v2717
    %4126 = vmatpush1.bf16.msra.mxu0 %v2716
    %4127 = vmatprep.subr.bf16.mxu0 %v2733
    %4128 = vmatpush1.bf16.msra.mxu0 %v2732
    %4129 = vmatprep.mubr.bf16.mxu0 %v2741
    %4130 = vmatmul.mubr.bf16.gmra.mrb[0].mxu0 %v2740
    %v4131 = vpop.f32.mrb[0].mxu0
    %v4132 = vadd.f32 %v4091, %v4131
    %v4133 = vpop.f32.mrb[0].mxu0
    %v4134 = vadd.f32 %v4093, %v4133
    %v4135 = vpop.f32.mrb[0].mxu0
    %v4136 = vpop.f32.mrb[0].mxu0
    %4137 = vdwg.mxu0
    %vm4138 = vcmp.ge.f32.partialorder %v2984, 0.0
    %vm4139 = vcmp.ge.f32.partialorder %v2986, 0.0
    %vm4140 = vcmp.ge.f32.partialorder %v3148, 0.0
    %vm4141 = vcmp.ge.f32.partialorder %v3150, 0.0
    %vm4142 = vcmp.ge.f32.partialorder %v3312, 0.0
    %vm4143 = vcmp.ge.f32.partialorder %v3314, 0.0
    %vm4144 = vcmp.ge.f32.partialorder %v3476, 0.0
    %vm4145 = vcmp.ge.f32.partialorder %v3478, 0.0
    %vm4146 = vcmp.ge.f32.partialorder %v3640, 0.0
    %vm4147 = vcmp.ge.f32.partialorder %v3642, 0.0
    %vm4148 = vcmp.ge.f32.partialorder %v3804, 0.0
    %vm4149 = vcmp.ge.f32.partialorder %v3806, 0.0
    %vm4150 = vcmp.ge.f32.partialorder %v3968, 0.0
    %vm4151 = vcmp.ge.f32.partialorder %v3970, 0.0
    %vm4152 = vcmp.ge.f32.partialorder %v4132, 0.0
    %vm4153 = vcmp.ge.f32.partialorder %v4134, 0.0
    %v4154 = vmul.f32 %v2984, 0.01
    %v4155 = vmul.f32 %v2986, 0.01
    %v4156 = vmul.f32 %v3148, 0.01
    %v4157 = vmul.f32 %v3150, 0.01
    %v4158 = vmul.f32 %v3312, 0.01
    %v4159 = vmul.f32 %v3314, 0.01
    %v4160 = vmul.f32 %v3476, 0.01
    %v4161 = vmul.f32 %v3478, 0.01
    %v4162 = vmul.f32 %v3640, 0.01
    %v4163 = vmul.f32 %v3642, 0.01
    %v4164 = vmul.f32 %v3804, 0.01
    %v4165 = vmul.f32 %v3806, 0.01
    %v4166 = vmul.f32 %v3968, 0.01
    %v4167 = vmul.f32 %v3970, 0.01
    %v4168 = vmul.f32 %v4132, 0.01
    %v4169 = vmul.f32 %v4134, 0.01
    %v4170 = vsel %vm4138, %v2984, %v4154
    %v4171 = vsel %vm4139, %v2986, %v4155
    %v4172 = vsel %vm4140, %v3148, %v4156
    %v4173 = vsel %vm4141, %v3150, %v4157
    %v4174 = vsel %vm4142, %v3312, %v4158
    %v4175 = vsel %vm4143, %v3314, %v4159
    %v4176 = vsel %vm4144, %v3476, %v4160
    %v4177 = vsel %vm4145, %v3478, %v4161
    %v4178 = vsel %vm4146, %v3640, %v4162
    %v4179 = vsel %vm4147, %v3642, %v4163
    %v4180 = vsel %vm4148, %v3804, %v4164
    %v4181 = vsel %vm4149, %v3806, %v4165
    %v4182 = vsel %vm4150, %v3968, %v4166
    %v4183 = vsel %vm4151, %v3970, %v4167
    %v4184 = vsel %vm4152, %v4132, %v4168
    %v4185 = vsel %vm4153, %v4134, %v4169
    %4186 = vst [vmem:[%s15] sm:$0xff] %v4170
    %4187 = vst [vmem:[%s15 + $0x8] sm:$0xff] %v4171
    %4188 = vst [vmem:[%s15 + $0x10] sm:$0xff] %v4172
    %4189 = vst [vmem:[%s15 + $0x18] sm:$0xff] %v4173
    %4190 = vst [vmem:[%s15 + $0x20] sm:$0xff] %v4174
    %4191 = vst [vmem:[%s15 + $0x28] sm:$0xff] %v4175
    %4192 = vst [vmem:[%s15 + $0x30] sm:$0xff] %v4176
    %4193 = vst [vmem:[%s15 + $0x38] sm:$0xff] %v4177
    %4194 = vst [vmem:[%s15 + $0x40] sm:$0xff] %v4178
    %4195 = vst [vmem:[%s15 + $0x48] sm:$0xff] %v4179
    %4196 = vst [vmem:[%s15 + $0x50] sm:$0xff] %v4180
    %4197 = vst [vmem:[%s15 + $0x58] sm:$0xff] %v4181
    %4198 = vst [vmem:[%s15 + $0x60] sm:$0xff] %v4182
    %4199 = vst [vmem:[%s15 + $0x68] sm:$0xff] %v4183
    %4200 = vst [vmem:[%s15 + $0x70] sm:$0xff] %v4184
    %4201 = vst [vmem:[%s15 + $0x78] sm:$0xff] %v4185
    %s4202 = smul.u32 4, 256
    %s4203 = smul.u32 %s4202, 1
    %s4204 = sshll.u32 %s4203, 4
    %4205 = dma.done %s185, %s4204
    %v4206 = vld [vmem:[#allocation4] sm:$0xff]
    %v4207 = vld [vmem:[#allocation4 + $0x8] sm:$0xff]
    %v4208 = vld [vmem:[#allocation4 + $0x10] sm:$0xff]
    %v4209 = vld [vmem:[#allocation4 + $0x18] sm:$0xff]
    %v4210 = vld [vmem:[#allocation4 + $0x20] sm:$0xff]
    %v4211 = vld [vmem:[#allocation4 + $0x28] sm:$0xff]
    %v4212 = vld [vmem:[#allocation4 + $0x30] sm:$0xff]
    %v4213 = vld [vmem:[#allocation4 + $0x38] sm:$0xff]
    %v4214 = vld [vmem:[#allocation4 + $0x40] sm:$0xff]
    %v4215 = vld [vmem:[#allocation4 + $0x48] sm:$0xff]
    %v4216 = vld [vmem:[#allocation4 + $0x50] sm:$0xff]
    %v4217 = vld [vmem:[#allocation4 + $0x58] sm:$0xff]
    %v4218 = vld [vmem:[#allocation4 + $0x60] sm:$0xff]
    %v4219 = vld [vmem:[#allocation4 + $0x68] sm:$0xff]
    %v4220 = vld [vmem:[#allocation4 + $0x70] sm:$0xff]
    %v4221 = vld [vmem:[#allocation4 + $0x78] sm:$0xff]
    %v4222 = vld [vmem:[#allocation4 + $0x80] sm:$0xff]
    %v4223 = vld [vmem:[#allocation4 + $0x88] sm:$0xff]
    %v4224 = vld [vmem:[#allocation4 + $0x90] sm:$0xff]
    %v4225 = vld [vmem:[#allocation4 + $0x98] sm:$0xff]
    %v4226 = vld [vmem:[#allocation4 + $0xa0] sm:$0xff]
    %v4227 = vld [vmem:[#allocation4 + $0xa8] sm:$0xff]
    %v4228 = vld [vmem:[#allocation4 + $0xb0] sm:$0xff]
    %v4229 = vld [vmem:[#allocation4 + $0xb8] sm:$0xff]
    %v4230 = vld [vmem:[#allocation4 + $0xc0] sm:$0xff]
    %v4231 = vld [vmem:[#allocation4 + $0xc8] sm:$0xff]
    %v4232 = vld [vmem:[#allocation4 + $0xd0] sm:$0xff]
    %v4233 = vld [vmem:[#allocation4 + $0xd8] sm:$0xff]
    %v4234 = vld [vmem:[#allocation4 + $0xe0] sm:$0xff]
    %v4235 = vld [vmem:[#allocation4 + $0xe8] sm:$0xff]
    %v4236 = vld [vmem:[#allocation4 + $0xf0] sm:$0xff]
    %v4237 = vld [vmem:[#allocation4 + $0xf8] sm:$0xff]
    %v4238 = vld [vmem:[#allocation4 + $0x100] sm:$0xff]
    %v4239 = vld [vmem:[#allocation4 + $0x108] sm:$0xff]
    %v4240 = vld [vmem:[#allocation4 + $0x110] sm:$0xff]
    %v4241 = vld [vmem:[#allocation4 + $0x118] sm:$0xff]
    %v4242 = vld [vmem:[#allocation4 + $0x120] sm:$0xff]
    %v4243 = vld [vmem:[#allocation4 + $0x128] sm:$0xff]
    %v4244 = vld [vmem:[#allocation4 + $0x130] sm:$0xff]
    %v4245 = vld [vmem:[#allocation4 + $0x138] sm:$0xff]
    %v4246 = vld [vmem:[#allocation4 + $0x140] sm:$0xff]
    %v4247 = vld [vmem:[#allocation4 + $0x148] sm:$0xff]
    %v4248 = vld [vmem:[#allocation4 + $0x150] sm:$0xff]
    %v4249 = vld [vmem:[#allocation4 + $0x158] sm:$0xff]
    %v4250 = vld [vmem:[#allocation4 + $0x160] sm:$0xff]
    %v4251 = vld [vmem:[#allocation4 + $0x168] sm:$0xff]
    %v4252 = vld [vmem:[#allocation4 + $0x170] sm:$0xff]
    %v4253 = vld [vmem:[#allocation4 + $0x178] sm:$0xff]
    %v4254 = vld [vmem:[#allocation4 + $0x180] sm:$0xff]
    %v4255 = vld [vmem:[#allocation4 + $0x188] sm:$0xff]
    %v4256 = vld [vmem:[#allocation4 + $0x190] sm:$0xff]
    %v4257 = vld [vmem:[#allocation4 + $0x198] sm:$0xff]
    %v4258 = vld [vmem:[#allocation4 + $0x1a0] sm:$0xff]
    %v4259 = vld [vmem:[#allocation4 + $0x1a8] sm:$0xff]
    %v4260 = vld [vmem:[#allocation4 + $0x1b0] sm:$0xff]
    %v4261 = vld [vmem:[#allocation4 + $0x1b8] sm:$0xff]
    %v4262 = vld [vmem:[#allocation4 + $0x1c0] sm:$0xff]
    %v4263 = vld [vmem:[#allocation4 + $0x1c8] sm:$0xff]
    %v4264 = vld [vmem:[#allocation4 + $0x1d0] sm:$0xff]
    %v4265 = vld [vmem:[#allocation4 + $0x1d8] sm:$0xff]
    %v4266 = vld [vmem:[#allocation4 + $0x1e0] sm:$0xff]
    %v4267 = vld [vmem:[#allocation4 + $0x1e8] sm:$0xff]
    %v4268 = vld [vmem:[#allocation4 + $0x1f0] sm:$0xff]
    %v4269 = vld [vmem:[#allocation4 + $0x1f8] sm:$0xff]
    %v4270 = vld [vmem:[#allocation4 + $0x200] sm:$0xff]
    %v4271 = vld [vmem:[#allocation4 + $0x208] sm:$0xff]
    %v4272 = vld [vmem:[#allocation4 + $0x210] sm:$0xff]
    %v4273 = vld [vmem:[#allocation4 + $0x218] sm:$0xff]
    %v4274 = vld [vmem:[#allocation4 + $0x220] sm:$0xff]
    %v4275 = vld [vmem:[#allocation4 + $0x228] sm:$0xff]
    %v4276 = vld [vmem:[#allocation4 + $0x230] sm:$0xff]
    %v4277 = vld [vmem:[#allocation4 + $0x238] sm:$0xff]
    %v4278 = vld [vmem:[#allocation4 + $0x240] sm:$0xff]
    %v4279 = vld [vmem:[#allocation4 + $0x248] sm:$0xff]
    %v4280 = vld [vmem:[#allocation4 + $0x250] sm:$0xff]
    %v4281 = vld [vmem:[#allocation4 + $0x258] sm:$0xff]
    %v4282 = vld [vmem:[#allocation4 + $0x260] sm:$0xff]
    %v4283 = vld [vmem:[#allocation4 + $0x268] sm:$0xff]
    %v4284 = vld [vmem:[#allocation4 + $0x270] sm:$0xff]
    %v4285 = vld [vmem:[#allocation4 + $0x278] sm:$0xff]
    %v4286 = vld [vmem:[#allocation4 + $0x280] sm:$0xff]
    %v4287 = vld [vmem:[#allocation4 + $0x288] sm:$0xff]
    %v4288 = vld [vmem:[#allocation4 + $0x290] sm:$0xff]
    %v4289 = vld [vmem:[#allocation4 + $0x298] sm:$0xff]
    %v4290 = vld [vmem:[#allocation4 + $0x2a0] sm:$0xff]
    %v4291 = vld [vmem:[#allocation4 + $0x2a8] sm:$0xff]
    %v4292 = vld [vmem:[#allocation4 + $0x2b0] sm:$0xff]
    %v4293 = vld [vmem:[#allocation4 + $0x2b8] sm:$0xff]
    %v4294 = vld [vmem:[#allocation4 + $0x2c0] sm:$0xff]
    %v4295 = vld [vmem:[#allocation4 + $0x2c8] sm:$0xff]
    %v4296 = vld [vmem:[#allocation4 + $0x2d0] sm:$0xff]
    %v4297 = vld [vmem:[#allocation4 + $0x2d8] sm:$0xff]
    %v4298 = vld [vmem:[#allocation4 + $0x2e0] sm:$0xff]
    %v4299 = vld [vmem:[#allocation4 + $0x2e8] sm:$0xff]
    %v4300 = vld [vmem:[#allocation4 + $0x2f0] sm:$0xff]
    %v4301 = vld [vmem:[#allocation4 + $0x2f8] sm:$0xff]
    %v4302 = vld [vmem:[#allocation4 + $0x300] sm:$0xff]
    %v4303 = vld [vmem:[#allocation4 + $0x308] sm:$0xff]
    %v4304 = vld [vmem:[#allocation4 + $0x310] sm:$0xff]
    %v4305 = vld [vmem:[#allocation4 + $0x318] sm:$0xff]
    %v4306 = vld [vmem:[#allocation4 + $0x320] sm:$0xff]
    %v4307 = vld [vmem:[#allocation4 + $0x328] sm:$0xff]
    %v4308 = vld [vmem:[#allocation4 + $0x330] sm:$0xff]
    %v4309 = vld [vmem:[#allocation4 + $0x338] sm:$0xff]
    %v4310 = vld [vmem:[#allocation4 + $0x340] sm:$0xff]
    %v4311 = vld [vmem:[#allocation4 + $0x348] sm:$0xff]
    %v4312 = vld [vmem:[#allocation4 + $0x350] sm:$0xff]
    %v4313 = vld [vmem:[#allocation4 + $0x358] sm:$0xff]
    %v4314 = vld [vmem:[#allocation4 + $0x360] sm:$0xff]
    %v4315 = vld [vmem:[#allocation4 + $0x368] sm:$0xff]
    %v4316 = vld [vmem:[#allocation4 + $0x370] sm:$0xff]
    %v4317 = vld [vmem:[#allocation4 + $0x378] sm:$0xff]
    %v4318 = vld [vmem:[#allocation4 + $0x380] sm:$0xff]
    %v4319 = vld [vmem:[#allocation4 + $0x388] sm:$0xff]
    %v4320 = vld [vmem:[#allocation4 + $0x390] sm:$0xff]
    %v4321 = vld [vmem:[#allocation4 + $0x398] sm:$0xff]
    %v4322 = vld [vmem:[#allocation4 + $0x3a0] sm:$0xff]
    %v4323 = vld [vmem:[#allocation4 + $0x3a8] sm:$0xff]
    %v4324 = vld [vmem:[#allocation4 + $0x3b0] sm:$0xff]
    %v4325 = vld [vmem:[#allocation4 + $0x3b8] sm:$0xff]
    %v4326 = vld [vmem:[#allocation4 + $0x3c0] sm:$0xff]
    %v4327 = vld [vmem:[#allocation4 + $0x3c8] sm:$0xff]
    %v4328 = vld [vmem:[#allocation4 + $0x3d0] sm:$0xff]
    %v4329 = vld [vmem:[#allocation4 + $0x3d8] sm:$0xff]
    %v4330 = vld [vmem:[#allocation4 + $0x3e0] sm:$0xff]
    %v4331 = vld [vmem:[#allocation4 + $0x3e8] sm:$0xff]
    %v4332 = vld [vmem:[#allocation4 + $0x3f0] sm:$0xff]
    %v4333 = vld [vmem:[#allocation4 + $0x3f8] sm:$0xff]
    %v4334 = vpack.c.bf16 %v4170, %v4170
    %v4335 = vpack.c.bf16 %v4171, %v4171
    %v4336 = vpack.c.bf16 %v4172, %v4172
    %v4337 = vpack.c.bf16 %v4173, %v4173
    %v4338 = vpack.c.bf16 %v4174, %v4174
    %v4339 = vpack.c.bf16 %v4175, %v4175
    %v4340 = vpack.c.bf16 %v4176, %v4176
    %v4341 = vpack.c.bf16 %v4177, %v4177
    %v4342 = vpack.c.bf16 %v4178, %v4178
    %v4343 = vpack.c.bf16 %v4179, %v4179
    %v4344 = vpack.c.bf16 %v4180, %v4180
    %v4345 = vpack.c.bf16 %v4181, %v4181
    %v4346 = vpack.c.bf16 %v4182, %v4182
    %v4347 = vpack.c.bf16 %v4183, %v4183
    %v4348 = vpack.c.bf16 %v4184, %v4184
    %v4349 = vpack.c.bf16 %v4185, %v4185
    %v4350 = vld [vmem:[#allocation14 + $0x20] sm:$0x1]
    %v4352 = vlaneseq
    %v4353 = vshrl.u32 %v4352, 7
    %v4354 = vsub.s32 0, %v4353
    %v4355 = vrot.slane %v4350, %v4354
    %4357 = vmatprep.subr.bf16.mxu0 0
    %4358 = vmatpush1.bf16.msra.mxu0 %v4206
    %4359 = vmatprep.subr.bf16.mxu0 0
    %4360 = vmatpush1.bf16.msra.mxu0 %v4207
    %4361 = vmatprep.subr.bf16.mxu0 0
    %4362 = vmatpush1.bf16.msra.mxu0 %v4208
    %4363 = vmatprep.subr.bf16.mxu0 0
    %4364 = vmatpush1.bf16.msra.mxu0 %v4209
    %4365 = vmatprep.subr.bf16.mxu0 0
    %4366 = vmatpush1.bf16.msra.mxu0 %v4210
    %4367 = vmatprep.subr.bf16.mxu0 0
    %4368 = vmatpush1.bf16.msra.mxu0 %v4211
    %4369 = vmatprep.subr.bf16.mxu0 0
    %4370 = vmatpush1.bf16.msra.mxu0 %v4212
    %4371 = vmatprep.subr.bf16.mxu0 0
    %4372 = vmatpush1.bf16.msra.mxu0 %v4213
    %4373 = vmatprep.subr.bf16.mxu0 0
    %4374 = vmatpush1.bf16.msra.mxu0 %v4214
    %4375 = vmatprep.subr.bf16.mxu0 0
    %4376 = vmatpush1.bf16.msra.mxu0 %v4215
    %4377 = vmatprep.subr.bf16.mxu0 0
    %4378 = vmatpush1.bf16.msra.mxu0 %v4216
    %4379 = vmatprep.subr.bf16.mxu0 0
    %4380 = vmatpush1.bf16.msra.mxu0 %v4217
    %4381 = vmatprep.subr.bf16.mxu0 0
    %4382 = vmatpush1.bf16.msra.mxu0 %v4218
    %4383 = vmatprep.subr.bf16.mxu0 0
    %4384 = vmatpush1.bf16.msra.mxu0 %v4219
    %4385 = vmatprep.subr.bf16.mxu0 0
    %4386 = vmatpush1.bf16.msra.mxu0 %v4220
    %4387 = vmatprep.subr.bf16.mxu0 0
    %4388 = vmatpush1.bf16.msra.mxu0 %v4221
    %4389 = vmatprep.mubr.bf16.mxu0 %v4335
    %4390 = vmatmul.mubr.bf16.gmra.mrb[0].mxu0 %v4334
    %v4391 = vpop.f32.mrb[0].mxu0
    %v4392 = vadd.f32 %v4355, %v4391
    %v4393 = vpop.f32.mrb[0].mxu0
    %v4394 = vpop.f32.mrb[0].mxu0
    %v4395 = vpop.f32.mrb[0].mxu0
    %4396 = vdwg.mxu0
    %4397 = vmatprep.subr.bf16.mxu0 0
    %4398 = vmatpush1.bf16.msra.mxu0 %v4222
    %4399 = vmatprep.subr.bf16.mxu0 0
    %4400 = vmatpush1.bf16.msra.mxu0 %v4223
    %4401 = vmatprep.subr.bf16.mxu0 0
    %4402 = vmatpush1.bf16.msra.mxu0 %v4224
    %4403 = vmatprep.subr.bf16.mxu0 0
    %4404 = vmatpush1.bf16.msra.mxu0 %v4225
    %4405 = vmatprep.subr.bf16.mxu0 0
    %4406 = vmatpush1.bf16.msra.mxu0 %v4226
    %4407 = vmatprep.subr.bf16.mxu0 0
    %4408 = vmatpush1.bf16.msra.mxu0 %v4227
    %4409 = vmatprep.subr.bf16.mxu0 0
    %4410 = vmatpush1.bf16.msra.mxu0 %v4228
    %4411 = vmatprep.subr.bf16.mxu0 0
    %4412 = vmatpush1.bf16.msra.mxu0 %v4229
    %4413 = vmatprep.subr.bf16.mxu0 0
    %4414 = vmatpush1.bf16.msra.mxu0 %v4230
    %4415 = vmatprep.subr.bf16.mxu0 0
    %4416 = vmatpush1.bf16.msra.mxu0 %v4231
    %4417 = vmatprep.subr.bf16.mxu0 0
    %4418 = vmatpush1.bf16.msra.mxu0 %v4232
    %4419 = vmatprep.subr.bf16.mxu0 0
    %4420 = vmatpush1.bf16.msra.mxu0 %v4233
    %4421 = vmatprep.subr.bf16.mxu0 0
    %4422 = vmatpush1.bf16.msra.mxu0 %v4234
    %4423 = vmatprep.subr.bf16.mxu0 0
    %4424 = vmatpush1.bf16.msra.mxu0 %v4235
    %4425 = vmatprep.subr.bf16.mxu0 0
    %4426 = vmatpush1.bf16.msra.mxu0 %v4236
    %4427 = vmatprep.subr.bf16.mxu0 0
    %4428 = vmatpush1.bf16.msra.mxu0 %v4237
    %4429 = vmatprep.mubr.bf16.mxu0 %v4337
    %4430 = vmatmul.mubr.bf16.gmra.mrb[0].mxu0 %v4336
    %v4431 = vpop.f32.mrb[0].mxu0
    %v4432 = vadd.f32 %v4392, %v4431
    %v4433 = vpop.f32.mrb[0].mxu0
    %v4434 = vpop.f32.mrb[0].mxu0
    %v4435 = vpop.f32.mrb[0].mxu0
    %4436 = vdwg.mxu0
    %4437 = vmatprep.subr.bf16.mxu0 0
    %4438 = vmatpush1.bf16.msra.mxu0 %v4238
    %4439 = vmatprep.subr.bf16.mxu0 0
    %4440 = vmatpush1.bf16.msra.mxu0 %v4239
    %4441 = vmatprep.subr.bf16.mxu0 0
    %4442 = vmatpush1.bf16.msra.mxu0 %v4240
    %4443 = vmatprep.subr.bf16.mxu0 0
    %4444 = vmatpush1.bf16.msra.mxu0 %v4241
    %4445 = vmatprep.subr.bf16.mxu0 0
    %4446 = vmatpush1.bf16.msra.mxu0 %v4242
    %4447 = vmatprep.subr.bf16.mxu0 0
    %4448 = vmatpush1.bf16.msra.mxu0 %v4243
    %4449 = vmatprep.subr.bf16.mxu0 0
    %4450 = vmatpush1.bf16.msra.mxu0 %v4244
    %4451 = vmatprep.subr.bf16.mxu0 0
    %4452 = vmatpush1.bf16.msra.mxu0 %v4245
    %4453 = vmatprep.subr.bf16.mxu0 0
    %4454 = vmatpush1.bf16.msra.mxu0 %v4246
    %4455 = vmatprep.subr.bf16.mxu0 0
    %4456 = vmatpush1.bf16.msra.mxu0 %v4247
    %4457 = vmatprep.subr.bf16.mxu0 0
    %4458 = vmatpush1.bf16.msra.mxu0 %v4248
    %4459 = vmatprep.subr.bf16.mxu0 0
    %4460 = vmatpush1.bf16.msra.mxu0 %v4249
    %4461 = vmatprep.subr.bf16.mxu0 0
    %4462 = vmatpush1.bf16.msra.mxu0 %v4250
    %4463 = vmatprep.subr.bf16.mxu0 0
    %4464 = vmatpush1.bf16.msra.mxu0 %v4251
    %4465 = vmatprep.subr.bf16.mxu0 0
    %4466 = vmatpush1.bf16.msra.mxu0 %v4252
    %4467 = vmatprep.subr.bf16.mxu0 0
    %4468 = vmatpush1.bf16.msra.mxu0 %v4253
    %4469 = vmatprep.mubr.bf16.mxu0 %v4339
    %4470 = vmatmul.mubr.bf16.gmra.mrb[0].mxu0 %v4338
    %v4471 = vpop.f32.mrb[0].mxu0
    %v4472 = vadd.f32 %v4432, %v4471
    %v4473 = vpop.f32.mrb[0].mxu0
    %v4474 = vpop.f32.mrb[0].mxu0
    %v4475 = vpop.f32.mrb[0].mxu0
    %4476 = vdwg.mxu0
    %4477 = vmatprep.subr.bf16.mxu0 0
    %4478 = vmatpush1.bf16.msra.mxu0 %v4254
    %4479 = vmatprep.subr.bf16.mxu0 0
    %4480 = vmatpush1.bf16.msra.mxu0 %v4255
    %4481 = vmatprep.subr.bf16.mxu0 0
    %4482 = vmatpush1.bf16.msra.mxu0 %v4256
    %4483 = vmatprep.subr.bf16.mxu0 0
    %4484 = vmatpush1.bf16.msra.mxu0 %v4257
    %4485 = vmatprep.subr.bf16.mxu0 0
    %4486 = vmatpush1.bf16.msra.mxu0 %v4258
    %4487 = vmatprep.subr.bf16.mxu0 0
    %4488 = vmatpush1.bf16.msra.mxu0 %v4259
    %4489 = vmatprep.subr.bf16.mxu0 0
    %4490 = vmatpush1.bf16.msra.mxu0 %v4260
    %4491 = vmatprep.subr.bf16.mxu0 0
    %4492 = vmatpush1.bf16.msra.mxu0 %v4261
    %4493 = vmatprep.subr.bf16.mxu0 0
    %4494 = vmatpush1.bf16.msra.mxu0 %v4262
    %4495 = vmatprep.subr.bf16.mxu0 0
    %4496 = vmatpush1.bf16.msra.mxu0 %v4263
    %4497 = vmatprep.subr.bf16.mxu0 0
    %4498 = vmatpush1.bf16.msra.mxu0 %v4264
    %4499 = vmatprep.subr.bf16.mxu0 0
    %4500 = vmatpush1.bf16.msra.mxu0 %v4265
    %4501 = vmatprep.subr.bf16.mxu0 0
    %4502 = vmatpush1.bf16.msra.mxu0 %v4266
    %4503 = vmatprep.subr.bf16.mxu0 0
    %4504 = vmatpush1.bf16.msra.mxu0 %v4267
    %4505 = vmatprep.subr.bf16.mxu0 0
    %4506 = vmatpush1.bf16.msra.mxu0 %v4268
    %4507 = vmatprep.subr.bf16.mxu0 0
    %4508 = vmatpush1.bf16.msra.mxu0 %v4269
    %4509 = vmatprep.mubr.bf16.mxu0 %v4341
    %4510 = vmatmul.mubr.bf16.gmra.mrb[0].mxu0 %v4340
    %v4511 = vpop.f32.mrb[0].mxu0
    %v4512 = vadd.f32 %v4472, %v4511
    %v4513 = vpop.f32.mrb[0].mxu0
    %v4514 = vpop.f32.mrb[0].mxu0
    %v4515 = vpop.f32.mrb[0].mxu0
    %4516 = vdwg.mxu0
    %4517 = vmatprep.subr.bf16.mxu0 0
    %4518 = vmatpush1.bf16.msra.mxu0 %v4270
    %4519 = vmatprep.subr.bf16.mxu0 0
    %4520 = vmatpush1.bf16.msra.mxu0 %v4271
    %4521 = vmatprep.subr.bf16.mxu0 0
    %4522 = vmatpush1.bf16.msra.mxu0 %v4272
    %4523 = vmatprep.subr.bf16.mxu0 0
    %4524 = vmatpush1.bf16.msra.mxu0 %v4273
    %4525 = vmatprep.subr.bf16.mxu0 0
    %4526 = vmatpush1.bf16.msra.mxu0 %v4274
    %4527 = vmatprep.subr.bf16.mxu0 0
    %4528 = vmatpush1.bf16.msra.mxu0 %v4275
    %4529 = vmatprep.subr.bf16.mxu0 0
    %4530 = vmatpush1.bf16.msra.mxu0 %v4276
    %4531 = vmatprep.subr.bf16.mxu0 0
    %4532 = vmatpush1.bf16.msra.mxu0 %v4277
    %4533 = vmatprep.subr.bf16.mxu0 0
    %4534 = vmatpush1.bf16.msra.mxu0 %v4278
    %4535 = vmatprep.subr.bf16.mxu0 0
    %4536 = vmatpush1.bf16.msra.mxu0 %v4279
    %4537 = vmatprep.subr.bf16.mxu0 0
    %4538 = vmatpush1.bf16.msra.mxu0 %v4280
    %4539 = vmatprep.subr.bf16.mxu0 0
    %4540 = vmatpush1.bf16.msra.mxu0 %v4281
    %4541 = vmatprep.subr.bf16.mxu0 0
    %4542 = vmatpush1.bf16.msra.mxu0 %v4282
    %4543 = vmatprep.subr.bf16.mxu0 0
    %4544 = vmatpush1.bf16.msra.mxu0 %v4283
    %4545 = vmatprep.subr.bf16.mxu0 0
    %4546 = vmatpush1.bf16.msra.mxu0 %v4284
    %4547 = vmatprep.subr.bf16.mxu0 0
    %4548 = vmatpush1.bf16.msra.mxu0 %v4285
    %4549 = vmatprep.mubr.bf16.mxu0 %v4343
    %4550 = vmatmul.mubr.bf16.gmra.mrb[0].mxu0 %v4342
    %v4551 = vpop.f32.mrb[0].mxu0
    %v4552 = vadd.f32 %v4512, %v4551
    %v4553 = vpop.f32.mrb[0].mxu0
    %v4554 = vpop.f32.mrb[0].mxu0
    %v4555 = vpop.f32.mrb[0].mxu0
    %4556 = vdwg.mxu0
    %4557 = vmatprep.subr.bf16.mxu0 0
    %4558 = vmatpush1.bf16.msra.mxu0 %v4286
    %4559 = vmatprep.subr.bf16.mxu0 0
    %4560 = vmatpush1.bf16.msra.mxu0 %v4287
    %4561 = vmatprep.subr.bf16.mxu0 0
    %4562 = vmatpush1.bf16.msra.mxu0 %v4288
    %4563 = vmatprep.subr.bf16.mxu0 0
    %4564 = vmatpush1.bf16.msra.mxu0 %v4289
    %4565 = vmatprep.subr.bf16.mxu0 0
    %4566 = vmatpush1.bf16.msra.mxu0 %v4290
    %4567 = vmatprep.subr.bf16.mxu0 0
    %4568 = vmatpush1.bf16.msra.mxu0 %v4291
    %4569 = vmatprep.subr.bf16.mxu0 0
    %4570 = vmatpush1.bf16.msra.mxu0 %v4292
    %4571 = vmatprep.subr.bf16.mxu0 0
    %4572 = vmatpush1.bf16.msra.mxu0 %v4293
    %4573 = vmatprep.subr.bf16.mxu0 0
    %4574 = vmatpush1.bf16.msra.mxu0 %v4294
    %4575 = vmatprep.subr.bf16.mxu0 0
    %4576 = vmatpush1.bf16.msra.mxu0 %v4295
    %4577 = vmatprep.subr.bf16.mxu0 0
    %4578 = vmatpush1.bf16.msra.mxu0 %v4296
    %4579 = vmatprep.subr.bf16.mxu0 0
    %4580 = vmatpush1.bf16.msra.mxu0 %v4297
    %4581 = vmatprep.subr.bf16.mxu0 0
    %4582 = vmatpush1.bf16.msra.mxu0 %v4298
    %4583 = vmatprep.subr.bf16.mxu0 0
    %4584 = vmatpush1.bf16.msra.mxu0 %v4299
    %4585 = vmatprep.subr.bf16.mxu0 0
    %4586 = vmatpush1.bf16.msra.mxu0 %v4300
    %4587 = vmatprep.subr.bf16.mxu0 0
    %4588 = vmatpush1.bf16.msra.mxu0 %v4301
    %4589 = vmatprep.mubr.bf16.mxu0 %v4345
    %4590 = vmatmul.mubr.bf16.gmra.mrb[0].mxu0 %v4344
    %v4591 = vpop.f32.mrb[0].mxu0
    %v4592 = vadd.f32 %v4552, %v4591
    %v4593 = vpop.f32.mrb[0].mxu0
    %v4594 = vpop.f32.mrb[0].mxu0
    %v4595 = vpop.f32.mrb[0].mxu0
    %4596 = vdwg.mxu0
    %4597 = vmatprep.subr.bf16.mxu0 0
    %4598 = vmatpush1.bf16.msra.mxu0 %v4302
    %4599 = vmatprep.subr.bf16.mxu0 0
    %4600 = vmatpush1.bf16.msra.mxu0 %v4303
    %4601 = vmatprep.subr.bf16.mxu0 0
    %4602 = vmatpush1.bf16.msra.mxu0 %v4304
    %4603 = vmatprep.subr.bf16.mxu0 0
    %4604 = vmatpush1.bf16.msra.mxu0 %v4305
    %4605 = vmatprep.subr.bf16.mxu0 0
    %4606 = vmatpush1.bf16.msra.mxu0 %v4306
    %4607 = vmatprep.subr.bf16.mxu0 0
    %4608 = vmatpush1.bf16.msra.mxu0 %v4307
    %4609 = vmatprep.subr.bf16.mxu0 0
    %4610 = vmatpush1.bf16.msra.mxu0 %v4308
    %4611 = vmatprep.subr.bf16.mxu0 0
    %4612 = vmatpush1.bf16.msra.mxu0 %v4309
    %4613 = vmatprep.subr.bf16.mxu0 0
    %4614 = vmatpush1.bf16.msra.mxu0 %v4310
    %4615 = vmatprep.subr.bf16.mxu0 0
    %4616 = vmatpush1.bf16.msra.mxu0 %v4311
    %4617 = vmatprep.subr.bf16.mxu0 0
    %4618 = vmatpush1.bf16.msra.mxu0 %v4312
    %4619 = vmatprep.subr.bf16.mxu0 0
    %4620 = vmatpush1.bf16.msra.mxu0 %v4313
    %4621 = vmatprep.subr.bf16.mxu0 0
    %4622 = vmatpush1.bf16.msra.mxu0 %v4314
    %4623 = vmatprep.subr.bf16.mxu0 0
    %4624 = vmatpush1.bf16.msra.mxu0 %v4315
    %4625 = vmatprep.subr.bf16.mxu0 0
    %4626 = vmatpush1.bf16.msra.mxu0 %v4316
    %4627 = vmatprep.subr.bf16.mxu0 0
    %4628 = vmatpush1.bf16.msra.mxu0 %v4317
    %4629 = vmatprep.mubr.bf16.mxu0 %v4347
    %4630 = vmatmul.mubr.bf16.gmra.mrb[0].mxu0 %v4346
    %v4631 = vpop.f32.mrb[0].mxu0
    %v4632 = vadd.f32 %v4592, %v4631
    %v4633 = vpop.f32.mrb[0].mxu0
    %v4634 = vpop.f32.mrb[0].mxu0
    %v4635 = vpop.f32.mrb[0].mxu0
    %4636 = vdwg.mxu0
    %4637 = vmatprep.subr.bf16.mxu0 0
    %4638 = vmatpush1.bf16.msra.mxu0 %v4318
    %4639 = vmatprep.subr.bf16.mxu0 0
    %4640 = vmatpush1.bf16.msra.mxu0 %v4319
    %4641 = vmatprep.subr.bf16.mxu0 0
    %4642 = vmatpush1.bf16.msra.mxu0 %v4320
    %4643 = vmatprep.subr.bf16.mxu0 0
    %4644 = vmatpush1.bf16.msra.mxu0 %v4321
    %4645 = vmatprep.subr.bf16.mxu0 0
    %4646 = vmatpush1.bf16.msra.mxu0 %v4322
    %4647 = vmatprep.subr.bf16.mxu0 0
    %4648 = vmatpush1.bf16.msra.mxu0 %v4323
    %4649 = vmatprep.subr.bf16.mxu0 0
    %4650 = vmatpush1.bf16.msra.mxu0 %v4324
    %4651 = vmatprep.subr.bf16.mxu0 0
    %4652 = vmatpush1.bf16.msra.mxu0 %v4325
    %4653 = vmatprep.subr.bf16.mxu0 0
    %4654 = vmatpush1.bf16.msra.mxu0 %v4326
    %4655 = vmatprep.subr.bf16.mxu0 0
    %4656 = vmatpush1.bf16.msra.mxu0 %v4327
    %4657 = vmatprep.subr.bf16.mxu0 0
    %4658 = vmatpush1.bf16.msra.mxu0 %v4328
    %4659 = vmatprep.subr.bf16.mxu0 0
    %4660 = vmatpush1.bf16.msra.mxu0 %v4329
    %4661 = vmatprep.subr.bf16.mxu0 0
    %4662 = vmatpush1.bf16.msra.mxu0 %v4330
    %4663 = vmatprep.subr.bf16.mxu0 0
    %4664 = vmatpush1.bf16.msra.mxu0 %v4331
    %4665 = vmatprep.subr.bf16.mxu0 0
    %4666 = vmatpush1.bf16.msra.mxu0 %v4332
    %4667 = vmatprep.subr.bf16.mxu0 0
    %4668 = vmatpush1.bf16.msra.mxu0 %v4333
    %4669 = vmatprep.mubr.bf16.mxu0 %v4349
    %4670 = vmatmul.mubr.bf16.gmra.mrb[0].mxu0 %v4348
    %v4671 = vpop.f32.mrb[0].mxu0
    %v4672 = vadd.f32 %v4632, %v4671
    %v4673 = vpop.f32.mrb[0].mxu0
    %v4674 = vpop.f32.mrb[0].mxu0
    %v4675 = vpop.f32.mrb[0].mxu0
    %4676 = vdwg.mxu0
    %vm4677 = vcmp.ge.f32.partialorder %v4672, 0.0
    %v4678 = vmul.f32 %v4672, 0.01
    %v4679 = vsel %vm4677, %v4672, %v4678
    %v4680 = vpack.c.bf16 %v4679, %v4679
    %v4681 = vld [vmem:[#allocation13] sm:$0xf]
    %v4682 = vld [vmem:[#allocation13 + $0x4] sm:$0xf]
    %v4683 = vld [vmem:[#allocation13 + $0x8] sm:$0xf]
    %v4684 = vld [vmem:[#allocation13 + $0xc] sm:$0xf]
    %v4685 = vld [vmem:[#allocation13 + $0x10] sm:$0xf]
    %v4686 = vld [vmem:[#allocation13 + $0x14] sm:$0xf]
    %v4687 = vld [vmem:[#allocation13 + $0x18] sm:$0xf]
    %v4688 = vld [vmem:[#allocation13 + $0x1c] sm:$0xf]
    %v4689 = vld [vmem:[#allocation13 + $0x20] sm:$0xf]
    %v4690 = vld [vmem:[#allocation13 + $0x24] sm:$0xf]
    %v4691 = vld [vmem:[#allocation13 + $0x28] sm:$0xf]
    %v4692 = vld [vmem:[#allocation13 + $0x2c] sm:$0xf]
    %v4693 = vld [vmem:[#allocation13 + $0x30] sm:$0xf]
    %v4694 = vld [vmem:[#allocation13 + $0x34] sm:$0xf]
    %v4695 = vld [vmem:[#allocation13 + $0x38] sm:$0xf]
    %v4696 = vld [vmem:[#allocation13 + $0x3c] sm:$0xf]
    %v4697 = vld [vmem:[#allocation14 + $0x21] sm:$0x1]
    %v4699 = vlaneseq
    %v4700 = vshrl.u32 %v4699, 7
    %v4701 = vsub.s32 0, %v4700
    %v4702 = vrot.slane %v4697, %v4701
    %v4720 = vunpack.c.l.b16 %v4681
    %v4721 = vunpack.c.l.b16 %v4682
    %v4722 = vunpack.c.l.b16 %v4683
    %v4723 = vunpack.c.l.b16 %v4684
    %v4724 = vunpack.c.l.b16 %v4685
    %v4725 = vunpack.c.l.b16 %v4686
    %v4726 = vunpack.c.l.b16 %v4687
    %v4727 = vunpack.c.l.b16 %v4688
    %v4728 = vunpack.c.l.b16 %v4689
    %v4729 = vunpack.c.l.b16 %v4690
    %v4730 = vunpack.c.l.b16 %v4691
    %v4731 = vunpack.c.l.b16 %v4692
    %v4732 = vunpack.c.l.b16 %v4693
    %v4733 = vunpack.c.l.b16 %v4694
    %v4734 = vunpack.c.l.b16 %v4695
    %v4735 = vunpack.c.l.b16 %v4696
    %v4736 = vpack.c.b16 %v4721, %v4720
    %v4737 = vpack.c.b16 %v4723, %v4722
    %v4738 = vpack.c.b16 %v4725, %v4724
    %v4739 = vpack.c.b16 %v4727, %v4726
    %v4740 = vpack.c.b16 %v4729, %v4728
    %v4741 = vpack.c.b16 %v4731, %v4730
    %v4742 = vpack.c.b16 %v4733, %v4732
    %v4743 = vpack.c.b16 %v4735, %v4734
    %4752 = vmatprep.subr.bf16.mxu0 0
    %4753 = vmatpush1.bf16.msra.mxu0 %v4736
    %4754 = vmatprep.subr.bf16.mxu0 0
    %4755 = vmatpush1.bf16.msra.mxu0 %v4737
    %4756 = vmatprep.subr.bf16.mxu0 0
    %4757 = vmatpush1.bf16.msra.mxu0 %v4738
    %4758 = vmatprep.subr.bf16.mxu0 0
    %4759 = vmatpush1.bf16.msra.mxu0 %v4739
    %4760 = vmatprep.subr.bf16.mxu0 0
    %4761 = vmatpush1.bf16.msra.mxu0 %v4740
    %4762 = vmatprep.subr.bf16.mxu0 0
    %4763 = vmatpush1.bf16.msra.mxu0 %v4741
    %4764 = vmatprep.subr.bf16.mxu0 0
    %4765 = vmatpush1.bf16.msra.mxu0 %v4742
    %4766 = vmatprep.subr.bf16.mxu0 0
    %4767 = vmatpush1.bf16.msra.mxu0 %v4743
    %4768 = vmatprep.subr.bf16.mxu0 0
    %4769 = vmatpush1.bf16.msra.mxu0 0
    %4770 = vmatprep.subr.bf16.mxu0 0
    %4771 = vmatpush1.bf16.msra.mxu0 0
    %4772 = vmatprep.subr.bf16.mxu0 0
    %4773 = vmatpush1.bf16.msra.mxu0 0
    %4774 = vmatprep.subr.bf16.mxu0 0
    %4775 = vmatpush1.bf16.msra.mxu0 0
    %4776 = vmatprep.subr.bf16.mxu0 0
    %4777 = vmatpush1.bf16.msra.mxu0 0
    %4778 = vmatprep.subr.bf16.mxu0 0
    %4779 = vmatpush1.bf16.msra.mxu0 0
    %4780 = vmatprep.subr.bf16.mxu0 0
    %4781 = vmatpush1.bf16.msra.mxu0 0
    %4782 = vmatprep.subr.bf16.mxu0 0
    %4783 = vmatpush1.bf16.msra.mxu0 0
    %4784 = vmatprep.mubr.bf16.mxu0 0
    %4785 = vmatmul.mubr.bf16.gmra.mrb[0].mxu0 %v4680
    %v4786 = vpop.f32.mrb[0].mxu0
    %v4787 = vadd.f32 %v4702, %v4786
    %v4788 = vpop.f32.mrb[0].mxu0
    %v4789 = vpop.f32.mrb[0].mxu0
    %v4790 = vpop.f32.mrb[0].mxu0
    %4791 = vdwg.mxu0
    %4792 = vst [vmem:[%s16] sm:$0xff] %v4787
    // Predicated region
    $region58: #{class_mlp_forward.1} parent=1 // pred_check
      _
    $region59: #{class_mlp_forward.1} parent=1 // pred_check_branch
      %4794 = sbr.rel (0) target = $region61
    $region60: #{class_mlp_forward.1} parent=1 // pred_region
      _
    $region61: #{class_mlp_forward.1} parent=1 // pred_fallthru
      _
    // Predicated region
    $region62: #{class_mlp_forward.1} parent=1 // pred_check
      _
    $region63: #{class_mlp_forward.1} parent=1 // pred_check_branch
      %4796 = sbr.rel (0) target = $region65
    $region64: #{class_mlp_forward.1} parent=1 // pred_region
      _
    $region65: #{class_mlp_forward.1} parent=1 // pred_fallthru
      _
    // Predicated region
    $region66: #{class_mlp_forward.1} parent=1 // pred_check
      _
    $region67: #{class_mlp_forward.1} parent=1 // pred_check_branch
      %4798 = sbr.rel (0) target = $region69
    $region68: #{class_mlp_forward.1} parent=1 // pred_region
      _
    $region69: #{class_mlp_forward.1} parent=1 // pred_fallthru
      _
    // Predicated region
    $region70: #{class_mlp_forward.1} parent=1 // pred_check
      _
    $region71: #{class_mlp_forward.1} parent=1 // pred_check_branch
      %4800 = sbr.rel (0) target = $region73
    $region72: #{class_mlp_forward.1} parent=1 // pred_region
      _
    $region73: #{class_mlp_forward.1} parent=1 // pred_fallthru
      _
    // Predicated region
    $region74: #{class_mlp_forward.1} parent=1 // pred_check
      _
    $region75: #{class_mlp_forward.1} parent=1 // pred_check_branch
      %4802 = sbr.rel (0) target = $region77
    $region76: #{class_mlp_forward.1} parent=1 // pred_region
      _
    $region77: #{class_mlp_forward.1} parent=1 // pred_fallthru
      _
    // Predicated region
    $region78: #{class_mlp_forward.1} parent=1 // pred_check
      _
    $region79: #{class_mlp_forward.1} parent=1 // pred_check_branch
      %4804 = sbr.rel (0) target = $region81
    $region80: #{class_mlp_forward.1} parent=1 // pred_region
      _
    $region81: #{class_mlp_forward.1} parent=1 // pred_fallthru
      _
    // Predicated region
    $region82: #{class_mlp_forward.1} parent=1 // pred_check
      _
    $region83: #{class_mlp_forward.1} parent=1 // pred_check_branch
      %4806 = sbr.rel (0) target = $region85
    $region84: #{class_mlp_forward.1} parent=1 // pred_region
      _
    $region85: #{class_mlp_forward.1} parent=1 // pred_fallthru
      _
    // Predicated region
    $region86: #{class_mlp_forward.1} parent=1 // pred_check
      _
    $region87: #{class_mlp_forward.1} parent=1 // pred_check_branch
      %4808 = sbr.rel (0) target = $region89
    $region88: #{class_mlp_forward.1} parent=1 // pred_region
      _
    $region89: #{class_mlp_forward.1} parent=1 // pred_fallthru
      _
    // Predicated region
    $region90: #{class_mlp_forward.1} parent=1 // pred_check
      _
    $region91: #{class_mlp_forward.1} parent=1 // pred_check_branch
      %4810 = sbr.rel (0) target = $region93
    $region92: #{class_mlp_forward.1} parent=1 // pred_region
      _
    $region93: #{class_mlp_forward.1} parent=1 // pred_fallthru
      _
    // Predicated region
    $region94: #{class_mlp_forward.1} parent=1 // pred_check
      _
    $region95: #{class_mlp_forward.1} parent=1 // pred_check_branch
      %4812 = sbr.rel (0) target = $region97
    $region96: #{class_mlp_forward.1} parent=1 // pred_region
      _
    $region97: #{class_mlp_forward.1} parent=1 // pred_fallthru
      _
    // Predicated region
    $region98: #{class_mlp_forward.1} parent=1 // pred_check
      _
    $region99: #{class_mlp_forward.1} parent=1 // pred_check_branch
      %4814 = sbr.rel (0) target = $region101
    $region100: #{class_mlp_forward.1} parent=1 // pred_region
      _
    $region101: #{class_mlp_forward.1} parent=1 // pred_fallthru
      _
    // Predicated region
    $region102: #{class_mlp_forward.1} parent=1 // pred_check
      _
    $region103: #{class_mlp_forward.1} parent=1 // pred_check_branch
      %4816 = sbr.rel (0) target = $region105
    $region104: #{class_mlp_forward.1} parent=1 // pred_region
      _
    $region105: #{class_mlp_forward.1} parent=1 // pred_fallthru
      _
    // Predicated region
    $region106: #{class_mlp_forward.1} parent=1 // pred_check
      _
    $region107: #{class_mlp_forward.1} parent=1 // pred_check_branch
      %4818 = sbr.rel (0) target = $region109
    $region108: #{class_mlp_forward.1} parent=1 // pred_region
      _
    $region109: #{class_mlp_forward.1} parent=1 // pred_fallthru
      _
    // Predicated region
    $region110: #{class_mlp_forward.1} parent=1 // pred_check
      _
    $region111: #{class_mlp_forward.1} parent=1 // pred_check_branch
      %4820 = sbr.rel (0) target = $region113
    $region112: #{class_mlp_forward.1} parent=1 // pred_region
      _
    $region113: #{class_mlp_forward.1} parent=1 // pred_fallthru
      _
    %4821 = vsyncpa [#allocation7], 1
    %4822 = vsyncpa [#allocation9], 1
    %4823 = vsyncpa [#allocation12], 1
    %4824 = vsyncpa [#allocation15], 1
  %4825 = vsyncmov [#allocation5]
  %s4826 = vpop.sfrf %4825
  %p4827 = scmp.eq.s32.totalorder %s4826, 0
  %p4828 = pneg %p4827
  %4830 = shalt.err (%p4828)
  %s4831 = scalar_lea.sflag [#allocation5], 1
  %4832 = vsyncmov %s4831
  %s4833 = vpop.sfrf %4832
  %p4834 = scmp.eq.s32.totalorder %s4833, 0
  %p4835 = pneg %p4834
  %4837 = shalt.err (%p4835)
  %s4838 = scalar_lea.sflag [#allocation5], 2
  %4839 = vsyncmov %s4838
  %s4840 = vpop.sfrf %4839
  %p4841 = scmp.eq.s32.totalorder %s4840, 0
  %p4842 = pneg %p4841
  %4844 = shalt.err (%p4842)

</llo_original>
